<compile_context>
chip_gen: v6e
topology: v6e:2x2x1
jax: 0.10.0
libtpu: 0.0.40
codegen_flags: <defaults>
</compile_context>

<pallas_src>
import jax
import jax.numpy as jnp
from jax.experimental import pallas as pl
from jax.experimental.pallas import tpu as pltpu


_ISSUE_UNROLL = 8  # rows issued / gathered per inner loop iteration


# ---------------------------------------------------------------------------
# Path A: both embedding tables resident in VMEM (small tables — demo case).
# Gather = per-row dynamic VMEM reads (bit-exact), score = lane-axis reduce.
# ---------------------------------------------------------------------------
def _bpr_vmem_kernel(
    u_idx_ref,      # SMEM scalar-prefetch: user indices, (b_pad,) int32
    i_idx_ref,      # SMEM scalar-prefetch: item indices, (b_pad,) int32
    user_tab_ref,   # VMEM (n_user, D) f32, resident across all grid steps
    item_tab_ref,   # VMEM (n_item, D) f32, resident across all grid steps
    out_ref,        # VMEM (tb, 1) f32 output tile
    u_rows,         # VMEM (tb, D) f32 scratch: gathered user rows
    i_rows,         # VMEM (tb, D) f32 scratch: gathered item rows
):
    tb, _ = u_rows.shape
    base = pl.program_id(0) * tb  # hoisted: first batch row of this tile

    # Gather the tb user/item rows for this tile.  Fully unrolled (static
    # Python loop) so every scratch store has a static destination slice and
    # the LLO scheduler can pack SMEM index reads + row loads/stores densely.
    for r in range(tb):
        u = u_idx_ref[base + r]
        it = i_idx_ref[base + r]
        u_rows[pl.ds(r, 1), :] = user_tab_ref[pl.ds(u, 1), :]
        i_rows[pl.ds(r, 1), :] = item_tab_ref[pl.ds(it, 1), :]

    # score[r] = sum_d u[r, d] * i[r, d]  — lane-axis reduce, no transpose.
    out_ref[...] = jnp.sum(u_rows[...] * i_rows[...], axis=1, keepdims=True)


# ---------------------------------------------------------------------------
# Path B: tables stay in HBM (pl.ANY); rows gathered with per-row DMA,
# double-buffered across grid steps, one semaphore wait per buffer per step.
# ---------------------------------------------------------------------------
def _bpr_hbm_kernel(
    u_idx_ref,      # SMEM scalar-prefetch: user indices, (b_pad,) int32
    i_idx_ref,      # SMEM scalar-prefetch: item indices, (b_pad,) int32
    user_tab_hbm,   # user embedding table, left in HBM (pl.ANY)
    item_tab_hbm,   # item embedding table, left in HBM (pl.ANY)
    out_ref,        # VMEM (tb, 1) f32 output tile
    u_buf,          # VMEM (2, tb, D) f32: double-buffered gathered user rows
    i_buf,          # VMEM (2, tb, D) f32: double-buffered gathered item rows
    sems,           # DMA semaphores, shape (2, 2): [table, slot]
):
    _, tb, _ = u_buf.shape
    k = pl.program_id(0)
    n_steps = pl.num_programs(0)

    def issue_step(step, slot):
        base = step * tb  # hoisted out of the issue loop

        @pl.loop(0, tb // _ISSUE_UNROLL)
        def _issue(c):
            r0 = c * _ISSUE_UNROLL
            for j in range(_ISSUE_UNROLL):   # static 8-wide unroll
                r = r0 + j
                u = u_idx_ref[base + r]
                it = i_idx_ref[base + r]
                pltpu.make_async_copy(
                    user_tab_hbm.at[pl.ds(u, 1), :],
                    u_buf.at[slot, pl.ds(r, 1), :],
                    sems.at[0, slot],
                ).start()
                pltpu.make_async_copy(
                    item_tab_hbm.at[pl.ds(it, 1), :],
                    i_buf.at[slot, pl.ds(r, 1), :],
                    sems.at[1, slot],
                ).start()

    slot = k & 1

    # Prime the pipeline on the first grid step.  The grid axis is "arbitrary"
    # (sequential on one core), so program_id(0) == 0 is guaranteed to run
    # before any other step on this core.
    @pl.when(k == 0)
    def _():
        issue_step(0, 0)

    # Prefetch the next step's rows into the other slot before waiting on ours.
    @pl.when(k + 1 < n_steps)
    def _():
        issue_step(k + 1, (k + 1) & 1)

    # ONE wait per buffer: the descriptor is sized off the full (tb, D) VMEM
    # slot, so the semaphore is decremented by tb*D*4 bytes in a single op
    # (equal to the sum of the tb row copies signalled into that slot).
    pltpu.make_async_copy(u_buf.at[slot], u_buf.at[slot], sems.at[0, slot]).wait()
    pltpu.make_async_copy(i_buf.at[slot], i_buf.at[slot], sems.at[1, slot]).wait()

    # score[r] = sum_d u[r, d] * i[r, d]  — lane-axis reduce, no transpose.
    out_ref[...] = jnp.sum(u_buf[slot] * i_buf[slot], axis=1, keepdims=True)


def bpr_forward(user_indices, item_indices, user_emb, item_emb, *, tb=128,
                force_hbm_gather=False):
    """Pallas BPR forward. Returns (B,) float32 scores.

    tb is the batch tile (rows scored per grid step).  Keep tb <= B/2 when
    possible so the VMEM path's parallel grid axis has >= 2 steps (both v7x
    TensorCores get work).  On v5e/v6e with large batches, tb of 512-1024
    amortizes per-step overhead further (scratch cost is only 2*tb*D*4 bytes).
    """
    B = user_indices.shape[0]
    n_user, d = user_emb.shape
    n_item, d2 = item_emb.shape
    assert d == d2, "user/item latent dims must match"
    assert tb % _ISSUE_UNROLL == 0 and tb % 8 == 0

    user_emb = user_emb.astype(jnp.float32)
    item_emb = item_emb.astype(jnp.float32)

    # PyTorch nn.Embedding raises on out-of-range indices; we clamp instead so
    # gathers never go out of bounds.
    # TODO(synk): surface an error on out-of-range indices if strict parity
    # with nn.Embedding is required.
    u_idx = jnp.clip(user_indices.astype(jnp.int32), 0, n_user - 1)
    i_idx = jnp.clip(item_indices.astype(jnp.int32), 0, n_item - 1)

    # Pad the batch to a multiple of the tile; padded rows gather row 0 and
    # their scores are dropped by the final slice.
    b_pad = ((B + tb - 1) // tb) * tb
    if b_pad != B:
        u_idx = jnp.zeros((b_pad,), jnp.int32).at[:B].set(u_idx)
        i_idx = jnp.zeros((b_pad,), jnp.int32).at[:B].set(i_idx)
    n_steps = b_pad // tb

    # ---- size-based dispatch: keep tables resident in VMEM when they fit ----
    try:
        vmem_bytes = int(pltpu.get_tpu_info().vmem_capacity_bytes)
    except Exception:
        vmem_bytes = 64 * 1024 * 1024          # v7x-conservative fallback
    table_bytes = 4 * d * (n_user + n_item)
    scratch_bytes = 2 * 2 * tb * d * 4         # head-room for scratch buffers
    vmem_limit = min(vmem_bytes // 2, 64 * 1024 * 1024)
    use_vmem_tables = (not force_hbm_gather) and (
        table_bytes + scratch_bytes <= vmem_bytes // 3)

    if use_vmem_tables:
        cost = pl.CostEstimate(
            flops=2 * b_pad * d,                           # multiply + reduce
            transcendentals=0,
            bytes_accessed=table_bytes                     # tables read once
            + 2 * b_pad * 4                                # indices
            + b_pad * 4,                                   # output scores
        )
        out = pl.pallas_call(
            _bpr_vmem_kernel,
            out_shape=jax.ShapeDtypeStruct((b_pad, 1), jnp.float32),
            grid_spec=pltpu.PrefetchScalarGridSpec(
                num_scalar_prefetch=2,                     # index arrays -> SMEM
                grid=(n_steps,),
                in_specs=[
                    pl.BlockSpec((n_user, d), lambda i, u, it: (0, 0)),  # resident
                    pl.BlockSpec((n_item, d), lambda i, u, it: (0, 0)),  # resident
                ],
                out_specs=pl.BlockSpec((tb, 1), lambda i, u, it: (i, 0)),
                scratch_shapes=[
                    pltpu.VMEM((tb, d), jnp.float32),      # gathered user rows
                    pltpu.VMEM((tb, d), jnp.float32),      # gathered item rows
                ],
            ),
            compiler_params=pltpu.CompilerParams(
                dimension_semantics=("parallel",),
                vmem_limit_bytes=vmem_limit,
            ),
            cost_estimate=cost,
        )(u_idx, i_idx, user_emb, item_emb)
    else:
        cost = pl.CostEstimate(
            flops=2 * b_pad * d,
            transcendentals=0,
            # Each gathered row pulls at least one full (8,128) f32 tile (4 KiB)
            # from the tiled HBM table.
            bytes_accessed=2 * b_pad * 4096 + 2 * b_pad * 4 + b_pad * 4,
        )
        out = pl.pallas_call(
            _bpr_hbm_kernel,
            out_shape=jax.ShapeDtypeStruct((b_pad, 1), jnp.float32),
            grid_spec=pltpu.PrefetchScalarGridSpec(
                num_scalar_prefetch=2,                     # index arrays -> SMEM
                grid=(n_steps,),
                in_specs=[
                    pl.BlockSpec(memory_space=pl.ANY),     # user table in HBM
                    pl.BlockSpec(memory_space=pl.ANY),     # item table in HBM
                ],
                out_specs=pl.BlockSpec((tb, 1), lambda i, u, it: (i, 0)),
                scratch_shapes=[
                    pltpu.VMEM((2, tb, d), jnp.float32),   # user rows, 2 slots
                    pltpu.VMEM((2, tb, d), jnp.float32),   # item rows, 2 slots
                    pltpu.SemaphoreType.DMA((2, 2)),       # [table, slot]
                ],
            ),
            compiler_params=pltpu.CompilerParams(
                # Cross-step double buffering carries scratch/semaphore state,
                # so the grid must run sequentially on one core.
                dimension_semantics=("arbitrary",),
                vmem_limit_bytes=vmem_limit,
            ),
            cost_estimate=cost,
        )(u_idx, i_idx, user_emb, item_emb)

    return out[:B, 0]


if __name__ == "__main__":
    # Small, deterministic problem: 64 users, 96 items, latent_dim=128,
    # batch=256 (-> 2 grid steps of tb=128, so both v7x cores get work on the
    # VMEM path).
    n_user, n_item, latent_dim, batch = 64, 96, 128, 256

    key = jax.random.PRNGKey(0)
    k_u, k_i, k_ui, k_ii = jax.random.split(key, 4)

    # nn.Embedding default init is N(0, 1) -> match with standard normal.
    user_emb = jax.random.normal(k_u, (n_user, latent_dim), dtype=jnp.float32)
    item_emb = jax.random.normal(k_i, (n_item, latent_dim), dtype=jnp.float32)

    user_indices = jax.random.randint(k_ui, (batch,), 0, n_user, dtype=jnp.int32)
    item_indices = jax.random.randint(k_ii, (batch,), 0, n_item, dtype=jnp.int32)

    # Pure-JAX reference.
    ref = jnp.sum(user_emb[user_indices] * item_emb[item_indices], axis=1)

    # Path A: VMEM-resident tables (what the dispatch picks at these sizes).
    out_vmem = jax.block_until_ready(
        bpr_forward(user_indices, item_indices, user_emb, item_emb))
    assert out_vmem.shape == (batch,)
    assert jnp.allclose(out_vmem, ref, atol=1e-4, rtol=1e-5), (out_vmem, ref)

    # Path B: HBM row-gather fallback (exercised explicitly for coverage).
    out_hbm = jax.block_until_ready(
        bpr_forward(user_indices, item_indices, user_emb, item_emb,
                    force_hbm_gather=True))
    assert out_hbm.shape == (batch,)
    assert jnp.allclose(out_hbm, ref, atol=1e-4, rtol=1e-5), (out_hbm, ref)

    print("KERNEL_OK")
</pallas_src>

<mosaic_0001>
module attributes {stable_mosaic.version = 11 : i64} {
  func.func @_bpr_vmem_kernel(%arg0: i32, %arg1: memref<256xi32, #tpu.memory_space<smem>>, %arg2: memref<256xi32, #tpu.memory_space<smem>>, %arg3: memref<64x128xf32, #tpu.memory_space<vmem>>, %arg4: memref<96x128xf32, #tpu.memory_space<vmem>>, %arg5: memref<128x1xf32, #tpu.memory_space<vmem>>, %arg6: memref<128x128xf32, #tpu.memory_space<vmem>>, %arg7: memref<128x128xf32, #tpu.memory_space<vmem>>) attributes {dimension_semantics = [#tpu.dimension_semantics<parallel>], iteration_bounds = array<i64: 2>, scalar_prefetch = 2 : i64, scratch_operands = 2 : i64, tpu.core_type = #tpu.core_type<tc>, window_params = [{pipeline_mode = #tpu.pipeline_mode<synchronous>, transform_indices = @transform_0, window_bounds = array<i64: 64, 128>}, {pipeline_mode = #tpu.pipeline_mode<synchronous>, transform_indices = @transform_1, window_bounds = array<i64: 96, 128>}, {transform_indices = @transform_2, window_bounds = array<i64: 128, 1>}]} {
    %c128_i32 = arith.constant 128 : i32
    %0 = arith.muli %arg0, %c128_i32 : i32
    %c0_i32 = arith.constant 0 : i32
    %1 = arith.addi %0, %c0_i32 : i32
    %2 = arith.index_cast %1 : i32 to index
    %3 = memref.load %arg1[%2] : memref<256xi32, #tpu.memory_space<smem>>
    %c0_i32_0 = arith.constant 0 : i32
    %4 = arith.addi %0, %c0_i32_0 : i32
    %5 = arith.index_cast %4 : i32 to index
    %6 = memref.load %arg2[%5] : memref<256xi32, #tpu.memory_space<smem>>
    %7 = arith.index_cast %3 : i32 to index
    %c0 = arith.constant 0 : index
    %8 = vector.load %arg3[%7, %c0] : memref<64x128xf32, #tpu.memory_space<vmem>>, vector<1x128xf32>
    %c0_1 = arith.constant 0 : index
    %c0_2 = arith.constant 0 : index
    %9 = vector.load %arg6[%c0_1, %c0_2] : memref<128x128xf32, #tpu.memory_space<vmem>>, vector<1x128xf32>
    tpu.vector_store %arg6[%c0_1, %c0_2], %8 {strides = array<i32>} : memref<128x128xf32, #tpu.memory_space<vmem>>, vector<1x128xf32>,
    %10 = arith.index_cast %6 : i32 to index
    %c0_3 = arith.constant 0 : index
    %11 = vector.load %arg4[%10, %c0_3] : memref<96x128xf32, #tpu.memory_space<vmem>>, vector<1x128xf32>
    %c0_4 = arith.constant 0 : index
    %c0_5 = arith.constant 0 : index
    %12 = vector.load %arg7[%c0_4, %c0_5] : memref<128x128xf32, #tpu.memory_space<vmem>>, vector<1x128xf32>
    tpu.vector_store %arg7[%c0_4, %c0_5], %11 {strides = array<i32>} : memref<128x128xf32, #tpu.memory_space<vmem>>, vector<1x128xf32>,
    %c1_i32 = arith.constant 1 : i32
    %13 = arith.addi %0, %c1_i32 : i32
    %14 = arith.index_cast %13 : i32 to index
    %15 = memref.load %arg1[%14] : memref<256xi32, #tpu.memory_space<smem>>
    %c1_i32_6 = arith.constant 1 : i32
    %16 = arith.addi %0, %c1_i32_6 : i32
    %17 = arith.index_cast %16 : i32 to index
    %18 = memref.load %arg2[%17] : memref<256xi32, #tpu.memory_space<smem>>
    %19 = arith.index_cast %15 : i32 to index
    %c0_7 = arith.constant 0 : index
    %20 = vector.load %arg3[%19, %c0_7] : memref<64x128xf32, #tpu.memory_space<vmem>>, vector<1x128xf32>
    %c1 = arith.constant 1 : index
    %c0_8 = arith.constant 0 : index
    %21 = vector.load %arg6[%c1, %c0_8] : memref<128x128xf32, #tpu.memory_space<vmem>>, vector<1x128xf32>
    tpu.vector_store %arg6[%c1, %c0_8], %20 {strides = array<i32>} : memref<128x128xf32, #tpu.memory_space<vmem>>, vector<1x128xf32>,
    %22 = arith.index_cast %18 : i32 to index
    %c0_9 = arith.constant 0 : index
    %23 = vector.load %arg4[%22, %c0_9] : memref<96x128xf32, #tpu.memory_space<vmem>>, vector<1x128xf32>
    %c1_10 = arith.constant 1 : index
    %c0_11 = arith.constant 0 : index
    %24 = vector.load %arg7[%c1_10, %c0_11] : memref<128x128xf32, #tpu.memory_space<vmem>>, vector<1x128xf32>
    tpu.vector_store %arg7[%c1_10, %c0_11], %23 {strides = array<i32>} : memref<128x128xf32, #tpu.memory_space<vmem>>, vector<1x128xf32>,
    %c2_i32 = arith.constant 2 : i32
    %25 = arith.addi %0, %c2_i32 : i32
    %26 = arith.index_cast %25 : i32 to index
    %27 = memref.load %arg1[%26] : memref<256xi32, #tpu.memory_space<smem>>
    %c2_i32_12 = arith.constant 2 : i32
    %28 = arith.addi %0, %c2_i32_12 : i32
    %29 = arith.index_cast %28 : i32 to index
    %30 = memref.load %arg2[%29] : memref<256xi32, #tpu.memory_space<smem>>
    %31 = arith.index_cast %27 : i32 to index
    %c0_13 = arith.constant 0 : index
    %32 = vector.load %arg3[%31, %c0_13] : memref<64x128xf32, #tpu.memory_space<vmem>>, vector<1x128xf32>
    %c2 = arith.constant 2 : index
    %c0_14 = arith.constant 0 : index
    %33 = vector.load %arg6[%c2, %c0_14] : memref<128x128xf32, #tpu.memory_space<vmem>>, vector<1x128xf32>
    tpu.vector_store %arg6[%c2, %c0_14], %32 {strides = array<i32>} : memref<128x128xf32, #tpu.memory_space<vmem>>, vector<1x128xf32>,
    %34 = arith.index_cast %30 : i32 to index
    %c0_15 = arith.constant 0 : index
    %35 = vector.load %arg4[%34, %c0_15] : memref<96x128xf32, #tpu.memory_space<vmem>>, vector<1x128xf32>
    %c2_16 = arith.constant 2 : index
    %c0_17 = arith.constant 0 : index
    %36 = vector.load %arg7[%c2_16, %c0_17] : memref<128x128xf32, #tpu.memory_space<vmem>>, vector<1x128xf32>
    tpu.vector_store %arg7[%c2_16, %c0_17], %35 {strides = array<i32>} : memref<128x128xf32, #tpu.memory_space<vmem>>, vector<1x128xf32>,
    %c3_i32 = arith.constant 3 : i32
    %37 = arith.addi %0, %c3_i32 : i32
    %38 = arith.index_cast %37 : i32 to index
    %39 = memref.load %arg1[%38] : memref<256xi32, #tpu.memory_space<smem>>
    %c3_i32_18 = arith.constant 3 : i32
    %40 = arith.addi %0, %c3_i32_18 : i32
    %41 = arith.index_cast %40 : i32 to index
    %42 = memref.load %arg2[%41] : memref<256xi32, #tpu.memory_space<smem>>
    %43 = arith.index_cast %39 : i32 to index
    %c0_19 = arith.constant 0 : index
    %44 = vector.load %arg3[%43, %c0_19] : memref<64x128xf32, #tpu.memory_space<vmem>>, vector<1x128xf32>
    %c3 = arith.constant 3 : index
    %c0_20 = arith.constant 0 : index
    %45 = vector.load %arg6[%c3, %c0_20] : memref<128x128xf32, #tpu.memory_space<vmem>>, vector<1x128xf32>
    tpu.vector_store %arg6[%c3, %c0_20], %44 {strides = array<i32>} : memref<128x128xf32, #tpu.memory_space<vmem>>, vector<1x128xf32>,
    %46 = arith.index_cast %42 : i32 to index
    %c0_21 = arith.constant 0 : index
    %47 = vector.load %arg4[%46, %c0_21] : memref<96x128xf32, #tpu.memory_space<vmem>>, vector<1x128xf32>
    %c3_22 = arith.constant 3 : index
    %c0_23 = arith.constant 0 : index
    %48 = vector.load %arg7[%c3_22, %c0_23] : memref<128x128xf32, #tpu.memory_space<vmem>>, vector<1x128xf32>
    tpu.vector_store %arg7[%c3_22, %c0_23], %47 {strides = array<i32>} : memref<128x128xf32, #tpu.memory_space<vmem>>, vector<1x128xf32>,
    %c4_i32 = arith.constant 4 : i32
    %49 = arith.addi %0, %c4_i32 : i32
    %50 = arith.index_cast %49 : i32 to index
    %51 = memref.load %arg1[%50] : memref<256xi32, #tpu.memory_space<smem>>
    %c4_i32_24 = arith.constant 4 : i32
    %52 = arith.addi %0, %c4_i32_24 : i32
    %53 = arith.index_cast %52 : i32 to index
    %54 = memref.load %arg2[%53] : memref<256xi32, #tpu.memory_space<smem>>
    %55 = arith.index_cast %51 : i32 to index
    %c0_25 = arith.constant 0 : index
    %56 = vector.load %arg3[%55, %c0_25] : memref<64x128xf32, #tpu.memory_space<vmem>>, vector<1x128xf32>
    %c4 = arith.constant 4 : index
    %c0_26 = arith.constant 0 : index
    %57 = vector.load %arg6[%c4, %c0_26] : memref<128x128xf32, #tpu.memory_space<vmem>>, vector<1x128xf32>
    tpu.vector_store %arg6[%c4, %c0_26], %56 {strides = array<i32>} : memref<128x128xf32, #tpu.memory_space<vmem>>, vector<1x128xf32>,
    %58 = arith.index_cast %54 : i32 to index
    %c0_27 = arith.constant 0 : index
    %59 = vector.load %arg4[%58, %c0_27] : memref<96x128xf32, #tpu.memory_space<vmem>>, vector<1x128xf32>
    %c4_28 = arith.constant 4 : index
    %c0_29 = arith.constant 0 : index
    %60 = vector.load %arg7[%c4_28, %c0_29] : memref<128x128xf32, #tpu.memory_space<vmem>>, vector<1x128xf32>
    tpu.vector_store %arg7[%c4_28, %c0_29], %59 {strides = array<i32>} : memref<128x128xf32, #tpu.memory_space<vmem>>, vector<1x128xf32>,
    %c5_i32 = arith.constant 5 : i32
    %61 = arith.addi %0, %c5_i32 : i32
    %62 = arith.index_cast %61 : i32 to index
    %63 = memref.load %arg1[%62] : memref<256xi32, #tpu.memory_space<smem>>
    %c5_i32_30 = arith.constant 5 : i32
    %64 = arith.addi %0, %c5_i32_30 : i32
    %65 = arith.index_cast %64 : i32 to index
    %66 = memref.load %arg2[%65] : memref<256xi32, #tpu.memory_space<smem>>
    %67 = arith.index_cast %63 : i32 to index
    %c0_31 = arith.constant 0 : index
    %68 = vector.load %arg3[%67, %c0_31] : memref<64x128xf32, #tpu.memory_space<vmem>>, vector<1x128xf32>
    %c5 = arith.constant 5 : index
    %c0_32 = arith.constant 0 : index
    %69 = vector.load %arg6[%c5, %c0_32] : memref<128x128xf32, #tpu.memory_space<vmem>>, vector<1x128xf32>
    tpu.vector_store %arg6[%c5, %c0_32], %68 {strides = array<i32>} : memref<128x128xf32, #tpu.memory_space<vmem>>, vector<1x128xf32>,
    %70 = arith.index_cast %66 : i32 to index
    %c0_33 = arith.constant 0 : index
    %71 = vector.load %arg4[%70, %c0_33] : memref<96x128xf32, #tpu.memory_space<vmem>>, vector<1x128xf32>
    %c5_34 = arith.constant 5 : index
    %c0_35 = arith.constant 0 : index
    %72 = vector.load %arg7[%c5_34, %c0_35] : memref<128x128xf32, #tpu.memory_space<vmem>>, vector<1x128xf32>
    tpu.vector_store %arg7[%c5_34, %c0_35], %71 {strides = array<i32>} : memref<128x128xf32, #tpu.memory_space<vmem>>, vector<1x128xf32>,
    %c6_i32 = arith.constant 6 : i32
    %73 = arith.addi %0, %c6_i32 : i32
    %74 = arith.index_cast %73 : i32 to index
    %75 = memref.load %arg1[%74] : memref<256xi32, #tpu.memory_space<smem>>
    %c6_i32_36 = arith.constant 6 : i32
    %76 = arith.addi %0, %c6_i32_36 : i32
    %77 = arith.index_cast %76 : i32 to index
    %78 = memref.load %arg2[%77] : memref<256xi32, #tpu.memory_space<smem>>
    %79 = arith.index_cast %75 : i32 to index
    %c0_37 = arith.constant 0 : index
    %80 = vector.load %arg3[%79, %c0_37] : memref<64x128xf32, #tpu.memory_space<vmem>>, vector<1x128xf32>
    %c6 = arith.constant 6 : index
    %c0_38 = arith.constant 0 : index
    %81 = vector.load %arg6[%c6, %c0_38] : memref<128x128xf32, #tpu.memory_space<vmem>>, vector<1x128xf32>
    tpu.vector_store %arg6[%c6, %c0_38], %80 {strides = array<i32>} : memref<128x128xf32, #tpu.memory_space<vmem>>, vector<1x128xf32>,
    %82 = arith.index_cast %78 : i32 to index
    %c0_39 = arith.constant 0 : index
    %83 = vector.load %arg4[%82, %c0_39] : memref<96x128xf32, #tpu.memory_space<vmem>>, vector<1x128xf32>
    %c6_40 = arith.constant 6 : index
    %c0_41 = arith.constant 0 : index
    %84 = vector.load %arg7[%c6_40, %c0_41] : memref<128x128xf32, #tpu.memory_space<vmem>>, vector<1x128xf32>
    tpu.vector_store %arg7[%c6_40, %c0_41], %83 {strides = array<i32>} : memref<128x128xf32, #tpu.memory_space<vmem>>, vector<1x128xf32>,
    %c7_i32 = arith.constant 7 : i32
    %85 = arith.addi %0, %c7_i32 : i32
    %86 = arith.index_cast %85 : i32 to index
    %87 = memref.load %arg1[%86] : memref<256xi32, #tpu.memory_space<smem>>
    %c7_i32_42 = arith.constant 7 : i32
    %88 = arith.addi %0, %c7_i32_42 : i32
    %89 = arith.index_cast %88 : i32 to index
    %90 = memref.load %arg2[%89] : memref<256xi32, #tpu.memory_space<smem>>
    %91 = arith.index_cast %87 : i32 to index
    %c0_43 = arith.constant 0 : index
    %92 = vector.load %arg3[%91, %c0_43] : memref<64x128xf32, #tpu.memory_space<vmem>>, vector<1x128xf32>
    %c7 = arith.constant 7 : index
    %c0_44 = arith.constant 0 : index
    %93 = vector.load %arg6[%c7, %c0_44] : memref<128x128xf32, #tpu.memory_space<vmem>>, vector<1x128xf32>
    tpu.vector_store %arg6[%c7, %c0_44], %92 {strides = array<i32>} : memref<128x128xf32, #tpu.memory_space<vmem>>, vector<1x128xf32>,
    %94 = arith.index_cast %90 : i32 to index
    %c0_45 = arith.constant 0 : index
    %95 = vector.load %arg4[%94, %c0_45] : memref<96x128xf32, #tpu.memory_space<vmem>>, vector<1x128xf32>
    %c7_46 = arith.constant 7 : index
    %c0_47 = arith.constant 0 : index
    %96 = vector.load %arg7[%c7_46, %c0_47] : memref<128x128xf32, #tpu.memory_space<vmem>>, vector<1x128xf32>
    tpu.vector_store %arg7[%c7_46, %c0_47], %95 {strides = array<i32>} : memref<128x128xf32, #tpu.memory_space<vmem>>, vector<1x128xf32>,
    %c8_i32 = arith.constant 8 : i32
    %97 = arith.addi %0, %c8_i32 : i32
    %98 = arith.index_cast %97 : i32 to index
    %99 = memref.load %arg1[%98] : memref<256xi32, #tpu.memory_space<smem>>
    %c8_i32_48 = arith.constant 8 : i32
    %100 = arith.addi %0, %c8_i32_48 : i32
    %101 = arith.index_cast %100 : i32 to index
    %102 = memref.load %arg2[%101] : memref<256xi32, #tpu.memory_space<smem>>
    %103 = arith.index_cast %99 : i32 to index
    %c0_49 = arith.constant 0 : index
    %104 = vector.load %arg3[%103, %c0_49] : memref<64x128xf32, #tpu.memory_space<vmem>>, vector<1x128xf32>
    %c8 = arith.constant 8 : index
    %c0_50 = arith.constant 0 : index
    %105 = vector.load %arg6[%c8, %c0_50] : memref<128x128xf32, #tpu.memory_space<vmem>>, vector<1x128xf32>
    tpu.vector_store %arg6[%c8, %c0_50], %104 {strides = array<i32>} : memref<128x128xf32, #tpu.memory_space<vmem>>, vector<1x128xf32>,
    %106 = arith.index_cast %102 : i32 to index
    %c0_51 = arith.constant 0 : index
    %107 = vector.load %arg4[%106, %c0_51] : memref<96x128xf32, #tpu.memory_space<vmem>>, vector<1x128xf32>
    %c8_52 = arith.constant 8 : index
    %c0_53 = arith.constant 0 : index
    %108 = vector.load %arg7[%c8_52, %c0_53] : memref<128x128xf32, #tpu.memory_space<vmem>>, vector<1x128xf32>
    tpu.vector_store %arg7[%c8_52, %c0_53], %107 {strides = array<i32>} : memref<128x128xf32, #tpu.memory_space<vmem>>, vector<1x128xf32>,
    %c9_i32 = arith.constant 9 : i32
    %109 = arith.addi %0, %c9_i32 : i32
    %110 = arith.index_cast %109 : i32 to index
    %111 = memref.load %arg1[%110] : memref<256xi32, #tpu.memory_space<smem>>
    %c9_i32_54 = arith.constant 9 : i32
    %112 = arith.addi %0, %c9_i32_54 : i32
    %113 = arith.index_cast %112 : i32 to index
    %114 = memref.load %arg2[%113] : memref<256xi32, #tpu.memory_space<smem>>
    %115 = arith.index_cast %111 : i32 to index
    %c0_55 = arith.constant 0 : index
    %116 = vector.load %arg3[%115, %c0_55] : memref<64x128xf32, #tpu.memory_space<vmem>>, vector<1x128xf32>
    %c9 = arith.constant 9 : index
    %c0_56 = arith.constant 0 : index
    %117 = vector.load %arg6[%c9, %c0_56] : memref<128x128xf32, #tpu.memory_space<vmem>>, vector<1x128xf32>
    tpu.vector_store %arg6[%c9, %c0_56], %116 {strides = array<i32>} : memref<128x128xf32, #tpu.memory_space<vmem>>, vector<1x128xf32>,
    %118 = arith.index_cast %114 : i32 to index
    %c0_57 = arith.constant 0 : index
    %119 = vector.load %arg4[%118, %c0_57] : memref<96x128xf32, #tpu.memory_space<vmem>>, vector<1x128xf32>
    %c9_58 = arith.constant 9 : index
    %c0_59 = arith.constant 0 : index
    %120 = vector.load %arg7[%c9_58, %c0_59] : memref<128x128xf32, #tpu.memory_space<vmem>>, vector<1x128xf32>
    tpu.vector_store %arg7[%c9_58, %c0_59], %119 {strides = array<i32>} : memref<128x128xf32, #tpu.memory_space<vmem>>, vector<1x128xf32>,
    %c10_i32 = arith.constant 10 : i32
    %121 = arith.addi %0, %c10_i32 : i32
    %122 = arith.index_cast %121 : i32 to index
    %123 = memref.load %arg1[%122] : memref<256xi32, #tpu.memory_space<smem>>
    %c10_i32_60 = arith.constant 10 : i32
    %124 = arith.addi %0, %c10_i32_60 : i32
    %125 = arith.index_cast %124 : i32 to index
    %126 = memref.load %arg2[%125] : memref<256xi32, #tpu.memory_space<smem>>
    %127 = arith.index_cast %123 : i32 to index
    %c0_61 = arith.constant 0 : index
    %128 = vector.load %arg3[%127, %c0_61] : memref<64x128xf32, #tpu.memory_space<vmem>>, vector<1x128xf32>
    %c10 = arith.constant 10 : index
    %c0_62 = arith.constant 0 : index
    %129 = vector.load %arg6[%c10, %c0_62] : memref<128x128xf32, #tpu.memory_space<vmem>>, vector<1x128xf32>
    tpu.vector_store %arg6[%c10, %c0_62], %128 {strides = array<i32>} : memref<128x128xf32, #tpu.memory_space<vmem>>, vector<1x128xf32>,
    %130 = arith.index_cast %126 : i32 to index
    %c0_63 = arith.constant 0 : index
    %131 = vector.load %arg4[%130, %c0_63] : memref<96x128xf32, #tpu.memory_space<vmem>>, vector<1x128xf32>
    %c10_64 = arith.constant 10 : index
    %c0_65 = arith.constant 0 : index
    %132 = vector.load %arg7[%c10_64, %c0_65] : memref<128x128xf32, #tpu.memory_space<vmem>>, vector<1x128xf32>
    tpu.vector_store %arg7[%c10_64, %c0_65], %131 {strides = array<i32>} : memref<128x128xf32, #tpu.memory_space<vmem>>, vector<1x128xf32>,
    %c11_i32 = arith.constant 11 : i32
    %133 = arith.addi %0, %c11_i32 : i32
    %134 = arith.index_cast %133 : i32 to index
    %135 = memref.load %arg1[%134] : memref<256xi32, #tpu.memory_space<smem>>
    %c11_i32_66 = arith.constant 11 : i32
    %136 = arith.addi %0, %c11_i32_66 : i32
    %137 = arith.index_cast %136 : i32 to index
    %138 = memref.load %arg2[%137] : memref<256xi32, #tpu.memory_space<smem>>
    %139 = arith.index_cast %135 : i32 to index
    %c0_67 = arith.constant 0 : index
    %140 = vector.load %arg3[%139, %c0_67] : memref<64x128xf32, #tpu.memory_space<vmem>>, vector<1x128xf32>
    %c11 = arith.constant 11 : index
    %c0_68 = arith.constant 0 : index
    %141 = vector.load %arg6[%c11, %c0_68] : memref<128x128xf32, #tpu.memory_space<vmem>>, vector<1x128xf32>
    tpu.vector_store %arg6[%c11, %c0_68], %140 {strides = array<i32>} : memref<128x128xf32, #tpu.memory_space<vmem>>, vector<1x128xf32>,
    %142 = arith.index_cast %138 : i32 to index
    %c0_69 = arith.constant 0 : index
    %143 = vector.load %arg4[%142, %c0_69] : memref<96x128xf32, #tpu.memory_space<vmem>>, vector<1x128xf32>
    %c11_70 = arith.constant 11 : index
    %c0_71 = arith.constant 0 : index
    %144 = vector.load %arg7[%c11_70, %c0_71] : memref<128x128xf32, #tpu.memory_space<vmem>>, vector<1x128xf32>
    tpu.vector_store %arg7[%c11_70, %c0_71], %143 {strides = array<i32>} : memref<128x128xf32, #tpu.memory_space<vmem>>, vector<1x128xf32>,
    %c12_i32 = arith.constant 12 : i32
    %145 = arith.addi %0, %c12_i32 : i32
    %146 = arith.index_cast %145 : i32 to index
    %147 = memref.load %arg1[%146] : memref<256xi32, #tpu.memory_space<smem>>
    %c12_i32_72 = arith.constant 12 : i32
    %148 = arith.addi %0, %c12_i32_72 : i32
    %149 = arith.index_cast %148 : i32 to index
    %150 = memref.load %arg2[%149] : memref<256xi32, #tpu.memory_space<smem>>
    %151 = arith.index_cast %147 : i32 to index
    %c0_73 = arith.constant 0 : index
    %152 = vector.load %arg3[%151, %c0_73] : memref<64x128xf32, #tpu.memory_space<vmem>>, vector<1x128xf32>
    %c12 = arith.constant 12 : index
    %c0_74 = arith.constant 0 : index
    %153 = vector.load %arg6[%c12, %c0_74] : memref<128x128xf32, #tpu.memory_space<vmem>>, vector<1x128xf32>
    tpu.vector_store %arg6[%c12, %c0_74], %152 {strides = array<i32>} : memref<128x128xf32, #tpu.memory_space<vmem>>, vector<1x128xf32>,
    %154 = arith.index_cast %150 : i32 to index
    %c0_75 = arith.constant 0 : index
    %155 = vector.load %arg4[%154, %c0_75] : memref<96x128xf32, #tpu.memory_space<vmem>>, vector<1x128xf32>
    %c12_76 = arith.constant 12 : index
    %c0_77 = arith.constant 0 : index
    %156 = vector.load %arg7[%c12_76, %c0_77] : memref<128x128xf32, #tpu.memory_space<vmem>>, vector<1x128xf32>
    tpu.vector_store %arg7[%c12_76, %c0_77], %155 {strides = array<i32>} : memref<128x128xf32, #tpu.memory_space<vmem>>, vector<1x128xf32>,
    %c13_i32 = arith.constant 13 : i32
    %157 = arith.addi %0, %c13_i32 : i32
    %158 = arith.index_cast %157 : i32 to index
    %159 = memref.load %arg1[%158] : memref<256xi32, #tpu.memory_space<smem>>
    %c13_i32_78 = arith.constant 13 : i32
    %160 = arith.addi %0, %c13_i32_78 : i32
    %161 = arith.index_cast %160 : i32 to index
    %162 = memref.load %arg2[%161] : memref<256xi32, #tpu.memory_space<smem>>
    %163 = arith.index_cast %159 : i32 to index
    %c0_79 = arith.constant 0 : index
    %164 = vector.load %arg3[%163, %c0_79] : memref<64x128xf32, #tpu.memory_space<vmem>>, vector<1x128xf32>
    %c13 = arith.constant 13 : index
    %c0_80 = arith.constant 0 : index
    %165 = vector.load %arg6[%c13, %c0_80] : memref<128x128xf32, #tpu.memory_space<vmem>>, vector<1x128xf32>
    tpu.vector_store %arg6[%c13, %c0_80], %164 {strides = array<i32>} : memref<128x128xf32, #tpu.memory_space<vmem>>, vector<1x128xf32>,
    %166 = arith.index_cast %162 : i32 to index
    %c0_81 = arith.constant 0 : index
    %167 = vector.load %arg4[%166, %c0_81] : memref<96x128xf32, #tpu.memory_space<vmem>>, vector<1x128xf32>
    %c13_82 = arith.constant 13 : index
    %c0_83 = arith.constant 0 : index
    %168 = vector.load %arg7[%c13_82, %c0_83] : memref<128x128xf32, #tpu.memory_space<vmem>>, vector<1x128xf32>
    tpu.vector_store %arg7[%c13_82, %c0_83], %167 {strides = array<i32>} : memref<128x128xf32, #tpu.memory_space<vmem>>, vector<1x128xf32>,
    %c14_i32 = arith.constant 14 : i32
    %169 = arith.addi %0, %c14_i32 : i32
    %170 = arith.index_cast %169 : i32 to index
    %171 = memref.load %arg1[%170] : memref<256xi32, #tpu.memory_space<smem>>
    %c14_i32_84 = arith.constant 14 : i32
    %172 = arith.addi %0, %c14_i32_84 : i32
    %173 = arith.index_cast %172 : i32 to index
    %174 = memref.load %arg2[%173] : memref<256xi32, #tpu.memory_space<smem>>
    %175 = arith.index_cast %171 : i32 to index
    %c0_85 = arith.constant 0 : index
    %176 = vector.load %arg3[%175, %c0_85] : memref<64x128xf32, #tpu.memory_space<vmem>>, vector<1x128xf32>
    %c14 = arith.constant 14 : index
    %c0_86 = arith.constant 0 : index
    %177 = vector.load %arg6[%c14, %c0_86] : memref<128x128xf32, #tpu.memory_space<vmem>>, vector<1x128xf32>
    tpu.vector_store %arg6[%c14, %c0_86], %176 {strides = array<i32>} : memref<128x128xf32, #tpu.memory_space<vmem>>, vector<1x128xf32>,
    %178 = arith.index_cast %174 : i32 to index
    %c0_87 = arith.constant 0 : index
    %179 = vector.load %arg4[%178, %c0_87] : memref<96x128xf32, #tpu.memory_space<vmem>>, vector<1x128xf32>
    %c14_88 = arith.constant 14 : index
    %c0_89 = arith.constant 0 : index
    %180 = vector.load %arg7[%c14_88, %c0_89] : memref<128x128xf32, #tpu.memory_space<vmem>>, vector<1x128xf32>
    tpu.vector_store %arg7[%c14_88, %c0_89], %179 {strides = array<i32>} : memref<128x128xf32, #tpu.memory_space<vmem>>, vector<1x128xf32>,
    %c15_i32 = arith.constant 15 : i32
    %181 = arith.addi %0, %c15_i32 : i32
    %182 = arith.index_cast %181 : i32 to index
    %183 = memref.load %arg1[%182] : memref<256xi32, #tpu.memory_space<smem>>
    %c15_i32_90 = arith.constant 15 : i32
    %184 = arith.addi %0, %c15_i32_90 : i32
    %185 = arith.index_cast %184 : i32 to index
    %186 = memref.load %arg2[%185] : memref<256xi32, #tpu.memory_space<smem>>
    %187 = arith.index_cast %183 : i32 to index
    %c0_91 = arith.constant 0 : index
    %188 = vector.load %arg3[%187, %c0_91] : memref<64x128xf32, #tpu.memory_space<vmem>>, vector<1x128xf32>
    %c15 = arith.constant 15 : index
    %c0_92 = arith.constant 0 : index
    %189 = vector.load %arg6[%c15, %c0_92] : memref<128x128xf32, #tpu.memory_space<vmem>>, vector<1x128xf32>
    tpu.vector_store %arg6[%c15, %c0_92], %188 {strides = array<i32>} : memref<128x128xf32, #tpu.memory_space<vmem>>, vector<1x128xf32>,
    %190 = arith.index_cast %186 : i32 to index
    %c0_93 = arith.constant 0 : index
    %191 = vector.load %arg4[%190, %c0_93] : memref<96x128xf32, #tpu.memory_space<vmem>>, vector<1x128xf32>
    %c15_94 = arith.constant 15 : index
    %c0_95 = arith.constant 0 : index
    %192 = vector.load %arg7[%c15_94, %c0_95] : memref<128x128xf32, #tpu.memory_space<vmem>>, vector<1x128xf32>
    tpu.vector_store %arg7[%c15_94, %c0_95], %191 {strides = array<i32>} : memref<128x128xf32, #tpu.memory_space<vmem>>, vector<1x128xf32>,
    %c16_i32 = arith.constant 16 : i32
    %193 = arith.addi %0, %c16_i32 : i32
    %194 = arith.index_cast %193 : i32 to index
    %195 = memref.load %arg1[%194] : memref<256xi32, #tpu.memory_space<smem>>
    %c16_i32_96 = arith.constant 16 : i32
    %196 = arith.addi %0, %c16_i32_96 : i32
    %197 = arith.index_cast %196 : i32 to index
    %198 = memref.load %arg2[%197] : memref<256xi32, #tpu.memory_space<smem>>
    %199 = arith.index_cast %195 : i32 to index
    %c0_97 = arith.constant 0 : index
    %200 = vector.load %arg3[%199, %c0_97] : memref<64x128xf32, #tpu.memory_space<vmem>>, vector<1x128xf32>
    %c16 = arith.constant 16 : index
    %c0_98 = arith.constant 0 : index
    %201 = vector.load %arg6[%c16, %c0_98] : memref<128x128xf32, #tpu.memory_space<vmem>>, vector<1x128xf32>
    tpu.vector_store %arg6[%c16, %c0_98], %200 {strides = array<i32>} : memref<128x128xf32, #tpu.memory_space<vmem>>, vector<1x128xf32>,
    %202 = arith.index_cast %198 : i32 to index
    %c0_99 = arith.constant 0 : index
    %203 = vector.load %arg4[%202, %c0_99] : memref<96x128xf32, #tpu.memory_space<vmem>>, vector<1x128xf32>
    %c16_100 = arith.constant 16 : index
    %c0_101 = arith.constant 0 : index
    %204 = vector.load %arg7[%c16_100, %c0_101] : memref<128x128xf32, #tpu.memory_space<vmem>>, vector<1x128xf32>
    tpu.vector_store %arg7[%c16_100, %c0_101], %203 {strides = array<i32>} : memref<128x128xf32, #tpu.memory_space<vmem>>, vector<1x128xf32>,
    %c17_i32 = arith.constant 17 : i32
    %205 = arith.addi %0, %c17_i32 : i32
    %206 = arith.index_cast %205 : i32 to index
    %207 = memref.load %arg1[%206] : memref<256xi32, #tpu.memory_space<smem>>
    %c17_i32_102 = arith.constant 17 : i32
    %208 = arith.addi %0, %c17_i32_102 : i32
    %209 = arith.index_cast %208 : i32 to index
    %210 = memref.load %arg2[%209] : memref<256xi32, #tpu.memory_space<smem>>
    %211 = arith.index_cast %207 : i32 to index
    %c0_103 = arith.constant 0 : index
    %212 = vector.load %arg3[%211, %c0_103] : memref<64x128xf32, #tpu.memory_space<vmem>>, vector<1x128xf32>
    %c17 = arith.constant 17 : index
    %c0_104 = arith.constant 0 : index
    %213 = vector.load %arg6[%c17, %c0_104] : memref<128x128xf32, #tpu.memory_space<vmem>>, vector<1x128xf32>
    tpu.vector_store %arg6[%c17, %c0_104], %212 {strides = array<i32>} : memref<128x128xf32, #tpu.memory_space<vmem>>, vector<1x128xf32>,
    %214 = arith.index_cast %210 : i32 to index
    %c0_105 = arith.constant 0 : index
    %215 = vector.load %arg4[%214, %c0_105] : memref<96x128xf32, #tpu.memory_space<vmem>>, vector<1x128xf32>
    %c17_106 = arith.constant 17 : index
    %c0_107 = arith.constant 0 : index
    %216 = vector.load %arg7[%c17_106, %c0_107] : memref<128x128xf32, #tpu.memory_space<vmem>>, vector<1x128xf32>
    tpu.vector_store %arg7[%c17_106, %c0_107], %215 {strides = array<i32>} : memref<128x128xf32, #tpu.memory_space<vmem>>, vector<1x128xf32>,
    %c18_i32 = arith.constant 18 : i32
    %217 = arith.addi %0, %c18_i32 : i32
    %218 = arith.index_cast %217 : i32 to index
    %219 = memref.load %arg1[%218] : memref<256xi32, #tpu.memory_space<smem>>
    %c18_i32_108 = arith.constant 18 : i32
    %220 = arith.addi %0, %c18_i32_108 : i32
    %221 = arith.index_cast %220 : i32 to index
    %222 = memref.load %arg2[%221] : memref<256xi32, #tpu.memory_space<smem>>
    %223 = arith.index_cast %219 : i32 to index
    %c0_109 = arith.constant 0 : index
    %224 = vector.load %arg3[%223, %c0_109] : memref<64x128xf32, #tpu.memory_space<vmem>>, vector<1x128xf32>
    %c18 = arith.constant 18 : index
    %c0_110 = arith.constant 0 : index
    %225 = vector.load %arg6[%c18, %c0_110] : memref<128x128xf32, #tpu.memory_space<vmem>>, vector<1x128xf32>
    tpu.vector_store %arg6[%c18, %c0_110], %224 {strides = array<i32>} : memref<128x128xf32, #tpu.memory_space<vmem>>, vector<1x128xf32>,
    %226 = arith.index_cast %222 : i32 to index
    %c0_111 = arith.constant 0 : index
    %227 = vector.load %arg4[%226, %c0_111] : memref<96x128xf32, #tpu.memory_space<vmem>>, vector<1x128xf32>
    %c18_112 = arith.constant 18 : index
    %c0_113 = arith.constant 0 : index
    %228 = vector.load %arg7[%c18_112, %c0_113] : memref<128x128xf32, #tpu.memory_space<vmem>>, vector<1x128xf32>
    tpu.vector_store %arg7[%c18_112, %c0_113], %227 {strides = array<i32>} : memref<128x128xf32, #tpu.memory_space<vmem>>, vector<1x128xf32>,
    %c19_i32 = arith.constant 19 : i32
    %229 = arith.addi %0, %c19_i32 : i32
    %230 = arith.index_cast %229 : i32 to index
    %231 = memref.load %arg1[%230] : memref<256xi32, #tpu.memory_space<smem>>
    %c19_i32_114 = arith.constant 19 : i32
    %232 = arith.addi %0, %c19_i32_114 : i32
    %233 = arith.index_cast %232 : i32 to index
    %234 = memref.load %arg2[%233] : memref<256xi32, #tpu.memory_space<smem>>
    %235 = arith.index_cast %231 : i32 to index
    %c0_115 = arith.constant 0 : index
    %236 = vector.load %arg3[%235, %c0_115] : memref<64x128xf32, #tpu.memory_space<vmem>>, vector<1x128xf32>
    %c19 = arith.constant 19 : index
    %c0_116 = arith.constant 0 : index
    %237 = vector.load %arg6[%c19, %c0_116] : memref<128x128xf32, #tpu.memory_space<vmem>>, vector<1x128xf32>
    tpu.vector_store %arg6[%c19, %c0_116], %236 {strides = array<i32>} : memref<128x128xf32, #tpu.memory_space<vmem>>, vector<1x128xf32>,
    %238 = arith.index_cast %234 : i32 to index
    %c0_117 = arith.constant 0 : index
    %239 = vector.load %arg4[%238, %c0_117] : memref<96x128xf32, #tpu.memory_space<vmem>>, vector<1x128xf32>
    %c19_118 = arith.constant 19 : index
    %c0_119 = arith.constant 0 : index
    %240 = vector.load %arg7[%c19_118, %c0_119] : memref<128x128xf32, #tpu.memory_space<vmem>>, vector<1x128xf32>
    tpu.vector_store %arg7[%c19_118, %c0_119], %239 {strides = array<i32>} : memref<128x128xf32, #tpu.memory_space<vmem>>, vector<1x128xf32>,
    %c20_i32 = arith.constant 20 : i32
    %241 = arith.addi %0, %c20_i32 : i32
    %242 = arith.index_cast %241 : i32 to index
    %243 = memref.load %arg1[%242] : memref<256xi32, #tpu.memory_space<smem>>
    %c20_i32_120 = arith.constant 20 : i32
    %244 = arith.addi %0, %c20_i32_120 : i32
    %245 = arith.index_cast %244 : i32 to index
    %246 = memref.load %arg2[%245] : memref<256xi32, #tpu.memory_space<smem>>
    %247 = arith.index_cast %243 : i32 to index
    %c0_121 = arith.constant 0 : index
    %248 = vector.load %arg3[%247, %c0_121] : memref<64x128xf32, #tpu.memory_space<vmem>>, vector<1x128xf32>
    %c20 = arith.constant 20 : index
    %c0_122 = arith.constant 0 : index
    %249 = vector.load %arg6[%c20, %c0_122] : memref<128x128xf32, #tpu.memory_space<vmem>>, vector<1x128xf32>
    tpu.vector_store %arg6[%c20, %c0_122], %248 {strides = array<i32>} : memref<128x128xf32, #tpu.memory_space<vmem>>, vector<1x128xf32>,
    %250 = arith.index_cast %246 : i32 to index
    %c0_123 = arith.constant 0 : index
    %251 = vector.load %arg4[%250, %c0_123] : memref<96x128xf32, #tpu.memory_space<vmem>>, vector<1x128xf32>
    %c20_124 = arith.constant 20 : index
    %c0_125 = arith.constant 0 : index
    %252 = vector.load %arg7[%c20_124, %c0_125] : memref<128x128xf32, #tpu.memory_space<vmem>>, vector<1x128xf32>
    tpu.vector_store %arg7[%c20_124, %c0_125], %251 {strides = array<i32>} : memref<128x128xf32, #tpu.memory_space<vmem>>, vector<1x128xf32>,
    %c21_i32 = arith.constant 21 : i32
    %253 = arith.addi %0, %c21_i32 : i32
    %254 = arith.index_cast %253 : i32 to index
    %255 = memref.load %arg1[%254] : memref<256xi32, #tpu.memory_space<smem>>
    %c21_i32_126 = arith.constant 21 : i32
    %256 = arith.addi %0, %c21_i32_126 : i32
    %257 = arith.index_cast %256 : i32 to index
    %258 = memref.load %arg2[%257] : memref<256xi32, #tpu.memory_space<smem>>
    %259 = arith.index_cast %255 : i32 to index
    %c0_127 = arith.constant 0 : index
    %260 = vector.load %arg3[%259, %c0_127] : memref<64x128xf32, #tpu.memory_space<vmem>>, vector<1x128xf32>
    %c21 = arith.constant 21 : index
    %c0_128 = arith.constant 0 : index
    %261 = vector.load %arg6[%c21, %c0_128] : memref<128x128xf32, #tpu.memory_space<vmem>>, vector<1x128xf32>
    tpu.vector_store %arg6[%c21, %c0_128], %260 {strides = array<i32>} : memref<128x128xf32, #tpu.memory_space<vmem>>, vector<1x128xf32>,
    %262 = arith.index_cast %258 : i32 to index
    %c0_129 = arith.constant 0 : index
    %263 = vector.load %arg4[%262, %c0_129] : memref<96x128xf32, #tpu.memory_space<vmem>>, vector<1x128xf32>
    %c21_130 = arith.constant 21 : index
    %c0_131 = arith.constant 0 : index
    %264 = vector.load %arg7[%c21_130, %c0_131] : memref<128x128xf32, #tpu.memory_space<vmem>>, vector<1x128xf32>
    tpu.vector_store %arg7[%c21_130, %c0_131], %263 {strides = array<i32>} : memref<128x128xf32, #tpu.memory_space<vmem>>, vector<1x128xf32>,
    %c22_i32 = arith.constant 22 : i32
    %265 = arith.addi %0, %c22_i32 : i32
    %266 = arith.index_cast %265 : i32 to index
    %267 = memref.load %arg1[%266] : memref<256xi32, #tpu.memory_space<smem>>
    %c22_i32_132 = arith.constant 22 : i32
    %268 = arith.addi %0, %c22_i32_132 : i32
    %269 = arith.index_cast %268 : i32 to index
    %270 = memref.load %arg2[%269] : memref<256xi32, #tpu.memory_space<smem>>
    %271 = arith.index_cast %267 : i32 to index
    %c0_133 = arith.constant 0 : index
    %272 = vector.load %arg3[%271, %c0_133] : memref<64x128xf32, #tpu.memory_space<vmem>>, vector<1x128xf32>
    %c22 = arith.constant 22 : index
    %c0_134 = arith.constant 0 : index
    %273 = vector.load %arg6[%c22, %c0_134] : memref<128x128xf32, #tpu.memory_space<vmem>>, vector<1x128xf32>
    tpu.vector_store %arg6[%c22, %c0_134], %272 {strides = array<i32>} : memref<128x128xf32, #tpu.memory_space<vmem>>, vector<1x128xf32>,
    %274 = arith.index_cast %270 : i32 to index
    %c0_135 = arith.constant 0 : index
    %275 = vector.load %arg4[%274, %c0_135] : memref<96x128xf32, #tpu.memory_space<vmem>>, vector<1x128xf32>
    %c22_136 = arith.constant 22 : index
    %c0_137 = arith.constant 0 : index
    %276 = vector.load %arg7[%c22_136, %c0_137] : memref<128x128xf32, #tpu.memory_space<vmem>>, vector<1x128xf32>
    tpu.vector_store %arg7[%c22_136, %c0_137], %275 {strides = array<i32>} : memref<128x128xf32, #tpu.memory_space<vmem>>, vector<1x128xf32>,
    %c23_i32 = arith.constant 23 : i32
    %277 = arith.addi %0, %c23_i32 : i32
    %278 = arith.index_cast %277 : i32 to index
    %279 = memref.load %arg1[%278] : memref<256xi32, #tpu.memory_space<smem>>
    %c23_i32_138 = arith.constant 23 : i32
    %280 = arith.addi %0, %c23_i32_138 : i32
    %281 = arith.index_cast %280 : i32 to index
    %282 = memref.load %arg2[%281] : memref<256xi32, #tpu.memory_space<smem>>
    %283 = arith.index_cast %279 : i32 to index
    %c0_139 = arith.constant 0 : index
    %284 = vector.load %arg3[%283, %c0_139] : memref<64x128xf32, #tpu.memory_space<vmem>>, vector<1x128xf32>
    %c23 = arith.constant 23 : index
    %c0_140 = arith.constant 0 : index
    %285 = vector.load %arg6[%c23, %c0_140] : memref<128x128xf32, #tpu.memory_space<vmem>>, vector<1x128xf32>
    tpu.vector_store %arg6[%c23, %c0_140], %284 {strides = array<i32>} : memref<128x128xf32, #tpu.memory_space<vmem>>, vector<1x128xf32>,
    %286 = arith.index_cast %282 : i32 to index
    %c0_141 = arith.constant 0 : index
    %287 = vector.load %arg4[%286, %c0_141] : memref<96x128xf32, #tpu.memory_space<vmem>>, vector<1x128xf32>
    %c23_142 = arith.constant 23 : index
    %c0_143 = arith.constant 0 : index
    %288 = vector.load %arg7[%c23_142, %c0_143] : memref<128x128xf32, #tpu.memory_space<vmem>>, vector<1x128xf32>
    tpu.vector_store %arg7[%c23_142, %c0_143], %287 {strides = array<i32>} : memref<128x128xf32, #tpu.memory_space<vmem>>, vector<1x128xf32>,
    %c24_i32 = arith.constant 24 : i32
    %289 = arith.addi %0, %c24_i32 : i32
    %290 = arith.index_cast %289 : i32 to index
    %291 = memref.load %arg1[%290] : memref<256xi32, #tpu.memory_space<smem>>
    %c24_i32_144 = arith.constant 24 : i32
    %292 = arith.addi %0, %c24_i32_144 : i32
    %293 = arith.index_cast %292 : i32 to index
    %294 = memref.load %arg2[%293] : memref<256xi32, #tpu.memory_space<smem>>
    %295 = arith.index_cast %291 : i32 to index
    %c0_145 = arith.constant 0 : index
    %296 = vector.load %arg3[%295, %c0_145] : memref<64x128xf32, #tpu.memory_space<vmem>>, vector<1x128xf32>
    %c24 = arith.constant 24 : index
    %c0_146 = arith.constant 0 : index
    %297 = vector.load %arg6[%c24, %c0_146] : memref<128x128xf32, #tpu.memory_space<vmem>>, vector<1x128xf32>
    tpu.vector_store %arg6[%c24, %c0_146], %296 {strides = array<i32>} : memref<128x128xf32, #tpu.memory_space<vmem>>, vector<1x128xf32>,
    %298 = arith.index_cast %294 : i32 to index
    %c0_147 = arith.constant 0 : index
    %299 = vector.load %arg4[%298, %c0_147] : memref<96x128xf32, #tpu.memory_space<vmem>>, vector<1x128xf32>
    %c24_148 = arith.constant 24 : index
    %c0_149 = arith.constant 0 : index
    %300 = vector.load %arg7[%c24_148, %c0_149] : memref<128x128xf32, #tpu.memory_space<vmem>>, vector<1x128xf32>
    tpu.vector_store %arg7[%c24_148, %c0_149], %299 {strides = array<i32>} : memref<128x128xf32, #tpu.memory_space<vmem>>, vector<1x128xf32>,
    %c25_i32 = arith.constant 25 : i32
    %301 = arith.addi %0, %c25_i32 : i32
    %302 = arith.index_cast %301 : i32 to index
    %303 = memref.load %arg1[%302] : memref<256xi32, #tpu.memory_space<smem>>
    %c25_i32_150 = arith.constant 25 : i32
    %304 = arith.addi %0, %c25_i32_150 : i32
    %305 = arith.index_cast %304 : i32 to index
    %306 = memref.load %arg2[%305] : memref<256xi32, #tpu.memory_space<smem>>
    %307 = arith.index_cast %303 : i32 to index
    %c0_151 = arith.constant 0 : index
    %308 = vector.load %arg3[%307, %c0_151] : memref<64x128xf32, #tpu.memory_space<vmem>>, vector<1x128xf32>
    %c25 = arith.constant 25 : index
    %c0_152 = arith.constant 0 : index
    %309 = vector.load %arg6[%c25, %c0_152] : memref<128x128xf32, #tpu.memory_space<vmem>>, vector<1x128xf32>
    tpu.vector_store %arg6[%c25, %c0_152], %308 {strides = array<i32>} : memref<128x128xf32, #tpu.memory_space<vmem>>, vector<1x128xf32>,
    %310 = arith.index_cast %306 : i32 to index
    %c0_153 = arith.constant 0 : index
    %311 = vector.load %arg4[%310, %c0_153] : memref<96x128xf32, #tpu.memory_space<vmem>>, vector<1x128xf32>
    %c25_154 = arith.constant 25 : index
    %c0_155 = arith.constant 0 : index
    %312 = vector.load %arg7[%c25_154, %c0_155] : memref<128x128xf32, #tpu.memory_space<vmem>>, vector<1x128xf32>
    tpu.vector_store %arg7[%c25_154, %c0_155], %311 {strides = array<i32>} : memref<128x128xf32, #tpu.memory_space<vmem>>, vector<1x128xf32>,
    %c26_i32 = arith.constant 26 : i32
    %313 = arith.addi %0, %c26_i32 : i32
    %314 = arith.index_cast %313 : i32 to index
    %315 = memref.load %arg1[%314] : memref<256xi32, #tpu.memory_space<smem>>
    %c26_i32_156 = arith.constant 26 : i32
    %316 = arith.addi %0, %c26_i32_156 : i32
    %317 = arith.index_cast %316 : i32 to index
    %318 = memref.load %arg2[%317] : memref<256xi32, #tpu.memory_space<smem>>
    %319 = arith.index_cast %315 : i32 to index
    %c0_157 = arith.constant 0 : index
    %320 = vector.load %arg3[%319, %c0_157] : memref<64x128xf32, #tpu.memory_space<vmem>>, vector<1x128xf32>
    %c26 = arith.constant 26 : index
    %c0_158 = arith.constant 0 : index
    %321 = vector.load %arg6[%c26, %c0_158] : memref<128x128xf32, #tpu.memory_space<vmem>>, vector<1x128xf32>
    tpu.vector_store %arg6[%c26, %c0_158], %320 {strides = array<i32>} : memref<128x128xf32, #tpu.memory_space<vmem>>, vector<1x128xf32>,
    %322 = arith.index_cast %318 : i32 to index
    %c0_159 = arith.constant 0 : index
    %323 = vector.load %arg4[%322, %c0_159] : memref<96x128xf32, #tpu.memory_space<vmem>>, vector<1x128xf32>
    %c26_160 = arith.constant 26 : index
    %c0_161 = arith.constant 0 : index
    %324 = vector.load %arg7[%c26_160, %c0_161] : memref<128x128xf32, #tpu.memory_space<vmem>>, vector<1x128xf32>
    tpu.vector_store %arg7[%c26_160, %c0_161], %323 {strides = array<i32>} : memref<128x128xf32, #tpu.memory_space<vmem>>, vector<1x128xf32>,
    %c27_i32 = arith.constant 27 : i32
    %325 = arith.addi %0, %c27_i32 : i32
    %326 = arith.index_cast %325 : i32 to index
    %327 = memref.load %arg1[%326] : memref<256xi32, #tpu.memory_space<smem>>
    %c27_i32_162 = arith.constant 27 : i32
    %328 = arith.addi %0, %c27_i32_162 : i32
    %329 = arith.index_cast %328 : i32 to index
    %330 = memref.load %arg2[%329] : memref<256xi32, #tpu.memory_space<smem>>
    %331 = arith.index_cast %327 : i32 to index
    %c0_163 = arith.constant 0 : index
    %332 = vector.load %arg3[%331, %c0_163] : memref<64x128xf32, #tpu.memory_space<vmem>>, vector<1x128xf32>
    %c27 = arith.constant 27 : index
    %c0_164 = arith.constant 0 : index
    %333 = vector.load %arg6[%c27, %c0_164] : memref<128x128xf32, #tpu.memory_space<vmem>>, vector<1x128xf32>
    tpu.vector_store %arg6[%c27, %c0_164], %332 {strides = array<i32>} : memref<128x128xf32, #tpu.memory_space<vmem>>, vector<1x128xf32>,
    %334 = arith.index_cast %330 : i32 to index
    %c0_165 = arith.constant 0 : index
    %335 = vector.load %arg4[%334, %c0_165] : memref<96x128xf32, #tpu.memory_space<vmem>>, vector<1x128xf32>
    %c27_166 = arith.constant 27 : index
    %c0_167 = arith.constant 0 : index
    %336 = vector.load %arg7[%c27_166, %c0_167] : memref<128x128xf32, #tpu.memory_space<vmem>>, vector<1x128xf32>
    tpu.vector_store %arg7[%c27_166, %c0_167], %335 {strides = array<i32>} : memref<128x128xf32, #tpu.memory_space<vmem>>, vector<1x128xf32>,
    %c28_i32 = arith.constant 28 : i32
    %337 = arith.addi %0, %c28_i32 : i32
    %338 = arith.index_cast %337 : i32 to index
    %339 = memref.load %arg1[%338] : memref<256xi32, #tpu.memory_space<smem>>
    %c28_i32_168 = arith.constant 28 : i32
    %340 = arith.addi %0, %c28_i32_168 : i32
    %341 = arith.index_cast %340 : i32 to index
    %342 = memref.load %arg2[%341] : memref<256xi32, #tpu.memory_space<smem>>
    %343 = arith.index_cast %339 : i32 to index
    %c0_169 = arith.constant 0 : index
    %344 = vector.load %arg3[%343, %c0_169] : memref<64x128xf32, #tpu.memory_space<vmem>>, vector<1x128xf32>
    %c28 = arith.constant 28 : index
    %c0_170 = arith.constant 0 : index
    %345 = vector.load %arg6[%c28, %c0_170] : memref<128x128xf32, #tpu.memory_space<vmem>>, vector<1x128xf32>
    tpu.vector_store %arg6[%c28, %c0_170], %344 {strides = array<i32>} : memref<128x128xf32, #tpu.memory_space<vmem>>, vector<1x128xf32>,
    %346 = arith.index_cast %342 : i32 to index
    %c0_171 = arith.constant 0 : index
    %347 = vector.load %arg4[%346, %c0_171] : memref<96x128xf32, #tpu.memory_space<vmem>>, vector<1x128xf32>
    %c28_172 = arith.constant 28 : index
    %c0_173 = arith.constant 0 : index
    %348 = vector.load %arg7[%c28_172, %c0_173] : memref<128x128xf32, #tpu.memory_space<vmem>>, vector<1x128xf32>
    tpu.vector_store %arg7[%c28_172, %c0_173], %347 {strides = array<i32>} : memref<128x128xf32, #tpu.memory_space<vmem>>, vector<1x128xf32>,
    %c29_i32 = arith.constant 29 : i32
    %349 = arith.addi %0, %c29_i32 : i32
    %350 = arith.index_cast %349 : i32 to index
    %351 = memref.load %arg1[%350] : memref<256xi32, #tpu.memory_space<smem>>
    %c29_i32_174 = arith.constant 29 : i32
    %352 = arith.addi %0, %c29_i32_174 : i32
    %353 = arith.index_cast %352 : i32 to index
    %354 = memref.load %arg2[%353] : memref<256xi32, #tpu.memory_space<smem>>
    %355 = arith.index_cast %351 : i32 to index
    %c0_175 = arith.constant 0 : index
    %356 = vector.load %arg3[%355, %c0_175] : memref<64x128xf32, #tpu.memory_space<vmem>>, vector<1x128xf32>
    %c29 = arith.constant 29 : index
    %c0_176 = arith.constant 0 : index
    %357 = vector.load %arg6[%c29, %c0_176] : memref<128x128xf32, #tpu.memory_space<vmem>>, vector<1x128xf32>
    tpu.vector_store %arg6[%c29, %c0_176], %356 {strides = array<i32>} : memref<128x128xf32, #tpu.memory_space<vmem>>, vector<1x128xf32>,
    %358 = arith.index_cast %354 : i32 to index
    %c0_177 = arith.constant 0 : index
    %359 = vector.load %arg4[%358, %c0_177] : memref<96x128xf32, #tpu.memory_space<vmem>>, vector<1x128xf32>
    %c29_178 = arith.constant 29 : index
    %c0_179 = arith.constant 0 : index
    %360 = vector.load %arg7[%c29_178, %c0_179] : memref<128x128xf32, #tpu.memory_space<vmem>>, vector<1x128xf32>
    tpu.vector_store %arg7[%c29_178, %c0_179], %359 {strides = array<i32>} : memref<128x128xf32, #tpu.memory_space<vmem>>, vector<1x128xf32>,
    %c30_i32 = arith.constant 30 : i32
    %361 = arith.addi %0, %c30_i32 : i32
    %362 = arith.index_cast %361 : i32 to index
    %363 = memref.load %arg1[%362] : memref<256xi32, #tpu.memory_space<smem>>
    %c30_i32_180 = arith.constant 30 : i32
    %364 = arith.addi %0, %c30_i32_180 : i32
    %365 = arith.index_cast %364 : i32 to index
    %366 = memref.load %arg2[%365] : memref<256xi32, #tpu.memory_space<smem>>
    %367 = arith.index_cast %363 : i32 to index
    %c0_181 = arith.constant 0 : index
    %368 = vector.load %arg3[%367, %c0_181] : memref<64x128xf32, #tpu.memory_space<vmem>>, vector<1x128xf32>
    %c30 = arith.constant 30 : index
    %c0_182 = arith.constant 0 : index
    %369 = vector.load %arg6[%c30, %c0_182] : memref<128x128xf32, #tpu.memory_space<vmem>>, vector<1x128xf32>
    tpu.vector_store %arg6[%c30, %c0_182], %368 {strides = array<i32>} : memref<128x128xf32, #tpu.memory_space<vmem>>, vector<1x128xf32>,
    %370 = arith.index_cast %366 : i32 to index
    %c0_183 = arith.constant 0 : index
    %371 = vector.load %arg4[%370, %c0_183] : memref<96x128xf32, #tpu.memory_space<vmem>>, vector<1x128xf32>
    %c30_184 = arith.constant 30 : index
    %c0_185 = arith.constant 0 : index
    %372 = vector.load %arg7[%c30_184, %c0_185] : memref<128x128xf32, #tpu.memory_space<vmem>>, vector<1x128xf32>
    tpu.vector_store %arg7[%c30_184, %c0_185], %371 {strides = array<i32>} : memref<128x128xf32, #tpu.memory_space<vmem>>, vector<1x128xf32>,
    %c31_i32 = arith.constant 31 : i32
    %373 = arith.addi %0, %c31_i32 : i32
    %374 = arith.index_cast %373 : i32 to index
    %375 = memref.load %arg1[%374] : memref<256xi32, #tpu.memory_space<smem>>
    %c31_i32_186 = arith.constant 31 : i32
    %376 = arith.addi %0, %c31_i32_186 : i32
    %377 = arith.index_cast %376 : i32 to index
    %378 = memref.load %arg2[%377] : memref<256xi32, #tpu.memory_space<smem>>
    %379 = arith.index_cast %375 : i32 to index
    %c0_187 = arith.constant 0 : index
    %380 = vector.load %arg3[%379, %c0_187] : memref<64x128xf32, #tpu.memory_space<vmem>>, vector<1x128xf32>
    %c31 = arith.constant 31 : index
    %c0_188 = arith.constant 0 : index
    %381 = vector.load %arg6[%c31, %c0_188] : memref<128x128xf32, #tpu.memory_space<vmem>>, vector<1x128xf32>
    tpu.vector_store %arg6[%c31, %c0_188], %380 {strides = array<i32>} : memref<128x128xf32, #tpu.memory_space<vmem>>, vector<1x128xf32>,
    %382 = arith.index_cast %378 : i32 to index
    %c0_189 = arith.constant 0 : index
    %383 = vector.load %arg4[%382, %c0_189] : memref<96x128xf32, #tpu.memory_space<vmem>>, vector<1x128xf32>
    %c31_190 = arith.constant 31 : index
    %c0_191 = arith.constant 0 : index
    %384 = vector.load %arg7[%c31_190, %c0_191] : memref<128x128xf32, #tpu.memory_space<vmem>>, vector<1x128xf32>
    tpu.vector_store %arg7[%c31_190, %c0_191], %383 {strides = array<i32>} : memref<128x128xf32, #tpu.memory_space<vmem>>, vector<1x128xf32>,
    %c32_i32 = arith.constant 32 : i32
    %385 = arith.addi %0, %c32_i32 : i32
    %386 = arith.index_cast %385 : i32 to index
    %387 = memref.load %arg1[%386] : memref<256xi32, #tpu.memory_space<smem>>
    %c32_i32_192 = arith.constant 32 : i32
    %388 = arith.addi %0, %c32_i32_192 : i32
    %389 = arith.index_cast %388 : i32 to index
    %390 = memref.load %arg2[%389] : memref<256xi32, #tpu.memory_space<smem>>
    %391 = arith.index_cast %387 : i32 to index
    %c0_193 = arith.constant 0 : index
    %392 = vector.load %arg3[%391, %c0_193] : memref<64x128xf32, #tpu.memory_space<vmem>>, vector<1x128xf32>
    %c32 = arith.constant 32 : index
    %c0_194 = arith.constant 0 : index
    %393 = vector.load %arg6[%c32, %c0_194] : memref<128x128xf32, #tpu.memory_space<vmem>>, vector<1x128xf32>
    tpu.vector_store %arg6[%c32, %c0_194], %392 {strides = array<i32>} : memref<128x128xf32, #tpu.memory_space<vmem>>, vector<1x128xf32>,
    %394 = arith.index_cast %390 : i32 to index
    %c0_195 = arith.constant 0 : index
    %395 = vector.load %arg4[%394, %c0_195] : memref<96x128xf32, #tpu.memory_space<vmem>>, vector<1x128xf32>
    %c32_196 = arith.constant 32 : index
    %c0_197 = arith.constant 0 : index
    %396 = vector.load %arg7[%c32_196, %c0_197] : memref<128x128xf32, #tpu.memory_space<vmem>>, vector<1x128xf32>
    tpu.vector_store %arg7[%c32_196, %c0_197], %395 {strides = array<i32>} : memref<128x128xf32, #tpu.memory_space<vmem>>, vector<1x128xf32>,
    %c33_i32 = arith.constant 33 : i32
    %397 = arith.addi %0, %c33_i32 : i32
    %398 = arith.index_cast %397 : i32 to index
    %399 = memref.load %arg1[%398] : memref<256xi32, #tpu.memory_space<smem>>
    %c33_i32_198 = arith.constant 33 : i32
    %400 = arith.addi %0, %c33_i32_198 : i32
    %401 = arith.index_cast %400 : i32 to index
    %402 = memref.load %arg2[%401] : memref<256xi32, #tpu.memory_space<smem>>
    %403 = arith.index_cast %399 : i32 to index
    %c0_199 = arith.constant 0 : index
    %404 = vector.load %arg3[%403, %c0_199] : memref<64x128xf32, #tpu.memory_space<vmem>>, vector<1x128xf32>
    %c33 = arith.constant 33 : index
    %c0_200 = arith.constant 0 : index
    %405 = vector.load %arg6[%c33, %c0_200] : memref<128x128xf32, #tpu.memory_space<vmem>>, vector<1x128xf32>
    tpu.vector_store %arg6[%c33, %c0_200], %404 {strides = array<i32>} : memref<128x128xf32, #tpu.memory_space<vmem>>, vector<1x128xf32>,
    %406 = arith.index_cast %402 : i32 to index
    %c0_201 = arith.constant 0 : index
    %407 = vector.load %arg4[%406, %c0_201] : memref<96x128xf32, #tpu.memory_space<vmem>>, vector<1x128xf32>
    %c33_202 = arith.constant 33 : index
    %c0_203 = arith.constant 0 : index
    %408 = vector.load %arg7[%c33_202, %c0_203] : memref<128x128xf32, #tpu.memory_space<vmem>>, vector<1x128xf32>
    tpu.vector_store %arg7[%c33_202, %c0_203], %407 {strides = array<i32>} : memref<128x128xf32, #tpu.memory_space<vmem>>, vector<1x128xf32>,
    %c34_i32 = arith.constant 34 : i32
    %409 = arith.addi %0, %c34_i32 : i32
    %410 = arith.index_cast %409 : i32 to index
    %411 = memref.load %arg1[%410] : memref<256xi32, #tpu.memory_space<smem>>
    %c34_i32_204 = arith.constant 34 : i32
    %412 = arith.addi %0, %c34_i32_204 : i32
    %413 = arith.index_cast %412 : i32 to index
    %414 = memref.load %arg2[%413] : memref<256xi32, #tpu.memory_space<smem>>
    %415 = arith.index_cast %411 : i32 to index
    %c0_205 = arith.constant 0 : index
    %416 = vector.load %arg3[%415, %c0_205] : memref<64x128xf32, #tpu.memory_space<vmem>>, vector<1x128xf32>
    %c34 = arith.constant 34 : index
    %c0_206 = arith.constant 0 : index
    %417 = vector.load %arg6[%c34, %c0_206] : memref<128x128xf32, #tpu.memory_space<vmem>>, vector<1x128xf32>
    tpu.vector_store %arg6[%c34, %c0_206], %416 {strides = array<i32>} : memref<128x128xf32, #tpu.memory_space<vmem>>, vector<1x128xf32>,
    %418 = arith.index_cast %414 : i32 to index
    %c0_207 = arith.constant 0 : index
    %419 = vector.load %arg4[%418, %c0_207] : memref<96x128xf32, #tpu.memory_space<vmem>>, vector<1x128xf32>
    %c34_208 = arith.constant 34 : index
    %c0_209 = arith.constant 0 : index
    %420 = vector.load %arg7[%c34_208, %c0_209] : memref<128x128xf32, #tpu.memory_space<vmem>>, vector<1x128xf32>
    tpu.vector_store %arg7[%c34_208, %c0_209], %419 {strides = array<i32>} : memref<128x128xf32, #tpu.memory_space<vmem>>, vector<1x128xf32>,
    %c35_i32 = arith.constant 35 : i32
    %421 = arith.addi %0, %c35_i32 : i32
    %422 = arith.index_cast %421 : i32 to index
    %423 = memref.load %arg1[%422] : memref<256xi32, #tpu.memory_space<smem>>
    %c35_i32_210 = arith.constant 35 : i32
    %424 = arith.addi %0, %c35_i32_210 : i32
    %425 = arith.index_cast %424 : i32 to index
    %426 = memref.load %arg2[%425] : memref<256xi32, #tpu.memory_space<smem>>
    %427 = arith.index_cast %423 : i32 to index
    %c0_211 = arith.constant 0 : index
    %428 = vector.load %arg3[%427, %c0_211] : memref<64x128xf32, #tpu.memory_space<vmem>>, vector<1x128xf32>
    %c35 = arith.constant 35 : index
    %c0_212 = arith.constant 0 : index
    %429 = vector.load %arg6[%c35, %c0_212] : memref<128x128xf32, #tpu.memory_space<vmem>>, vector<1x128xf32>
    tpu.vector_store %arg6[%c35, %c0_212], %428 {strides = array<i32>} : memref<128x128xf32, #tpu.memory_space<vmem>>, vector<1x128xf32>,
    %430 = arith.index_cast %426 : i32 to index
    %c0_213 = arith.constant 0 : index
    %431 = vector.load %arg4[%430, %c0_213] : memref<96x128xf32, #tpu.memory_space<vmem>>, vector<1x128xf32>
    %c35_214 = arith.constant 35 : index
    %c0_215 = arith.constant 0 : index
    %432 = vector.load %arg7[%c35_214, %c0_215] : memref<128x128xf32, #tpu.memory_space<vmem>>, vector<1x128xf32>
    tpu.vector_store %arg7[%c35_214, %c0_215], %431 {strides = array<i32>} : memref<128x128xf32, #tpu.memory_space<vmem>>, vector<1x128xf32>,
    %c36_i32 = arith.constant 36 : i32
    %433 = arith.addi %0, %c36_i32 : i32
    %434 = arith.index_cast %433 : i32 to index
    %435 = memref.load %arg1[%434] : memref<256xi32, #tpu.memory_space<smem>>
    %c36_i32_216 = arith.constant 36 : i32
    %436 = arith.addi %0, %c36_i32_216 : i32
    %437 = arith.index_cast %436 : i32 to index
    %438 = memref.load %arg2[%437] : memref<256xi32, #tpu.memory_space<smem>>
    %439 = arith.index_cast %435 : i32 to index
    %c0_217 = arith.constant 0 : index
    %440 = vector.load %arg3[%439, %c0_217] : memref<64x128xf32, #tpu.memory_space<vmem>>, vector<1x128xf32>
    %c36 = arith.constant 36 : index
    %c0_218 = arith.constant 0 : index
    %441 = vector.load %arg6[%c36, %c0_218] : memref<128x128xf32, #tpu.memory_space<vmem>>, vector<1x128xf32>
    tpu.vector_store %arg6[%c36, %c0_218], %440 {strides = array<i32>} : memref<128x128xf32, #tpu.memory_space<vmem>>, vector<1x128xf32>,
    %442 = arith.index_cast %438 : i32 to index
    %c0_219 = arith.constant 0 : index
    %443 = vector.load %arg4[%442, %c0_219] : memref<96x128xf32, #tpu.memory_space<vmem>>, vector<1x128xf32>
    %c36_220 = arith.constant 36 : index
    %c0_221 = arith.constant 0 : index
    %444 = vector.load %arg7[%c36_220, %c0_221] : memref<128x128xf32, #tpu.memory_space<vmem>>, vector<1x128xf32>
    tpu.vector_store %arg7[%c36_220, %c0_221], %443 {strides = array<i32>} : memref<128x128xf32, #tpu.memory_space<vmem>>, vector<1x128xf32>,
    %c37_i32 = arith.constant 37 : i32
    %445 = arith.addi %0, %c37_i32 : i32
    %446 = arith.index_cast %445 : i32 to index
    %447 = memref.load %arg1[%446] : memref<256xi32, #tpu.memory_space<smem>>
    %c37_i32_222 = arith.constant 37 : i32
    %448 = arith.addi %0, %c37_i32_222 : i32
    %449 = arith.index_cast %448 : i32 to index
    %450 = memref.load %arg2[%449] : memref<256xi32, #tpu.memory_space<smem>>
    %451 = arith.index_cast %447 : i32 to index
    %c0_223 = arith.constant 0 : index
    %452 = vector.load %arg3[%451, %c0_223] : memref<64x128xf32, #tpu.memory_space<vmem>>, vector<1x128xf32>
    %c37 = arith.constant 37 : index
    %c0_224 = arith.constant 0 : index
    %453 = vector.load %arg6[%c37, %c0_224] : memref<128x128xf32, #tpu.memory_space<vmem>>, vector<1x128xf32>
    tpu.vector_store %arg6[%c37, %c0_224], %452 {strides = array<i32>} : memref<128x128xf32, #tpu.memory_space<vmem>>, vector<1x128xf32>,
    %454 = arith.index_cast %450 : i32 to index
    %c0_225 = arith.constant 0 : index
    %455 = vector.load %arg4[%454, %c0_225] : memref<96x128xf32, #tpu.memory_space<vmem>>, vector<1x128xf32>
    %c37_226 = arith.constant 37 : index
    %c0_227 = arith.constant 0 : index
    %456 = vector.load %arg7[%c37_226, %c0_227] : memref<128x128xf32, #tpu.memory_space<vmem>>, vector<1x128xf32>
    tpu.vector_store %arg7[%c37_226, %c0_227], %455 {strides = array<i32>} : memref<128x128xf32, #tpu.memory_space<vmem>>, vector<1x128xf32>,
    %c38_i32 = arith.constant 38 : i32
    %457 = arith.addi %0, %c38_i32 : i32
    %458 = arith.index_cast %457 : i32 to index
    %459 = memref.load %arg1[%458] : memref<256xi32, #tpu.memory_space<smem>>
    %c38_i32_228 = arith.constant 38 : i32
    %460 = arith.addi %0, %c38_i32_228 : i32
    %461 = arith.index_cast %460 : i32 to index
    %462 = memref.load %arg2[%461] : memref<256xi32, #tpu.memory_space<smem>>
    %463 = arith.index_cast %459 : i32 to index
    %c0_229 = arith.constant 0 : index
    %464 = vector.load %arg3[%463, %c0_229] : memref<64x128xf32, #tpu.memory_space<vmem>>, vector<1x128xf32>
    %c38 = arith.constant 38 : index
    %c0_230 = arith.constant 0 : index
    %465 = vector.load %arg6[%c38, %c0_230] : memref<128x128xf32, #tpu.memory_space<vmem>>, vector<1x128xf32>
    tpu.vector_store %arg6[%c38, %c0_230], %464 {strides = array<i32>} : memref<128x128xf32, #tpu.memory_space<vmem>>, vector<1x128xf32>,
    %466 = arith.index_cast %462 : i32 to index
    %c0_231 = arith.constant 0 : index
    %467 = vector.load %arg4[%466, %c0_231] : memref<96x128xf32, #tpu.memory_space<vmem>>, vector<1x128xf32>
    %c38_232 = arith.constant 38 : index
    %c0_233 = arith.constant 0 : index
    %468 = vector.load %arg7[%c38_232, %c0_233] : memref<128x128xf32, #tpu.memory_space<vmem>>, vector<1x128xf32>
    tpu.vector_store %arg7[%c38_232, %c0_233], %467 {strides = array<i32>} : memref<128x128xf32, #tpu.memory_space<vmem>>, vector<1x128xf32>,
    %c39_i32 = arith.constant 39 : i32
    %469 = arith.addi %0, %c39_i32 : i32
    %470 = arith.index_cast %469 : i32 to index
    %471 = memref.load %arg1[%470] : memref<256xi32, #tpu.memory_space<smem>>
    %c39_i32_234 = arith.constant 39 : i32
    %472 = arith.addi %0, %c39_i32_234 : i32
    %473 = arith.index_cast %472 : i32 to index
    %474 = memref.load %arg2[%473] : memref<256xi32, #tpu.memory_space<smem>>
    %475 = arith.index_cast %471 : i32 to index
    %c0_235 = arith.constant 0 : index
    %476 = vector.load %arg3[%475, %c0_235] : memref<64x128xf32, #tpu.memory_space<vmem>>, vector<1x128xf32>
    %c39 = arith.constant 39 : index
    %c0_236 = arith.constant 0 : index
    %477 = vector.load %arg6[%c39, %c0_236] : memref<128x128xf32, #tpu.memory_space<vmem>>, vector<1x128xf32>
    tpu.vector_store %arg6[%c39, %c0_236], %476 {strides = array<i32>} : memref<128x128xf32, #tpu.memory_space<vmem>>, vector<1x128xf32>,
    %478 = arith.index_cast %474 : i32 to index
    %c0_237 = arith.constant 0 : index
    %479 = vector.load %arg4[%478, %c0_237] : memref<96x128xf32, #tpu.memory_space<vmem>>, vector<1x128xf32>
    %c39_238 = arith.constant 39 : index
    %c0_239 = arith.constant 0 : index
    %480 = vector.load %arg7[%c39_238, %c0_239] : memref<128x128xf32, #tpu.memory_space<vmem>>, vector<1x128xf32>
    tpu.vector_store %arg7[%c39_238, %c0_239], %479 {strides = array<i32>} : memref<128x128xf32, #tpu.memory_space<vmem>>, vector<1x128xf32>,
    %c40_i32 = arith.constant 40 : i32
    %481 = arith.addi %0, %c40_i32 : i32
    %482 = arith.index_cast %481 : i32 to index
    %483 = memref.load %arg1[%482] : memref<256xi32, #tpu.memory_space<smem>>
    %c40_i32_240 = arith.constant 40 : i32
    %484 = arith.addi %0, %c40_i32_240 : i32
    %485 = arith.index_cast %484 : i32 to index
    %486 = memref.load %arg2[%485] : memref<256xi32, #tpu.memory_space<smem>>
    %487 = arith.index_cast %483 : i32 to index
    %c0_241 = arith.constant 0 : index
    %488 = vector.load %arg3[%487, %c0_241] : memref<64x128xf32, #tpu.memory_space<vmem>>, vector<1x128xf32>
    %c40 = arith.constant 40 : index
    %c0_242 = arith.constant 0 : index
    %489 = vector.load %arg6[%c40, %c0_242] : memref<128x128xf32, #tpu.memory_space<vmem>>, vector<1x128xf32>
    tpu.vector_store %arg6[%c40, %c0_242], %488 {strides = array<i32>} : memref<128x128xf32, #tpu.memory_space<vmem>>, vector<1x128xf32>,
    %490 = arith.index_cast %486 : i32 to index
    %c0_243 = arith.constant 0 : index
    %491 = vector.load %arg4[%490, %c0_243] : memref<96x128xf32, #tpu.memory_space<vmem>>, vector<1x128xf32>
    %c40_244 = arith.constant 40 : index
    %c0_245 = arith.constant 0 : index
    %492 = vector.load %arg7[%c40_244, %c0_245] : memref<128x128xf32, #tpu.memory_space<vmem>>, vector<1x128xf32>
    tpu.vector_store %arg7[%c40_244, %c0_245], %491 {strides = array<i32>} : memref<128x128xf32, #tpu.memory_space<vmem>>, vector<1x128xf32>,
    %c41_i32 = arith.constant 41 : i32
    %493 = arith.addi %0, %c41_i32 : i32
    %494 = arith.index_cast %493 : i32 to index
    %495 = memref.load %arg1[%494] : memref<256xi32, #tpu.memory_space<smem>>
    %c41_i32_246 = arith.constant 41 : i32
    %496 = arith.addi %0, %c41_i32_246 : i32
    %497 = arith.index_cast %496 : i32 to index
    %498 = memref.load %arg2[%497] : memref<256xi32, #tpu.memory_space<smem>>
    %499 = arith.index_cast %495 : i32 to index
    %c0_247 = arith.constant 0 : index
    %500 = vector.load %arg3[%499, %c0_247] : memref<64x128xf32, #tpu.memory_space<vmem>>, vector<1x128xf32>
    %c41 = arith.constant 41 : index
    %c0_248 = arith.constant 0 : index
    %501 = vector.load %arg6[%c41, %c0_248] : memref<128x128xf32, #tpu.memory_space<vmem>>, vector<1x128xf32>
    tpu.vector_store %arg6[%c41, %c0_248], %500 {strides = array<i32>} : memref<128x128xf32, #tpu.memory_space<vmem>>, vector<1x128xf32>,
    %502 = arith.index_cast %498 : i32 to index
    %c0_249 = arith.constant 0 : index
    %503 = vector.load %arg4[%502, %c0_249] : memref<96x128xf32, #tpu.memory_space<vmem>>, vector<1x128xf32>
    %c41_250 = arith.constant 41 : index
    %c0_251 = arith.constant 0 : index
    %504 = vector.load %arg7[%c41_250, %c0_251] : memref<128x128xf32, #tpu.memory_space<vmem>>, vector<1x128xf32>
    tpu.vector_store %arg7[%c41_250, %c0_251], %503 {strides = array<i32>} : memref<128x128xf32, #tpu.memory_space<vmem>>, vector<1x128xf32>,
    %c42_i32 = arith.constant 42 : i32
    %505 = arith.addi %0, %c42_i32 : i32
    %506 = arith.index_cast %505 : i32 to index
    %507 = memref.load %arg1[%506] : memref<256xi32, #tpu.memory_space<smem>>
    %c42_i32_252 = arith.constant 42 : i32
    %508 = arith.addi %0, %c42_i32_252 : i32
    %509 = arith.index_cast %508 : i32 to index
    %510 = memref.load %arg2[%509] : memref<256xi32, #tpu.memory_space<smem>>
    %511 = arith.index_cast %507 : i32 to index
    %c0_253 = arith.constant 0 : index
    %512 = vector.load %arg3[%511, %c0_253] : memref<64x128xf32, #tpu.memory_space<vmem>>, vector<1x128xf32>
    %c42 = arith.constant 42 : index
    %c0_254 = arith.constant 0 : index
    %513 = vector.load %arg6[%c42, %c0_254] : memref<128x128xf32, #tpu.memory_space<vmem>>, vector<1x128xf32>
    tpu.vector_store %arg6[%c42, %c0_254], %512 {strides = array<i32>} : memref<128x128xf32, #tpu.memory_space<vmem>>, vector<1x128xf32>,
    %514 = arith.index_cast %510 : i32 to index
    %c0_255 = arith.constant 0 : index
    %515 = vector.load %arg4[%514, %c0_255] : memref<96x128xf32, #tpu.memory_space<vmem>>, vector<1x128xf32>
    %c42_256 = arith.constant 42 : index
    %c0_257 = arith.constant 0 : index
    %516 = vector.load %arg7[%c42_256, %c0_257] : memref<128x128xf32, #tpu.memory_space<vmem>>, vector<1x128xf32>
    tpu.vector_store %arg7[%c42_256, %c0_257], %515 {strides = array<i32>} : memref<128x128xf32, #tpu.memory_space<vmem>>, vector<1x128xf32>,
    %c43_i32 = arith.constant 43 : i32
    %517 = arith.addi %0, %c43_i32 : i32
    %518 = arith.index_cast %517 : i32 to index
    %519 = memref.load %arg1[%518] : memref<256xi32, #tpu.memory_space<smem>>
    %c43_i32_258 = arith.constant 43 : i32
    %520 = arith.addi %0, %c43_i32_258 : i32
    %521 = arith.index_cast %520 : i32 to index
    %522 = memref.load %arg2[%521] : memref<256xi32, #tpu.memory_space<smem>>
    %523 = arith.index_cast %519 : i32 to index
    %c0_259 = arith.constant 0 : index
    %524 = vector.load %arg3[%523, %c0_259] : memref<64x128xf32, #tpu.memory_space<vmem>>, vector<1x128xf32>
    %c43 = arith.constant 43 : index
    %c0_260 = arith.constant 0 : index
    %525 = vector.load %arg6[%c43, %c0_260] : memref<128x128xf32, #tpu.memory_space<vmem>>, vector<1x128xf32>
    tpu.vector_store %arg6[%c43, %c0_260], %524 {strides = array<i32>} : memref<128x128xf32, #tpu.memory_space<vmem>>, vector<1x128xf32>,
    %526 = arith.index_cast %522 : i32 to index
    %c0_261 = arith.constant 0 : index
    %527 = vector.load %arg4[%526, %c0_261] : memref<96x128xf32, #tpu.memory_space<vmem>>, vector<1x128xf32>
    %c43_262 = arith.constant 43 : index
    %c0_263 = arith.constant 0 : index
    %528 = vector.load %arg7[%c43_262, %c0_263] : memref<128x128xf32, #tpu.memory_space<vmem>>, vector<1x128xf32>
    tpu.vector_store %arg7[%c43_262, %c0_263], %527 {strides = array<i32>} : memref<128x128xf32, #tpu.memory_space<vmem>>, vector<1x128xf32>,
    %c44_i32 = arith.constant 44 : i32
    %529 = arith.addi %0, %c44_i32 : i32
    %530 = arith.index_cast %529 : i32 to index
    %531 = memref.load %arg1[%530] : memref<256xi32, #tpu.memory_space<smem>>
    %c44_i32_264 = arith.constant 44 : i32
    %532 = arith.addi %0, %c44_i32_264 : i32
    %533 = arith.index_cast %532 : i32 to index
    %534 = memref.load %arg2[%533] : memref<256xi32, #tpu.memory_space<smem>>
    %535 = arith.index_cast %531 : i32 to index
    %c0_265 = arith.constant 0 : index
    %536 = vector.load %arg3[%535, %c0_265] : memref<64x128xf32, #tpu.memory_space<vmem>>, vector<1x128xf32>
    %c44 = arith.constant 44 : index
    %c0_266 = arith.constant 0 : index
    %537 = vector.load %arg6[%c44, %c0_266] : memref<128x128xf32, #tpu.memory_space<vmem>>, vector<1x128xf32>
    tpu.vector_store %arg6[%c44, %c0_266], %536 {strides = array<i32>} : memref<128x128xf32, #tpu.memory_space<vmem>>, vector<1x128xf32>,
    %538 = arith.index_cast %534 : i32 to index
    %c0_267 = arith.constant 0 : index
    %539 = vector.load %arg4[%538, %c0_267] : memref<96x128xf32, #tpu.memory_space<vmem>>, vector<1x128xf32>
    %c44_268 = arith.constant 44 : index
    %c0_269 = arith.constant 0 : index
    %540 = vector.load %arg7[%c44_268, %c0_269] : memref<128x128xf32, #tpu.memory_space<vmem>>, vector<1x128xf32>
    tpu.vector_store %arg7[%c44_268, %c0_269], %539 {strides = array<i32>} : memref<128x128xf32, #tpu.memory_space<vmem>>, vector<1x128xf32>,
    %c45_i32 = arith.constant 45 : i32
    %541 = arith.addi %0, %c45_i32 : i32
    %542 = arith.index_cast %541 : i32 to index
    %543 = memref.load %arg1[%542] : memref<256xi32, #tpu.memory_space<smem>>
    %c45_i32_270 = arith.constant 45 : i32
    %544 = arith.addi %0, %c45_i32_270 : i32
    %545 = arith.index_cast %544 : i32 to index
    %546 = memref.load %arg2[%545] : memref<256xi32, #tpu.memory_space<smem>>
    %547 = arith.index_cast %543 : i32 to index
    %c0_271 = arith.constant 0 : index
    %548 = vector.load %arg3[%547, %c0_271] : memref<64x128xf32, #tpu.memory_space<vmem>>, vector<1x128xf32>
    %c45 = arith.constant 45 : index
    %c0_272 = arith.constant 0 : index
    %549 = vector.load %arg6[%c45, %c0_272] : memref<128x128xf32, #tpu.memory_space<vmem>>, vector<1x128xf32>
    tpu.vector_store %arg6[%c45, %c0_272], %548 {strides = array<i32>} : memref<128x128xf32, #tpu.memory_space<vmem>>, vector<1x128xf32>,
    %550 = arith.index_cast %546 : i32 to index
    %c0_273 = arith.constant 0 : index
    %551 = vector.load %arg4[%550, %c0_273] : memref<96x128xf32, #tpu.memory_space<vmem>>, vector<1x128xf32>
    %c45_274 = arith.constant 45 : index
    %c0_275 = arith.constant 0 : index
    %552 = vector.load %arg7[%c45_274, %c0_275] : memref<128x128xf32, #tpu.memory_space<vmem>>, vector<1x128xf32>
    tpu.vector_store %arg7[%c45_274, %c0_275], %551 {strides = array<i32>} : memref<128x128xf32, #tpu.memory_space<vmem>>, vector<1x128xf32>,
    %c46_i32 = arith.constant 46 : i32
    %553 = arith.addi %0, %c46_i32 : i32
    %554 = arith.index_cast %553 : i32 to index
    %555 = memref.load %arg1[%554] : memref<256xi32, #tpu.memory_space<smem>>
    %c46_i32_276 = arith.constant 46 : i32
    %556 = arith.addi %0, %c46_i32_276 : i32
    %557 = arith.index_cast %556 : i32 to index
    %558 = memref.load %arg2[%557] : memref<256xi32, #tpu.memory_space<smem>>
    %559 = arith.index_cast %555 : i32 to index
    %c0_277 = arith.constant 0 : index
    %560 = vector.load %arg3[%559, %c0_277] : memref<64x128xf32, #tpu.memory_space<vmem>>, vector<1x128xf32>
    %c46 = arith.constant 46 : index
    %c0_278 = arith.constant 0 : index
    %561 = vector.load %arg6[%c46, %c0_278] : memref<128x128xf32, #tpu.memory_space<vmem>>, vector<1x128xf32>
    tpu.vector_store %arg6[%c46, %c0_278], %560 {strides = array<i32>} : memref<128x128xf32, #tpu.memory_space<vmem>>, vector<1x128xf32>,
    %562 = arith.index_cast %558 : i32 to index
    %c0_279 = arith.constant 0 : index
    %563 = vector.load %arg4[%562, %c0_279] : memref<96x128xf32, #tpu.memory_space<vmem>>, vector<1x128xf32>
    %c46_280 = arith.constant 46 : index
    %c0_281 = arith.constant 0 : index
    %564 = vector.load %arg7[%c46_280, %c0_281] : memref<128x128xf32, #tpu.memory_space<vmem>>, vector<1x128xf32>
    tpu.vector_store %arg7[%c46_280, %c0_281], %563 {strides = array<i32>} : memref<128x128xf32, #tpu.memory_space<vmem>>, vector<1x128xf32>,
    %c47_i32 = arith.constant 47 : i32
    %565 = arith.addi %0, %c47_i32 : i32
    %566 = arith.index_cast %565 : i32 to index
    %567 = memref.load %arg1[%566] : memref<256xi32, #tpu.memory_space<smem>>
    %c47_i32_282 = arith.constant 47 : i32
    %568 = arith.addi %0, %c47_i32_282 : i32
    %569 = arith.index_cast %568 : i32 to index
    %570 = memref.load %arg2[%569] : memref<256xi32, #tpu.memory_space<smem>>
    %571 = arith.index_cast %567 : i32 to index
    %c0_283 = arith.constant 0 : index
    %572 = vector.load %arg3[%571, %c0_283] : memref<64x128xf32, #tpu.memory_space<vmem>>, vector<1x128xf32>
    %c47 = arith.constant 47 : index
    %c0_284 = arith.constant 0 : index
    %573 = vector.load %arg6[%c47, %c0_284] : memref<128x128xf32, #tpu.memory_space<vmem>>, vector<1x128xf32>
    tpu.vector_store %arg6[%c47, %c0_284], %572 {strides = array<i32>} : memref<128x128xf32, #tpu.memory_space<vmem>>, vector<1x128xf32>,
    %574 = arith.index_cast %570 : i32 to index
    %c0_285 = arith.constant 0 : index
    %575 = vector.load %arg4[%574, %c0_285] : memref<96x128xf32, #tpu.memory_space<vmem>>, vector<1x128xf32>
    %c47_286 = arith.constant 47 : index
    %c0_287 = arith.constant 0 : index
    %576 = vector.load %arg7[%c47_286, %c0_287] : memref<128x128xf32, #tpu.memory_space<vmem>>, vector<1x128xf32>
    tpu.vector_store %arg7[%c47_286, %c0_287], %575 {strides = array<i32>} : memref<128x128xf32, #tpu.memory_space<vmem>>, vector<1x128xf32>,
    %c48_i32 = arith.constant 48 : i32
    %577 = arith.addi %0, %c48_i32 : i32
    %578 = arith.index_cast %577 : i32 to index
    %579 = memref.load %arg1[%578] : memref<256xi32, #tpu.memory_space<smem>>
    %c48_i32_288 = arith.constant 48 : i32
    %580 = arith.addi %0, %c48_i32_288 : i32
    %581 = arith.index_cast %580 : i32 to index
    %582 = memref.load %arg2[%581] : memref<256xi32, #tpu.memory_space<smem>>
    %583 = arith.index_cast %579 : i32 to index
    %c0_289 = arith.constant 0 : index
    %584 = vector.load %arg3[%583, %c0_289] : memref<64x128xf32, #tpu.memory_space<vmem>>, vector<1x128xf32>
    %c48 = arith.constant 48 : index
    %c0_290 = arith.constant 0 : index
    %585 = vector.load %arg6[%c48, %c0_290] : memref<128x128xf32, #tpu.memory_space<vmem>>, vector<1x128xf32>
    tpu.vector_store %arg6[%c48, %c0_290], %584 {strides = array<i32>} : memref<128x128xf32, #tpu.memory_space<vmem>>, vector<1x128xf32>,
    %586 = arith.index_cast %582 : i32 to index
    %c0_291 = arith.constant 0 : index
    %587 = vector.load %arg4[%586, %c0_291] : memref<96x128xf32, #tpu.memory_space<vmem>>, vector<1x128xf32>
    %c48_292 = arith.constant 48 : index
    %c0_293 = arith.constant 0 : index
    %588 = vector.load %arg7[%c48_292, %c0_293] : memref<128x128xf32, #tpu.memory_space<vmem>>, vector<1x128xf32>
    tpu.vector_store %arg7[%c48_292, %c0_293], %587 {strides = array<i32>} : memref<128x128xf32, #tpu.memory_space<vmem>>, vector<1x128xf32>,
    %c49_i32 = arith.constant 49 : i32
    %589 = arith.addi %0, %c49_i32 : i32
    %590 = arith.index_cast %589 : i32 to index
    %591 = memref.load %arg1[%590] : memref<256xi32, #tpu.memory_space<smem>>
    %c49_i32_294 = arith.constant 49 : i32
    %592 = arith.addi %0, %c49_i32_294 : i32
    %593 = arith.index_cast %592 : i32 to index
    %594 = memref.load %arg2[%593] : memref<256xi32, #tpu.memory_space<smem>>
    %595 = arith.index_cast %591 : i32 to index
    %c0_295 = arith.constant 0 : index
    %596 = vector.load %arg3[%595, %c0_295] : memref<64x128xf32, #tpu.memory_space<vmem>>, vector<1x128xf32>
    %c49 = arith.constant 49 : index
    %c0_296 = arith.constant 0 : index
    %597 = vector.load %arg6[%c49, %c0_296] : memref<128x128xf32, #tpu.memory_space<vmem>>, vector<1x128xf32>
    tpu.vector_store %arg6[%c49, %c0_296], %596 {strides = array<i32>} : memref<128x128xf32, #tpu.memory_space<vmem>>, vector<1x128xf32>,
    %598 = arith.index_cast %594 : i32 to index
    %c0_297 = arith.constant 0 : index
    %599 = vector.load %arg4[%598, %c0_297] : memref<96x128xf32, #tpu.memory_space<vmem>>, vector<1x128xf32>
    %c49_298 = arith.constant 49 : index
    %c0_299 = arith.constant 0 : index
    %600 = vector.load %arg7[%c49_298, %c0_299] : memref<128x128xf32, #tpu.memory_space<vmem>>, vector<1x128xf32>
    tpu.vector_store %arg7[%c49_298, %c0_299], %599 {strides = array<i32>} : memref<128x128xf32, #tpu.memory_space<vmem>>, vector<1x128xf32>,
    %c50_i32 = arith.constant 50 : i32
    %601 = arith.addi %0, %c50_i32 : i32
    %602 = arith.index_cast %601 : i32 to index
    %603 = memref.load %arg1[%602] : memref<256xi32, #tpu.memory_space<smem>>
    %c50_i32_300 = arith.constant 50 : i32
    %604 = arith.addi %0, %c50_i32_300 : i32
    %605 = arith.index_cast %604 : i32 to index
    %606 = memref.load %arg2[%605] : memref<256xi32, #tpu.memory_space<smem>>
    %607 = arith.index_cast %603 : i32 to index
    %c0_301 = arith.constant 0 : index
    %608 = vector.load %arg3[%607, %c0_301] : memref<64x128xf32, #tpu.memory_space<vmem>>, vector<1x128xf32>
    %c50 = arith.constant 50 : index
    %c0_302 = arith.constant 0 : index
    %609 = vector.load %arg6[%c50, %c0_302] : memref<128x128xf32, #tpu.memory_space<vmem>>, vector<1x128xf32>
    tpu.vector_store %arg6[%c50, %c0_302], %608 {strides = array<i32>} : memref<128x128xf32, #tpu.memory_space<vmem>>, vector<1x128xf32>,
    %610 = arith.index_cast %606 : i32 to index
    %c0_303 = arith.constant 0 : index
    %611 = vector.load %arg4[%610, %c0_303] : memref<96x128xf32, #tpu.memory_space<vmem>>, vector<1x128xf32>
    %c50_304 = arith.constant 50 : index
    %c0_305 = arith.constant 0 : index
    %612 = vector.load %arg7[%c50_304, %c0_305] : memref<128x128xf32, #tpu.memory_space<vmem>>, vector<1x128xf32>
    tpu.vector_store %arg7[%c50_304, %c0_305], %611 {strides = array<i32>} : memref<128x128xf32, #tpu.memory_space<vmem>>, vector<1x128xf32>,
    %c51_i32 = arith.constant 51 : i32
    %613 = arith.addi %0, %c51_i32 : i32
    %614 = arith.index_cast %613 : i32 to index
    %615 = memref.load %arg1[%614] : memref<256xi32, #tpu.memory_space<smem>>
    %c51_i32_306 = arith.constant 51 : i32
    %616 = arith.addi %0, %c51_i32_306 : i32
    %617 = arith.index_cast %616 : i32 to index
    %618 = memref.load %arg2[%617] : memref<256xi32, #tpu.memory_space<smem>>
    %619 = arith.index_cast %615 : i32 to index
    %c0_307 = arith.constant 0 : index
    %620 = vector.load %arg3[%619, %c0_307] : memref<64x128xf32, #tpu.memory_space<vmem>>, vector<1x128xf32>
    %c51 = arith.constant 51 : index
    %c0_308 = arith.constant 0 : index
    %621 = vector.load %arg6[%c51, %c0_308] : memref<128x128xf32, #tpu.memory_space<vmem>>, vector<1x128xf32>
    tpu.vector_store %arg6[%c51, %c0_308], %620 {strides = array<i32>} : memref<128x128xf32, #tpu.memory_space<vmem>>, vector<1x128xf32>,
    %622 = arith.index_cast %618 : i32 to index
    %c0_309 = arith.constant 0 : index
    %623 = vector.load %arg4[%622, %c0_309] : memref<96x128xf32, #tpu.memory_space<vmem>>, vector<1x128xf32>
    %c51_310 = arith.constant 51 : index
    %c0_311 = arith.constant 0 : index
    %624 = vector.load %arg7[%c51_310, %c0_311] : memref<128x128xf32, #tpu.memory_space<vmem>>, vector<1x128xf32>
    tpu.vector_store %arg7[%c51_310, %c0_311], %623 {strides = array<i32>} : memref<128x128xf32, #tpu.memory_space<vmem>>, vector<1x128xf32>,
    %c52_i32 = arith.constant 52 : i32
    %625 = arith.addi %0, %c52_i32 : i32
    %626 = arith.index_cast %625 : i32 to index
    %627 = memref.load %arg1[%626] : memref<256xi32, #tpu.memory_space<smem>>
    %c52_i32_312 = arith.constant 52 : i32
    %628 = arith.addi %0, %c52_i32_312 : i32
    %629 = arith.index_cast %628 : i32 to index
    %630 = memref.load %arg2[%629] : memref<256xi32, #tpu.memory_space<smem>>
    %631 = arith.index_cast %627 : i32 to index
    %c0_313 = arith.constant 0 : index
    %632 = vector.load %arg3[%631, %c0_313] : memref<64x128xf32, #tpu.memory_space<vmem>>, vector<1x128xf32>
    %c52 = arith.constant 52 : index
    %c0_314 = arith.constant 0 : index
    %633 = vector.load %arg6[%c52, %c0_314] : memref<128x128xf32, #tpu.memory_space<vmem>>, vector<1x128xf32>
    tpu.vector_store %arg6[%c52, %c0_314], %632 {strides = array<i32>} : memref<128x128xf32, #tpu.memory_space<vmem>>, vector<1x128xf32>,
    %634 = arith.index_cast %630 : i32 to index
    %c0_315 = arith.constant 0 : index
    %635 = vector.load %arg4[%634, %c0_315] : memref<96x128xf32, #tpu.memory_space<vmem>>, vector<1x128xf32>
    %c52_316 = arith.constant 52 : index
    %c0_317 = arith.constant 0 : index
    %636 = vector.load %arg7[%c52_316, %c0_317] : memref<128x128xf32, #tpu.memory_space<vmem>>, vector<1x128xf32>
    tpu.vector_store %arg7[%c52_316, %c0_317], %635 {strides = array<i32>} : memref<128x128xf32, #tpu.memory_space<vmem>>, vector<1x128xf32>,
    %c53_i32 = arith.constant 53 : i32
    %637 = arith.addi %0, %c53_i32 : i32
    %638 = arith.index_cast %637 : i32 to index
    %639 = memref.load %arg1[%638] : memref<256xi32, #tpu.memory_space<smem>>
    %c53_i32_318 = arith.constant 53 : i32
    %640 = arith.addi %0, %c53_i32_318 : i32
    %641 = arith.index_cast %640 : i32 to index
    %642 = memref.load %arg2[%641] : memref<256xi32, #tpu.memory_space<smem>>
    %643 = arith.index_cast %639 : i32 to index
    %c0_319 = arith.constant 0 : index
    %644 = vector.load %arg3[%643, %c0_319] : memref<64x128xf32, #tpu.memory_space<vmem>>, vector<1x128xf32>
    %c53 = arith.constant 53 : index
    %c0_320 = arith.constant 0 : index
    %645 = vector.load %arg6[%c53, %c0_320] : memref<128x128xf32, #tpu.memory_space<vmem>>, vector<1x128xf32>
    tpu.vector_store %arg6[%c53, %c0_320], %644 {strides = array<i32>} : memref<128x128xf32, #tpu.memory_space<vmem>>, vector<1x128xf32>,
    %646 = arith.index_cast %642 : i32 to index
    %c0_321 = arith.constant 0 : index
    %647 = vector.load %arg4[%646, %c0_321] : memref<96x128xf32, #tpu.memory_space<vmem>>, vector<1x128xf32>
    %c53_322 = arith.constant 53 : index
    %c0_323 = arith.constant 0 : index
    %648 = vector.load %arg7[%c53_322, %c0_323] : memref<128x128xf32, #tpu.memory_space<vmem>>, vector<1x128xf32>
    tpu.vector_store %arg7[%c53_322, %c0_323], %647 {strides = array<i32>} : memref<128x128xf32, #tpu.memory_space<vmem>>, vector<1x128xf32>,
    %c54_i32 = arith.constant 54 : i32
    %649 = arith.addi %0, %c54_i32 : i32
    %650 = arith.index_cast %649 : i32 to index
    %651 = memref.load %arg1[%650] : memref<256xi32, #tpu.memory_space<smem>>
    %c54_i32_324 = arith.constant 54 : i32
    %652 = arith.addi %0, %c54_i32_324 : i32
    %653 = arith.index_cast %652 : i32 to index
    %654 = memref.load %arg2[%653] : memref<256xi32, #tpu.memory_space<smem>>
    %655 = arith.index_cast %651 : i32 to index
    %c0_325 = arith.constant 0 : index
    %656 = vector.load %arg3[%655, %c0_325] : memref<64x128xf32, #tpu.memory_space<vmem>>, vector<1x128xf32>
    %c54 = arith.constant 54 : index
    %c0_326 = arith.constant 0 : index
    %657 = vector.load %arg6[%c54, %c0_326] : memref<128x128xf32, #tpu.memory_space<vmem>>, vector<1x128xf32>
    tpu.vector_store %arg6[%c54, %c0_326], %656 {strides = array<i32>} : memref<128x128xf32, #tpu.memory_space<vmem>>, vector<1x128xf32>,
    %658 = arith.index_cast %654 : i32 to index
    %c0_327 = arith.constant 0 : index
    %659 = vector.load %arg4[%658, %c0_327] : memref<96x128xf32, #tpu.memory_space<vmem>>, vector<1x128xf32>
    %c54_328 = arith.constant 54 : index
    %c0_329 = arith.constant 0 : index
    %660 = vector.load %arg7[%c54_328, %c0_329] : memref<128x128xf32, #tpu.memory_space<vmem>>, vector<1x128xf32>
    tpu.vector_store %arg7[%c54_328, %c0_329], %659 {strides = array<i32>} : memref<128x128xf32, #tpu.memory_space<vmem>>, vector<1x128xf32>,
    %c55_i32 = arith.constant 55 : i32
    %661 = arith.addi %0, %c55_i32 : i32
    %662 = arith.index_cast %661 : i32 to index
    %663 = memref.load %arg1[%662] : memref<256xi32, #tpu.memory_space<smem>>
    %c55_i32_330 = arith.constant 55 : i32
    %664 = arith.addi %0, %c55_i32_330 : i32
    %665 = arith.index_cast %664 : i32 to index
    %666 = memref.load %arg2[%665] : memref<256xi32, #tpu.memory_space<smem>>
    %667 = arith.index_cast %663 : i32 to index
    %c0_331 = arith.constant 0 : index
    %668 = vector.load %arg3[%667, %c0_331] : memref<64x128xf32, #tpu.memory_space<vmem>>, vector<1x128xf32>
    %c55 = arith.constant 55 : index
    %c0_332 = arith.constant 0 : index
    %669 = vector.load %arg6[%c55, %c0_332] : memref<128x128xf32, #tpu.memory_space<vmem>>, vector<1x128xf32>
    tpu.vector_store %arg6[%c55, %c0_332], %668 {strides = array<i32>} : memref<128x128xf32, #tpu.memory_space<vmem>>, vector<1x128xf32>,
    %670 = arith.index_cast %666 : i32 to index
    %c0_333 = arith.constant 0 : index
    %671 = vector.load %arg4[%670, %c0_333] : memref<96x128xf32, #tpu.memory_space<vmem>>, vector<1x128xf32>
    %c55_334 = arith.constant 55 : index
    %c0_335 = arith.constant 0 : index
    %672 = vector.load %arg7[%c55_334, %c0_335] : memref<128x128xf32, #tpu.memory_space<vmem>>, vector<1x128xf32>
    tpu.vector_store %arg7[%c55_334, %c0_335], %671 {strides = array<i32>} : memref<128x128xf32, #tpu.memory_space<vmem>>, vector<1x128xf32>,
    %c56_i32 = arith.constant 56 : i32
    %673 = arith.addi %0, %c56_i32 : i32
    %674 = arith.index_cast %673 : i32 to index
    %675 = memref.load %arg1[%674] : memref<256xi32, #tpu.memory_space<smem>>
    %c56_i32_336 = arith.constant 56 : i32
    %676 = arith.addi %0, %c56_i32_336 : i32
    %677 = arith.index_cast %676 : i32 to index
    %678 = memref.load %arg2[%677] : memref<256xi32, #tpu.memory_space<smem>>
    %679 = arith.index_cast %675 : i32 to index
    %c0_337 = arith.constant 0 : index
    %680 = vector.load %arg3[%679, %c0_337] : memref<64x128xf32, #tpu.memory_space<vmem>>, vector<1x128xf32>
    %c56 = arith.constant 56 : index
    %c0_338 = arith.constant 0 : index
    %681 = vector.load %arg6[%c56, %c0_338] : memref<128x128xf32, #tpu.memory_space<vmem>>, vector<1x128xf32>
    tpu.vector_store %arg6[%c56, %c0_338], %680 {strides = array<i32>} : memref<128x128xf32, #tpu.memory_space<vmem>>, vector<1x128xf32>,
    %682 = arith.index_cast %678 : i32 to index
    %c0_339 = arith.constant 0 : index
    %683 = vector.load %arg4[%682, %c0_339] : memref<96x128xf32, #tpu.memory_space<vmem>>, vector<1x128xf32>
    %c56_340 = arith.constant 56 : index
    %c0_341 = arith.constant 0 : index
    %684 = vector.load %arg7[%c56_340, %c0_341] : memref<128x128xf32, #tpu.memory_space<vmem>>, vector<1x128xf32>
    tpu.vector_store %arg7[%c56_340, %c0_341], %683 {strides = array<i32>} : memref<128x128xf32, #tpu.memory_space<vmem>>, vector<1x128xf32>,
    %c57_i32 = arith.constant 57 : i32
    %685 = arith.addi %0, %c57_i32 : i32
    %686 = arith.index_cast %685 : i32 to index
    %687 = memref.load %arg1[%686] : memref<256xi32, #tpu.memory_space<smem>>
    %c57_i32_342 = arith.constant 57 : i32
    %688 = arith.addi %0, %c57_i32_342 : i32
    %689 = arith.index_cast %688 : i32 to index
    %690 = memref.load %arg2[%689] : memref<256xi32, #tpu.memory_space<smem>>
    %691 = arith.index_cast %687 : i32 to index
    %c0_343 = arith.constant 0 : index
    %692 = vector.load %arg3[%691, %c0_343] : memref<64x128xf32, #tpu.memory_space<vmem>>, vector<1x128xf32>
    %c57 = arith.constant 57 : index
    %c0_344 = arith.constant 0 : index
    %693 = vector.load %arg6[%c57, %c0_344] : memref<128x128xf32, #tpu.memory_space<vmem>>, vector<1x128xf32>
    tpu.vector_store %arg6[%c57, %c0_344], %692 {strides = array<i32>} : memref<128x128xf32, #tpu.memory_space<vmem>>, vector<1x128xf32>,
    %694 = arith.index_cast %690 : i32 to index
    %c0_345 = arith.constant 0 : index
    %695 = vector.load %arg4[%694, %c0_345] : memref<96x128xf32, #tpu.memory_space<vmem>>, vector<1x128xf32>
    %c57_346 = arith.constant 57 : index
    %c0_347 = arith.constant 0 : index
    %696 = vector.load %arg7[%c57_346, %c0_347] : memref<128x128xf32, #tpu.memory_space<vmem>>, vector<1x128xf32>
    tpu.vector_store %arg7[%c57_346, %c0_347], %695 {strides = array<i32>} : memref<128x128xf32, #tpu.memory_space<vmem>>, vector<1x128xf32>,
    %c58_i32 = arith.constant 58 : i32
    %697 = arith.addi %0, %c58_i32 : i32
    %698 = arith.index_cast %697 : i32 to index
    %699 = memref.load %arg1[%698] : memref<256xi32, #tpu.memory_space<smem>>
    %c58_i32_348 = arith.constant 58 : i32
    %700 = arith.addi %0, %c58_i32_348 : i32
    %701 = arith.index_cast %700 : i32 to index
    %702 = memref.load %arg2[%701] : memref<256xi32, #tpu.memory_space<smem>>
    %703 = arith.index_cast %699 : i32 to index
    %c0_349 = arith.constant 0 : index
    %704 = vector.load %arg3[%703, %c0_349] : memref<64x128xf32, #tpu.memory_space<vmem>>, vector<1x128xf32>
    %c58 = arith.constant 58 : index
    %c0_350 = arith.constant 0 : index
    %705 = vector.load %arg6[%c58, %c0_350] : memref<128x128xf32, #tpu.memory_space<vmem>>, vector<1x128xf32>
    tpu.vector_store %arg6[%c58, %c0_350], %704 {strides = array<i32>} : memref<128x128xf32, #tpu.memory_space<vmem>>, vector<1x128xf32>,
    %706 = arith.index_cast %702 : i32 to index
    %c0_351 = arith.constant 0 : index
    %707 = vector.load %arg4[%706, %c0_351] : memref<96x128xf32, #tpu.memory_space<vmem>>, vector<1x128xf32>
    %c58_352 = arith.constant 58 : index
    %c0_353 = arith.constant 0 : index
    %708 = vector.load %arg7[%c58_352, %c0_353] : memref<128x128xf32, #tpu.memory_space<vmem>>, vector<1x128xf32>
    tpu.vector_store %arg7[%c58_352, %c0_353], %707 {strides = array<i32>} : memref<128x128xf32, #tpu.memory_space<vmem>>, vector<1x128xf32>,
    %c59_i32 = arith.constant 59 : i32
    %709 = arith.addi %0, %c59_i32 : i32
    %710 = arith.index_cast %709 : i32 to index
    %711 = memref.load %arg1[%710] : memref<256xi32, #tpu.memory_space<smem>>
    %c59_i32_354 = arith.constant 59 : i32
    %712 = arith.addi %0, %c59_i32_354 : i32
    %713 = arith.index_cast %712 : i32 to index
    %714 = memref.load %arg2[%713] : memref<256xi32, #tpu.memory_space<smem>>
    %715 = arith.index_cast %711 : i32 to index
    %c0_355 = arith.constant 0 : index
    %716 = vector.load %arg3[%715, %c0_355] : memref<64x128xf32, #tpu.memory_space<vmem>>, vector<1x128xf32>
    %c59 = arith.constant 59 : index
    %c0_356 = arith.constant 0 : index
    %717 = vector.load %arg6[%c59, %c0_356] : memref<128x128xf32, #tpu.memory_space<vmem>>, vector<1x128xf32>
    tpu.vector_store %arg6[%c59, %c0_356], %716 {strides = array<i32>} : memref<128x128xf32, #tpu.memory_space<vmem>>, vector<1x128xf32>,
    %718 = arith.index_cast %714 : i32 to index
    %c0_357 = arith.constant 0 : index
    %719 = vector.load %arg4[%718, %c0_357] : memref<96x128xf32, #tpu.memory_space<vmem>>, vector<1x128xf32>
    %c59_358 = arith.constant 59 : index
    %c0_359 = arith.constant 0 : index
    %720 = vector.load %arg7[%c59_358, %c0_359] : memref<128x128xf32, #tpu.memory_space<vmem>>, vector<1x128xf32>
    tpu.vector_store %arg7[%c59_358, %c0_359], %719 {strides = array<i32>} : memref<128x128xf32, #tpu.memory_space<vmem>>, vector<1x128xf32>,
    %c60_i32 = arith.constant 60 : i32
    %721 = arith.addi %0, %c60_i32 : i32
    %722 = arith.index_cast %721 : i32 to index
    %723 = memref.load %arg1[%722] : memref<256xi32, #tpu.memory_space<smem>>
    %c60_i32_360 = arith.constant 60 : i32
    %724 = arith.addi %0, %c60_i32_360 : i32
    %725 = arith.index_cast %724 : i32 to index
    %726 = memref.load %arg2[%725] : memref<256xi32, #tpu.memory_space<smem>>
    %727 = arith.index_cast %723 : i32 to index
    %c0_361 = arith.constant 0 : index
    %728 = vector.load %arg3[%727, %c0_361] : memref<64x128xf32, #tpu.memory_space<vmem>>, vector<1x128xf32>
    %c60 = arith.constant 60 : index
    %c0_362 = arith.constant 0 : index
    %729 = vector.load %arg6[%c60, %c0_362] : memref<128x128xf32, #tpu.memory_space<vmem>>, vector<1x128xf32>
    tpu.vector_store %arg6[%c60, %c0_362], %728 {strides = array<i32>} : memref<128x128xf32, #tpu.memory_space<vmem>>, vector<1x128xf32>,
    %730 = arith.index_cast %726 : i32 to index
    %c0_363 = arith.constant 0 : index
    %731 = vector.load %arg4[%730, %c0_363] : memref<96x128xf32, #tpu.memory_space<vmem>>, vector<1x128xf32>
    %c60_364 = arith.constant 60 : index
    %c0_365 = arith.constant 0 : index
    %732 = vector.load %arg7[%c60_364, %c0_365] : memref<128x128xf32, #tpu.memory_space<vmem>>, vector<1x128xf32>
    tpu.vector_store %arg7[%c60_364, %c0_365], %731 {strides = array<i32>} : memref<128x128xf32, #tpu.memory_space<vmem>>, vector<1x128xf32>,
    %c61_i32 = arith.constant 61 : i32
    %733 = arith.addi %0, %c61_i32 : i32
    %734 = arith.index_cast %733 : i32 to index
    %735 = memref.load %arg1[%734] : memref<256xi32, #tpu.memory_space<smem>>
    %c61_i32_366 = arith.constant 61 : i32
    %736 = arith.addi %0, %c61_i32_366 : i32
    %737 = arith.index_cast %736 : i32 to index
    %738 = memref.load %arg2[%737] : memref<256xi32, #tpu.memory_space<smem>>
    %739 = arith.index_cast %735 : i32 to index
    %c0_367 = arith.constant 0 : index
    %740 = vector.load %arg3[%739, %c0_367] : memref<64x128xf32, #tpu.memory_space<vmem>>, vector<1x128xf32>
    %c61 = arith.constant 61 : index
    %c0_368 = arith.constant 0 : index
    %741 = vector.load %arg6[%c61, %c0_368] : memref<128x128xf32, #tpu.memory_space<vmem>>, vector<1x128xf32>
    tpu.vector_store %arg6[%c61, %c0_368], %740 {strides = array<i32>} : memref<128x128xf32, #tpu.memory_space<vmem>>, vector<1x128xf32>,
    %742 = arith.index_cast %738 : i32 to index
    %c0_369 = arith.constant 0 : index
    %743 = vector.load %arg4[%742, %c0_369] : memref<96x128xf32, #tpu.memory_space<vmem>>, vector<1x128xf32>
    %c61_370 = arith.constant 61 : index
    %c0_371 = arith.constant 0 : index
    %744 = vector.load %arg7[%c61_370, %c0_371] : memref<128x128xf32, #tpu.memory_space<vmem>>, vector<1x128xf32>
    tpu.vector_store %arg7[%c61_370, %c0_371], %743 {strides = array<i32>} : memref<128x128xf32, #tpu.memory_space<vmem>>, vector<1x128xf32>,
    %c62_i32 = arith.constant 62 : i32
    %745 = arith.addi %0, %c62_i32 : i32
    %746 = arith.index_cast %745 : i32 to index
    %747 = memref.load %arg1[%746] : memref<256xi32, #tpu.memory_space<smem>>
    %c62_i32_372 = arith.constant 62 : i32
    %748 = arith.addi %0, %c62_i32_372 : i32
    %749 = arith.index_cast %748 : i32 to index
    %750 = memref.load %arg2[%749] : memref<256xi32, #tpu.memory_space<smem>>
    %751 = arith.index_cast %747 : i32 to index
    %c0_373 = arith.constant 0 : index
    %752 = vector.load %arg3[%751, %c0_373] : memref<64x128xf32, #tpu.memory_space<vmem>>, vector<1x128xf32>
    %c62 = arith.constant 62 : index
    %c0_374 = arith.constant 0 : index
    %753 = vector.load %arg6[%c62, %c0_374] : memref<128x128xf32, #tpu.memory_space<vmem>>, vector<1x128xf32>
    tpu.vector_store %arg6[%c62, %c0_374], %752 {strides = array<i32>} : memref<128x128xf32, #tpu.memory_space<vmem>>, vector<1x128xf32>,
    %754 = arith.index_cast %750 : i32 to index
    %c0_375 = arith.constant 0 : index
    %755 = vector.load %arg4[%754, %c0_375] : memref<96x128xf32, #tpu.memory_space<vmem>>, vector<1x128xf32>
    %c62_376 = arith.constant 62 : index
    %c0_377 = arith.constant 0 : index
    %756 = vector.load %arg7[%c62_376, %c0_377] : memref<128x128xf32, #tpu.memory_space<vmem>>, vector<1x128xf32>
    tpu.vector_store %arg7[%c62_376, %c0_377], %755 {strides = array<i32>} : memref<128x128xf32, #tpu.memory_space<vmem>>, vector<1x128xf32>,
    %c63_i32 = arith.constant 63 : i32
    %757 = arith.addi %0, %c63_i32 : i32
    %758 = arith.index_cast %757 : i32 to index
    %759 = memref.load %arg1[%758] : memref<256xi32, #tpu.memory_space<smem>>
    %c63_i32_378 = arith.constant 63 : i32
    %760 = arith.addi %0, %c63_i32_378 : i32
    %761 = arith.index_cast %760 : i32 to index
    %762 = memref.load %arg2[%761] : memref<256xi32, #tpu.memory_space<smem>>
    %763 = arith.index_cast %759 : i32 to index
    %c0_379 = arith.constant 0 : index
    %764 = vector.load %arg3[%763, %c0_379] : memref<64x128xf32, #tpu.memory_space<vmem>>, vector<1x128xf32>
    %c63 = arith.constant 63 : index
    %c0_380 = arith.constant 0 : index
    %765 = vector.load %arg6[%c63, %c0_380] : memref<128x128xf32, #tpu.memory_space<vmem>>, vector<1x128xf32>
    tpu.vector_store %arg6[%c63, %c0_380], %764 {strides = array<i32>} : memref<128x128xf32, #tpu.memory_space<vmem>>, vector<1x128xf32>,
    %766 = arith.index_cast %762 : i32 to index
    %c0_381 = arith.constant 0 : index
    %767 = vector.load %arg4[%766, %c0_381] : memref<96x128xf32, #tpu.memory_space<vmem>>, vector<1x128xf32>
    %c63_382 = arith.constant 63 : index
    %c0_383 = arith.constant 0 : index
    %768 = vector.load %arg7[%c63_382, %c0_383] : memref<128x128xf32, #tpu.memory_space<vmem>>, vector<1x128xf32>
    tpu.vector_store %arg7[%c63_382, %c0_383], %767 {strides = array<i32>} : memref<128x128xf32, #tpu.memory_space<vmem>>, vector<1x128xf32>,
    %c64_i32 = arith.constant 64 : i32
    %769 = arith.addi %0, %c64_i32 : i32
    %770 = arith.index_cast %769 : i32 to index
    %771 = memref.load %arg1[%770] : memref<256xi32, #tpu.memory_space<smem>>
    %c64_i32_384 = arith.constant 64 : i32
    %772 = arith.addi %0, %c64_i32_384 : i32
    %773 = arith.index_cast %772 : i32 to index
    %774 = memref.load %arg2[%773] : memref<256xi32, #tpu.memory_space<smem>>
    %775 = arith.index_cast %771 : i32 to index
    %c0_385 = arith.constant 0 : index
    %776 = vector.load %arg3[%775, %c0_385] : memref<64x128xf32, #tpu.memory_space<vmem>>, vector<1x128xf32>
    %c64 = arith.constant 64 : index
    %c0_386 = arith.constant 0 : index
    %777 = vector.load %arg6[%c64, %c0_386] : memref<128x128xf32, #tpu.memory_space<vmem>>, vector<1x128xf32>
    tpu.vector_store %arg6[%c64, %c0_386], %776 {strides = array<i32>} : memref<128x128xf32, #tpu.memory_space<vmem>>, vector<1x128xf32>,
    %778 = arith.index_cast %774 : i32 to index
    %c0_387 = arith.constant 0 : index
    %779 = vector.load %arg4[%778, %c0_387] : memref<96x128xf32, #tpu.memory_space<vmem>>, vector<1x128xf32>
    %c64_388 = arith.constant 64 : index
    %c0_389 = arith.constant 0 : index
    %780 = vector.load %arg7[%c64_388, %c0_389] : memref<128x128xf32, #tpu.memory_space<vmem>>, vector<1x128xf32>
    tpu.vector_store %arg7[%c64_388, %c0_389], %779 {strides = array<i32>} : memref<128x128xf32, #tpu.memory_space<vmem>>, vector<1x128xf32>,
    %c65_i32 = arith.constant 65 : i32
    %781 = arith.addi %0, %c65_i32 : i32
    %782 = arith.index_cast %781 : i32 to index
    %783 = memref.load %arg1[%782] : memref<256xi32, #tpu.memory_space<smem>>
    %c65_i32_390 = arith.constant 65 : i32
    %784 = arith.addi %0, %c65_i32_390 : i32
    %785 = arith.index_cast %784 : i32 to index
    %786 = memref.load %arg2[%785] : memref<256xi32, #tpu.memory_space<smem>>
    %787 = arith.index_cast %783 : i32 to index
    %c0_391 = arith.constant 0 : index
    %788 = vector.load %arg3[%787, %c0_391] : memref<64x128xf32, #tpu.memory_space<vmem>>, vector<1x128xf32>
    %c65 = arith.constant 65 : index
    %c0_392 = arith.constant 0 : index
    %789 = vector.load %arg6[%c65, %c0_392] : memref<128x128xf32, #tpu.memory_space<vmem>>, vector<1x128xf32>
    tpu.vector_store %arg6[%c65, %c0_392], %788 {strides = array<i32>} : memref<128x128xf32, #tpu.memory_space<vmem>>, vector<1x128xf32>,
    %790 = arith.index_cast %786 : i32 to index
    %c0_393 = arith.constant 0 : index
    %791 = vector.load %arg4[%790, %c0_393] : memref<96x128xf32, #tpu.memory_space<vmem>>, vector<1x128xf32>
    %c65_394 = arith.constant 65 : index
    %c0_395 = arith.constant 0 : index
    %792 = vector.load %arg7[%c65_394, %c0_395] : memref<128x128xf32, #tpu.memory_space<vmem>>, vector<1x128xf32>
    tpu.vector_store %arg7[%c65_394, %c0_395], %791 {strides = array<i32>} : memref<128x128xf32, #tpu.memory_space<vmem>>, vector<1x128xf32>,
    %c66_i32 = arith.constant 66 : i32
    %793 = arith.addi %0, %c66_i32 : i32
    %794 = arith.index_cast %793 : i32 to index
    %795 = memref.load %arg1[%794] : memref<256xi32, #tpu.memory_space<smem>>
    %c66_i32_396 = arith.constant 66 : i32
    %796 = arith.addi %0, %c66_i32_396 : i32
    %797 = arith.index_cast %796 : i32 to index
    %798 = memref.load %arg2[%797] : memref<256xi32, #tpu.memory_space<smem>>
    %799 = arith.index_cast %795 : i32 to index
    %c0_397 = arith.constant 0 : index
    %800 = vector.load %arg3[%799, %c0_397] : memref<64x128xf32, #tpu.memory_space<vmem>>, vector<1x128xf32>
    %c66 = arith.constant 66 : index
    %c0_398 = arith.constant 0 : index
    %801 = vector.load %arg6[%c66, %c0_398] : memref<128x128xf32, #tpu.memory_space<vmem>>, vector<1x128xf32>
    tpu.vector_store %arg6[%c66, %c0_398], %800 {strides = array<i32>} : memref<128x128xf32, #tpu.memory_space<vmem>>, vector<1x128xf32>,
    %802 = arith.index_cast %798 : i32 to index
    %c0_399 = arith.constant 0 : index
    %803 = vector.load %arg4[%802, %c0_399] : memref<96x128xf32, #tpu.memory_space<vmem>>, vector<1x128xf32>
    %c66_400 = arith.constant 66 : index
    %c0_401 = arith.constant 0 : index
    %804 = vector.load %arg7[%c66_400, %c0_401] : memref<128x128xf32, #tpu.memory_space<vmem>>, vector<1x128xf32>
    tpu.vector_store %arg7[%c66_400, %c0_401], %803 {strides = array<i32>} : memref<128x128xf32, #tpu.memory_space<vmem>>, vector<1x128xf32>,
    %c67_i32 = arith.constant 67 : i32
    %805 = arith.addi %0, %c67_i32 : i32
    %806 = arith.index_cast %805 : i32 to index
    %807 = memref.load %arg1[%806] : memref<256xi32, #tpu.memory_space<smem>>
    %c67_i32_402 = arith.constant 67 : i32
    %808 = arith.addi %0, %c67_i32_402 : i32
    %809 = arith.index_cast %808 : i32 to index
    %810 = memref.load %arg2[%809] : memref<256xi32, #tpu.memory_space<smem>>
    %811 = arith.index_cast %807 : i32 to index
    %c0_403 = arith.constant 0 : index
    %812 = vector.load %arg3[%811, %c0_403] : memref<64x128xf32, #tpu.memory_space<vmem>>, vector<1x128xf32>
    %c67 = arith.constant 67 : index
    %c0_404 = arith.constant 0 : index
    %813 = vector.load %arg6[%c67, %c0_404] : memref<128x128xf32, #tpu.memory_space<vmem>>, vector<1x128xf32>
    tpu.vector_store %arg6[%c67, %c0_404], %812 {strides = array<i32>} : memref<128x128xf32, #tpu.memory_space<vmem>>, vector<1x128xf32>,
    %814 = arith.index_cast %810 : i32 to index
    %c0_405 = arith.constant 0 : index
    %815 = vector.load %arg4[%814, %c0_405] : memref<96x128xf32, #tpu.memory_space<vmem>>, vector<1x128xf32>
    %c67_406 = arith.constant 67 : index
    %c0_407 = arith.constant 0 : index
    %816 = vector.load %arg7[%c67_406, %c0_407] : memref<128x128xf32, #tpu.memory_space<vmem>>, vector<1x128xf32>
    tpu.vector_store %arg7[%c67_406, %c0_407], %815 {strides = array<i32>} : memref<128x128xf32, #tpu.memory_space<vmem>>, vector<1x128xf32>,
    %c68_i32 = arith.constant 68 : i32
    %817 = arith.addi %0, %c68_i32 : i32
    %818 = arith.index_cast %817 : i32 to index
    %819 = memref.load %arg1[%818] : memref<256xi32, #tpu.memory_space<smem>>
    %c68_i32_408 = arith.constant 68 : i32
    %820 = arith.addi %0, %c68_i32_408 : i32
    %821 = arith.index_cast %820 : i32 to index
    %822 = memref.load %arg2[%821] : memref<256xi32, #tpu.memory_space<smem>>
    %823 = arith.index_cast %819 : i32 to index
    %c0_409 = arith.constant 0 : index
    %824 = vector.load %arg3[%823, %c0_409] : memref<64x128xf32, #tpu.memory_space<vmem>>, vector<1x128xf32>
    %c68 = arith.constant 68 : index
    %c0_410 = arith.constant 0 : index
    %825 = vector.load %arg6[%c68, %c0_410] : memref<128x128xf32, #tpu.memory_space<vmem>>, vector<1x128xf32>
    tpu.vector_store %arg6[%c68, %c0_410], %824 {strides = array<i32>} : memref<128x128xf32, #tpu.memory_space<vmem>>, vector<1x128xf32>,
    %826 = arith.index_cast %822 : i32 to index
    %c0_411 = arith.constant 0 : index
    %827 = vector.load %arg4[%826, %c0_411] : memref<96x128xf32, #tpu.memory_space<vmem>>, vector<1x128xf32>
    %c68_412 = arith.constant 68 : index
    %c0_413 = arith.constant 0 : index
    %828 = vector.load %arg7[%c68_412, %c0_413] : memref<128x128xf32, #tpu.memory_space<vmem>>, vector<1x128xf32>
    tpu.vector_store %arg7[%c68_412, %c0_413], %827 {strides = array<i32>} : memref<128x128xf32, #tpu.memory_space<vmem>>, vector<1x128xf32>,
    %c69_i32 = arith.constant 69 : i32
    %829 = arith.addi %0, %c69_i32 : i32
    %830 = arith.index_cast %829 : i32 to index
    %831 = memref.load %arg1[%830] : memref<256xi32, #tpu.memory_space<smem>>
    %c69_i32_414 = arith.constant 69 : i32
    %832 = arith.addi %0, %c69_i32_414 : i32
    %833 = arith.index_cast %832 : i32 to index
    %834 = memref.load %arg2[%833] : memref<256xi32, #tpu.memory_space<smem>>
    %835 = arith.index_cast %831 : i32 to index
    %c0_415 = arith.constant 0 : index
    %836 = vector.load %arg3[%835, %c0_415] : memref<64x128xf32, #tpu.memory_space<vmem>>, vector<1x128xf32>
    %c69 = arith.constant 69 : index
    %c0_416 = arith.constant 0 : index
    %837 = vector.load %arg6[%c69, %c0_416] : memref<128x128xf32, #tpu.memory_space<vmem>>, vector<1x128xf32>
    tpu.vector_store %arg6[%c69, %c0_416], %836 {strides = array<i32>} : memref<128x128xf32, #tpu.memory_space<vmem>>, vector<1x128xf32>,
    %838 = arith.index_cast %834 : i32 to index
    %c0_417 = arith.constant 0 : index
    %839 = vector.load %arg4[%838, %c0_417] : memref<96x128xf32, #tpu.memory_space<vmem>>, vector<1x128xf32>
    %c69_418 = arith.constant 69 : index
    %c0_419 = arith.constant 0 : index
    %840 = vector.load %arg7[%c69_418, %c0_419] : memref<128x128xf32, #tpu.memory_space<vmem>>, vector<1x128xf32>
    tpu.vector_store %arg7[%c69_418, %c0_419], %839 {strides = array<i32>} : memref<128x128xf32, #tpu.memory_space<vmem>>, vector<1x128xf32>,
    %c70_i32 = arith.constant 70 : i32
    %841 = arith.addi %0, %c70_i32 : i32
    %842 = arith.index_cast %841 : i32 to index
    %843 = memref.load %arg1[%842] : memref<256xi32, #tpu.memory_space<smem>>
    %c70_i32_420 = arith.constant 70 : i32
    %844 = arith.addi %0, %c70_i32_420 : i32
    %845 = arith.index_cast %844 : i32 to index
    %846 = memref.load %arg2[%845] : memref<256xi32, #tpu.memory_space<smem>>
    %847 = arith.index_cast %843 : i32 to index
    %c0_421 = arith.constant 0 : index
    %848 = vector.load %arg3[%847, %c0_421] : memref<64x128xf32, #tpu.memory_space<vmem>>, vector<1x128xf32>
    %c70 = arith.constant 70 : index
    %c0_422 = arith.constant 0 : index
    %849 = vector.load %arg6[%c70, %c0_422] : memref<128x128xf32, #tpu.memory_space<vmem>>, vector<1x128xf32>
    tpu.vector_store %arg6[%c70, %c0_422], %848 {strides = array<i32>} : memref<128x128xf32, #tpu.memory_space<vmem>>, vector<1x128xf32>,
    %850 = arith.index_cast %846 : i32 to index
    %c0_423 = arith.constant 0 : index
    %851 = vector.load %arg4[%850, %c0_423] : memref<96x128xf32, #tpu.memory_space<vmem>>, vector<1x128xf32>
    %c70_424 = arith.constant 70 : index
    %c0_425 = arith.constant 0 : index
    %852 = vector.load %arg7[%c70_424, %c0_425] : memref<128x128xf32, #tpu.memory_space<vmem>>, vector<1x128xf32>
    tpu.vector_store %arg7[%c70_424, %c0_425], %851 {strides = array<i32>} : memref<128x128xf32, #tpu.memory_space<vmem>>, vector<1x128xf32>,
    %c71_i32 = arith.constant 71 : i32
    %853 = arith.addi %0, %c71_i32 : i32
    %854 = arith.index_cast %853 : i32 to index
    %855 = memref.load %arg1[%854] : memref<256xi32, #tpu.memory_space<smem>>
    %c71_i32_426 = arith.constant 71 : i32
    %856 = arith.addi %0, %c71_i32_426 : i32
    %857 = arith.index_cast %856 : i32 to index
    %858 = memref.load %arg2[%857] : memref<256xi32, #tpu.memory_space<smem>>
    %859 = arith.index_cast %855 : i32 to index
    %c0_427 = arith.constant 0 : index
    %860 = vector.load %arg3[%859, %c0_427] : memref<64x128xf32, #tpu.memory_space<vmem>>, vector<1x128xf32>
    %c71 = arith.constant 71 : index
    %c0_428 = arith.constant 0 : index
    %861 = vector.load %arg6[%c71, %c0_428] : memref<128x128xf32, #tpu.memory_space<vmem>>, vector<1x128xf32>
    tpu.vector_store %arg6[%c71, %c0_428], %860 {strides = array<i32>} : memref<128x128xf32, #tpu.memory_space<vmem>>, vector<1x128xf32>,
    %862 = arith.index_cast %858 : i32 to index
    %c0_429 = arith.constant 0 : index
    %863 = vector.load %arg4[%862, %c0_429] : memref<96x128xf32, #tpu.memory_space<vmem>>, vector<1x128xf32>
    %c71_430 = arith.constant 71 : index
    %c0_431 = arith.constant 0 : index
    %864 = vector.load %arg7[%c71_430, %c0_431] : memref<128x128xf32, #tpu.memory_space<vmem>>, vector<1x128xf32>
    tpu.vector_store %arg7[%c71_430, %c0_431], %863 {strides = array<i32>} : memref<128x128xf32, #tpu.memory_space<vmem>>, vector<1x128xf32>,
    %c72_i32 = arith.constant 72 : i32
    %865 = arith.addi %0, %c72_i32 : i32
    %866 = arith.index_cast %865 : i32 to index
    %867 = memref.load %arg1[%866] : memref<256xi32, #tpu.memory_space<smem>>
    %c72_i32_432 = arith.constant 72 : i32
    %868 = arith.addi %0, %c72_i32_432 : i32
    %869 = arith.index_cast %868 : i32 to index
    %870 = memref.load %arg2[%869] : memref<256xi32, #tpu.memory_space<smem>>
    %871 = arith.index_cast %867 : i32 to index
    %c0_433 = arith.constant 0 : index
    %872 = vector.load %arg3[%871, %c0_433] : memref<64x128xf32, #tpu.memory_space<vmem>>, vector<1x128xf32>
    %c72 = arith.constant 72 : index
    %c0_434 = arith.constant 0 : index
    %873 = vector.load %arg6[%c72, %c0_434] : memref<128x128xf32, #tpu.memory_space<vmem>>, vector<1x128xf32>
    tpu.vector_store %arg6[%c72, %c0_434], %872 {strides = array<i32>} : memref<128x128xf32, #tpu.memory_space<vmem>>, vector<1x128xf32>,
    %874 = arith.index_cast %870 : i32 to index
    %c0_435 = arith.constant 0 : index
    %875 = vector.load %arg4[%874, %c0_435] : memref<96x128xf32, #tpu.memory_space<vmem>>, vector<1x128xf32>
    %c72_436 = arith.constant 72 : index
    %c0_437 = arith.constant 0 : index
    %876 = vector.load %arg7[%c72_436, %c0_437] : memref<128x128xf32, #tpu.memory_space<vmem>>, vector<1x128xf32>
    tpu.vector_store %arg7[%c72_436, %c0_437], %875 {strides = array<i32>} : memref<128x128xf32, #tpu.memory_space<vmem>>, vector<1x128xf32>,
    %c73_i32 = arith.constant 73 : i32
    %877 = arith.addi %0, %c73_i32 : i32
    %878 = arith.index_cast %877 : i32 to index
    %879 = memref.load %arg1[%878] : memref<256xi32, #tpu.memory_space<smem>>
    %c73_i32_438 = arith.constant 73 : i32
    %880 = arith.addi %0, %c73_i32_438 : i32
    %881 = arith.index_cast %880 : i32 to index
    %882 = memref.load %arg2[%881] : memref<256xi32, #tpu.memory_space<smem>>
    %883 = arith.index_cast %879 : i32 to index
    %c0_439 = arith.constant 0 : index
    %884 = vector.load %arg3[%883, %c0_439] : memref<64x128xf32, #tpu.memory_space<vmem>>, vector<1x128xf32>
    %c73 = arith.constant 73 : index
    %c0_440 = arith.constant 0 : index
    %885 = vector.load %arg6[%c73, %c0_440] : memref<128x128xf32, #tpu.memory_space<vmem>>, vector<1x128xf32>
    tpu.vector_store %arg6[%c73, %c0_440], %884 {strides = array<i32>} : memref<128x128xf32, #tpu.memory_space<vmem>>, vector<1x128xf32>,
    %886 = arith.index_cast %882 : i32 to index
    %c0_441 = arith.constant 0 : index
    %887 = vector.load %arg4[%886, %c0_441] : memref<96x128xf32, #tpu.memory_space<vmem>>, vector<1x128xf32>
    %c73_442 = arith.constant 73 : index
    %c0_443 = arith.constant 0 : index
    %888 = vector.load %arg7[%c73_442, %c0_443] : memref<128x128xf32, #tpu.memory_space<vmem>>, vector<1x128xf32>
    tpu.vector_store %arg7[%c73_442, %c0_443], %887 {strides = array<i32>} : memref<128x128xf32, #tpu.memory_space<vmem>>, vector<1x128xf32>,
    %c74_i32 = arith.constant 74 : i32
    %889 = arith.addi %0, %c74_i32 : i32
    %890 = arith.index_cast %889 : i32 to index
    %891 = memref.load %arg1[%890] : memref<256xi32, #tpu.memory_space<smem>>
    %c74_i32_444 = arith.constant 74 : i32
    %892 = arith.addi %0, %c74_i32_444 : i32
    %893 = arith.index_cast %892 : i32 to index
    %894 = memref.load %arg2[%893] : memref<256xi32, #tpu.memory_space<smem>>
    %895 = arith.index_cast %891 : i32 to index
    %c0_445 = arith.constant 0 : index
    %896 = vector.load %arg3[%895, %c0_445] : memref<64x128xf32, #tpu.memory_space<vmem>>, vector<1x128xf32>
    %c74 = arith.constant 74 : index
    %c0_446 = arith.constant 0 : index
    %897 = vector.load %arg6[%c74, %c0_446] : memref<128x128xf32, #tpu.memory_space<vmem>>, vector<1x128xf32>
    tpu.vector_store %arg6[%c74, %c0_446], %896 {strides = array<i32>} : memref<128x128xf32, #tpu.memory_space<vmem>>, vector<1x128xf32>,
    %898 = arith.index_cast %894 : i32 to index
    %c0_447 = arith.constant 0 : index
    %899 = vector.load %arg4[%898, %c0_447] : memref<96x128xf32, #tpu.memory_space<vmem>>, vector<1x128xf32>
    %c74_448 = arith.constant 74 : index
    %c0_449 = arith.constant 0 : index
    %900 = vector.load %arg7[%c74_448, %c0_449] : memref<128x128xf32, #tpu.memory_space<vmem>>, vector<1x128xf32>
    tpu.vector_store %arg7[%c74_448, %c0_449], %899 {strides = array<i32>} : memref<128x128xf32, #tpu.memory_space<vmem>>, vector<1x128xf32>,
    %c75_i32 = arith.constant 75 : i32
    %901 = arith.addi %0, %c75_i32 : i32
    %902 = arith.index_cast %901 : i32 to index
    %903 = memref.load %arg1[%902] : memref<256xi32, #tpu.memory_space<smem>>
    %c75_i32_450 = arith.constant 75 : i32
    %904 = arith.addi %0, %c75_i32_450 : i32
    %905 = arith.index_cast %904 : i32 to index
    %906 = memref.load %arg2[%905] : memref<256xi32, #tpu.memory_space<smem>>
    %907 = arith.index_cast %903 : i32 to index
    %c0_451 = arith.constant 0 : index
    %908 = vector.load %arg3[%907, %c0_451] : memref<64x128xf32, #tpu.memory_space<vmem>>, vector<1x128xf32>
    %c75 = arith.constant 75 : index
    %c0_452 = arith.constant 0 : index
    %909 = vector.load %arg6[%c75, %c0_452] : memref<128x128xf32, #tpu.memory_space<vmem>>, vector<1x128xf32>
    tpu.vector_store %arg6[%c75, %c0_452], %908 {strides = array<i32>} : memref<128x128xf32, #tpu.memory_space<vmem>>, vector<1x128xf32>,
    %910 = arith.index_cast %906 : i32 to index
    %c0_453 = arith.constant 0 : index
    %911 = vector.load %arg4[%910, %c0_453] : memref<96x128xf32, #tpu.memory_space<vmem>>, vector<1x128xf32>
    %c75_454 = arith.constant 75 : index
    %c0_455 = arith.constant 0 : index
    %912 = vector.load %arg7[%c75_454, %c0_455] : memref<128x128xf32, #tpu.memory_space<vmem>>, vector<1x128xf32>
    tpu.vector_store %arg7[%c75_454, %c0_455], %911 {strides = array<i32>} : memref<128x128xf32, #tpu.memory_space<vmem>>, vector<1x128xf32>,
    %c76_i32 = arith.constant 76 : i32
    %913 = arith.addi %0, %c76_i32 : i32
    %914 = arith.index_cast %913 : i32 to index
    %915 = memref.load %arg1[%914] : memref<256xi32, #tpu.memory_space<smem>>
    %c76_i32_456 = arith.constant 76 : i32
    %916 = arith.addi %0, %c76_i32_456 : i32
    %917 = arith.index_cast %916 : i32 to index
    %918 = memref.load %arg2[%917] : memref<256xi32, #tpu.memory_space<smem>>
    %919 = arith.index_cast %915 : i32 to index
    %c0_457 = arith.constant 0 : index
    %920 = vector.load %arg3[%919, %c0_457] : memref<64x128xf32, #tpu.memory_space<vmem>>, vector<1x128xf32>
    %c76 = arith.constant 76 : index
    %c0_458 = arith.constant 0 : index
    %921 = vector.load %arg6[%c76, %c0_458] : memref<128x128xf32, #tpu.memory_space<vmem>>, vector<1x128xf32>
    tpu.vector_store %arg6[%c76, %c0_458], %920 {strides = array<i32>} : memref<128x128xf32, #tpu.memory_space<vmem>>, vector<1x128xf32>,
    %922 = arith.index_cast %918 : i32 to index
    %c0_459 = arith.constant 0 : index
    %923 = vector.load %arg4[%922, %c0_459] : memref<96x128xf32, #tpu.memory_space<vmem>>, vector<1x128xf32>
    %c76_460 = arith.constant 76 : index
    %c0_461 = arith.constant 0 : index
    %924 = vector.load %arg7[%c76_460, %c0_461] : memref<128x128xf32, #tpu.memory_space<vmem>>, vector<1x128xf32>
    tpu.vector_store %arg7[%c76_460, %c0_461], %923 {strides = array<i32>} : memref<128x128xf32, #tpu.memory_space<vmem>>, vector<1x128xf32>,
    %c77_i32 = arith.constant 77 : i32
    %925 = arith.addi %0, %c77_i32 : i32
    %926 = arith.index_cast %925 : i32 to index
    %927 = memref.load %arg1[%926] : memref<256xi32, #tpu.memory_space<smem>>
    %c77_i32_462 = arith.constant 77 : i32
    %928 = arith.addi %0, %c77_i32_462 : i32
    %929 = arith.index_cast %928 : i32 to index
    %930 = memref.load %arg2[%929] : memref<256xi32, #tpu.memory_space<smem>>
    %931 = arith.index_cast %927 : i32 to index
    %c0_463 = arith.constant 0 : index
    %932 = vector.load %arg3[%931, %c0_463] : memref<64x128xf32, #tpu.memory_space<vmem>>, vector<1x128xf32>
    %c77 = arith.constant 77 : index
    %c0_464 = arith.constant 0 : index
    %933 = vector.load %arg6[%c77, %c0_464] : memref<128x128xf32, #tpu.memory_space<vmem>>, vector<1x128xf32>
    tpu.vector_store %arg6[%c77, %c0_464], %932 {strides = array<i32>} : memref<128x128xf32, #tpu.memory_space<vmem>>, vector<1x128xf32>,
    %934 = arith.index_cast %930 : i32 to index
    %c0_465 = arith.constant 0 : index
    %935 = vector.load %arg4[%934, %c0_465] : memref<96x128xf32, #tpu.memory_space<vmem>>, vector<1x128xf32>
    %c77_466 = arith.constant 77 : index
    %c0_467 = arith.constant 0 : index
    %936 = vector.load %arg7[%c77_466, %c0_467] : memref<128x128xf32, #tpu.memory_space<vmem>>, vector<1x128xf32>
    tpu.vector_store %arg7[%c77_466, %c0_467], %935 {strides = array<i32>} : memref<128x128xf32, #tpu.memory_space<vmem>>, vector<1x128xf32>,
    %c78_i32 = arith.constant 78 : i32
    %937 = arith.addi %0, %c78_i32 : i32
    %938 = arith.index_cast %937 : i32 to index
    %939 = memref.load %arg1[%938] : memref<256xi32, #tpu.memory_space<smem>>
    %c78_i32_468 = arith.constant 78 : i32
    %940 = arith.addi %0, %c78_i32_468 : i32
    %941 = arith.index_cast %940 : i32 to index
    %942 = memref.load %arg2[%941] : memref<256xi32, #tpu.memory_space<smem>>
    %943 = arith.index_cast %939 : i32 to index
    %c0_469 = arith.constant 0 : index
    %944 = vector.load %arg3[%943, %c0_469] : memref<64x128xf32, #tpu.memory_space<vmem>>, vector<1x128xf32>
    %c78 = arith.constant 78 : index
    %c0_470 = arith.constant 0 : index
    %945 = vector.load %arg6[%c78, %c0_470] : memref<128x128xf32, #tpu.memory_space<vmem>>, vector<1x128xf32>
    tpu.vector_store %arg6[%c78, %c0_470], %944 {strides = array<i32>} : memref<128x128xf32, #tpu.memory_space<vmem>>, vector<1x128xf32>,
    %946 = arith.index_cast %942 : i32 to index
    %c0_471 = arith.constant 0 : index
    %947 = vector.load %arg4[%946, %c0_471] : memref<96x128xf32, #tpu.memory_space<vmem>>, vector<1x128xf32>
    %c78_472 = arith.constant 78 : index
    %c0_473 = arith.constant 0 : index
    %948 = vector.load %arg7[%c78_472, %c0_473] : memref<128x128xf32, #tpu.memory_space<vmem>>, vector<1x128xf32>
    tpu.vector_store %arg7[%c78_472, %c0_473], %947 {strides = array<i32>} : memref<128x128xf32, #tpu.memory_space<vmem>>, vector<1x128xf32>,
    %c79_i32 = arith.constant 79 : i32
    %949 = arith.addi %0, %c79_i32 : i32
    %950 = arith.index_cast %949 : i32 to index
    %951 = memref.load %arg1[%950] : memref<256xi32, #tpu.memory_space<smem>>
    %c79_i32_474 = arith.constant 79 : i32
    %952 = arith.addi %0, %c79_i32_474 : i32
    %953 = arith.index_cast %952 : i32 to index
    %954 = memref.load %arg2[%953] : memref<256xi32, #tpu.memory_space<smem>>
    %955 = arith.index_cast %951 : i32 to index
    %c0_475 = arith.constant 0 : index
    %956 = vector.load %arg3[%955, %c0_475] : memref<64x128xf32, #tpu.memory_space<vmem>>, vector<1x128xf32>
    %c79 = arith.constant 79 : index
    %c0_476 = arith.constant 0 : index
    %957 = vector.load %arg6[%c79, %c0_476] : memref<128x128xf32, #tpu.memory_space<vmem>>, vector<1x128xf32>
    tpu.vector_store %arg6[%c79, %c0_476], %956 {strides = array<i32>} : memref<128x128xf32, #tpu.memory_space<vmem>>, vector<1x128xf32>,
    %958 = arith.index_cast %954 : i32 to index
    %c0_477 = arith.constant 0 : index
    %959 = vector.load %arg4[%958, %c0_477] : memref<96x128xf32, #tpu.memory_space<vmem>>, vector<1x128xf32>
    %c79_478 = arith.constant 79 : index
    %c0_479 = arith.constant 0 : index
    %960 = vector.load %arg7[%c79_478, %c0_479] : memref<128x128xf32, #tpu.memory_space<vmem>>, vector<1x128xf32>
    tpu.vector_store %arg7[%c79_478, %c0_479], %959 {strides = array<i32>} : memref<128x128xf32, #tpu.memory_space<vmem>>, vector<1x128xf32>,
    %c80_i32 = arith.constant 80 : i32
    %961 = arith.addi %0, %c80_i32 : i32
    %962 = arith.index_cast %961 : i32 to index
    %963 = memref.load %arg1[%962] : memref<256xi32, #tpu.memory_space<smem>>
    %c80_i32_480 = arith.constant 80 : i32
    %964 = arith.addi %0, %c80_i32_480 : i32
    %965 = arith.index_cast %964 : i32 to index
    %966 = memref.load %arg2[%965] : memref<256xi32, #tpu.memory_space<smem>>
    %967 = arith.index_cast %963 : i32 to index
    %c0_481 = arith.constant 0 : index
    %968 = vector.load %arg3[%967, %c0_481] : memref<64x128xf32, #tpu.memory_space<vmem>>, vector<1x128xf32>
    %c80 = arith.constant 80 : index
    %c0_482 = arith.constant 0 : index
    %969 = vector.load %arg6[%c80, %c0_482] : memref<128x128xf32, #tpu.memory_space<vmem>>, vector<1x128xf32>
    tpu.vector_store %arg6[%c80, %c0_482], %968 {strides = array<i32>} : memref<128x128xf32, #tpu.memory_space<vmem>>, vector<1x128xf32>,
    %970 = arith.index_cast %966 : i32 to index
    %c0_483 = arith.constant 0 : index
    %971 = vector.load %arg4[%970, %c0_483] : memref<96x128xf32, #tpu.memory_space<vmem>>, vector<1x128xf32>
    %c80_484 = arith.constant 80 : index
    %c0_485 = arith.constant 0 : index
    %972 = vector.load %arg7[%c80_484, %c0_485] : memref<128x128xf32, #tpu.memory_space<vmem>>, vector<1x128xf32>
    tpu.vector_store %arg7[%c80_484, %c0_485], %971 {strides = array<i32>} : memref<128x128xf32, #tpu.memory_space<vmem>>, vector<1x128xf32>,
    %c81_i32 = arith.constant 81 : i32
    %973 = arith.addi %0, %c81_i32 : i32
    %974 = arith.index_cast %973 : i32 to index
    %975 = memref.load %arg1[%974] : memref<256xi32, #tpu.memory_space<smem>>
    %c81_i32_486 = arith.constant 81 : i32
    %976 = arith.addi %0, %c81_i32_486 : i32
    %977 = arith.index_cast %976 : i32 to index
    %978 = memref.load %arg2[%977] : memref<256xi32, #tpu.memory_space<smem>>
    %979 = arith.index_cast %975 : i32 to index
    %c0_487 = arith.constant 0 : index
    %980 = vector.load %arg3[%979, %c0_487] : memref<64x128xf32, #tpu.memory_space<vmem>>, vector<1x128xf32>
    %c81 = arith.constant 81 : index
    %c0_488 = arith.constant 0 : index
    %981 = vector.load %arg6[%c81, %c0_488] : memref<128x128xf32, #tpu.memory_space<vmem>>, vector<1x128xf32>
    tpu.vector_store %arg6[%c81, %c0_488], %980 {strides = array<i32>} : memref<128x128xf32, #tpu.memory_space<vmem>>, vector<1x128xf32>,
    %982 = arith.index_cast %978 : i32 to index
    %c0_489 = arith.constant 0 : index
    %983 = vector.load %arg4[%982, %c0_489] : memref<96x128xf32, #tpu.memory_space<vmem>>, vector<1x128xf32>
    %c81_490 = arith.constant 81 : index
    %c0_491 = arith.constant 0 : index
    %984 = vector.load %arg7[%c81_490, %c0_491] : memref<128x128xf32, #tpu.memory_space<vmem>>, vector<1x128xf32>
    tpu.vector_store %arg7[%c81_490, %c0_491], %983 {strides = array<i32>} : memref<128x128xf32, #tpu.memory_space<vmem>>, vector<1x128xf32>,
    %c82_i32 = arith.constant 82 : i32
    %985 = arith.addi %0, %c82_i32 : i32
    %986 = arith.index_cast %985 : i32 to index
    %987 = memref.load %arg1[%986] : memref<256xi32, #tpu.memory_space<smem>>
    %c82_i32_492 = arith.constant 82 : i32
    %988 = arith.addi %0, %c82_i32_492 : i32
    %989 = arith.index_cast %988 : i32 to index
    %990 = memref.load %arg2[%989] : memref<256xi32, #tpu.memory_space<smem>>
    %991 = arith.index_cast %987 : i32 to index
    %c0_493 = arith.constant 0 : index
    %992 = vector.load %arg3[%991, %c0_493] : memref<64x128xf32, #tpu.memory_space<vmem>>, vector<1x128xf32>
    %c82 = arith.constant 82 : index
    %c0_494 = arith.constant 0 : index
    %993 = vector.load %arg6[%c82, %c0_494] : memref<128x128xf32, #tpu.memory_space<vmem>>, vector<1x128xf32>
    tpu.vector_store %arg6[%c82, %c0_494], %992 {strides = array<i32>} : memref<128x128xf32, #tpu.memory_space<vmem>>, vector<1x128xf32>,
    %994 = arith.index_cast %990 : i32 to index
    %c0_495 = arith.constant 0 : index
    %995 = vector.load %arg4[%994, %c0_495] : memref<96x128xf32, #tpu.memory_space<vmem>>, vector<1x128xf32>
    %c82_496 = arith.constant 82 : index
    %c0_497 = arith.constant 0 : index
    %996 = vector.load %arg7[%c82_496, %c0_497] : memref<128x128xf32, #tpu.memory_space<vmem>>, vector<1x128xf32>
    tpu.vector_store %arg7[%c82_496, %c0_497], %995 {strides = array<i32>} : memref<128x128xf32, #tpu.memory_space<vmem>>, vector<1x128xf32>,
    %c83_i32 = arith.constant 83 : i32
    %997 = arith.addi %0, %c83_i32 : i32
    %998 = arith.index_cast %997 : i32 to index
    %999 = memref.load %arg1[%998] : memref<256xi32, #tpu.memory_space<smem>>
    %c83_i32_498 = arith.constant 83 : i32
    %1000 = arith.addi %0, %c83_i32_498 : i32
    %1001 = arith.index_cast %1000 : i32 to index
    %1002 = memref.load %arg2[%1001] : memref<256xi32, #tpu.memory_space<smem>>
    %1003 = arith.index_cast %999 : i32 to index
    %c0_499 = arith.constant 0 : index
    %1004 = vector.load %arg3[%1003, %c0_499] : memref<64x128xf32, #tpu.memory_space<vmem>>, vector<1x128xf32>
    %c83 = arith.constant 83 : index
    %c0_500 = arith.constant 0 : index
    %1005 = vector.load %arg6[%c83, %c0_500] : memref<128x128xf32, #tpu.memory_space<vmem>>, vector<1x128xf32>
    tpu.vector_store %arg6[%c83, %c0_500], %1004 {strides = array<i32>} : memref<128x128xf32, #tpu.memory_space<vmem>>, vector<1x128xf32>,
    %1006 = arith.index_cast %1002 : i32 to index
    %c0_501 = arith.constant 0 : index
    %1007 = vector.load %arg4[%1006, %c0_501] : memref<96x128xf32, #tpu.memory_space<vmem>>, vector<1x128xf32>
    %c83_502 = arith.constant 83 : index
    %c0_503 = arith.constant 0 : index
    %1008 = vector.load %arg7[%c83_502, %c0_503] : memref<128x128xf32, #tpu.memory_space<vmem>>, vector<1x128xf32>
    tpu.vector_store %arg7[%c83_502, %c0_503], %1007 {strides = array<i32>} : memref<128x128xf32, #tpu.memory_space<vmem>>, vector<1x128xf32>,
    %c84_i32 = arith.constant 84 : i32
    %1009 = arith.addi %0, %c84_i32 : i32
    %1010 = arith.index_cast %1009 : i32 to index
    %1011 = memref.load %arg1[%1010] : memref<256xi32, #tpu.memory_space<smem>>
    %c84_i32_504 = arith.constant 84 : i32
    %1012 = arith.addi %0, %c84_i32_504 : i32
    %1013 = arith.index_cast %1012 : i32 to index
    %1014 = memref.load %arg2[%1013] : memref<256xi32, #tpu.memory_space<smem>>
    %1015 = arith.index_cast %1011 : i32 to index
    %c0_505 = arith.constant 0 : index
    %1016 = vector.load %arg3[%1015, %c0_505] : memref<64x128xf32, #tpu.memory_space<vmem>>, vector<1x128xf32>
    %c84 = arith.constant 84 : index
    %c0_506 = arith.constant 0 : index
    %1017 = vector.load %arg6[%c84, %c0_506] : memref<128x128xf32, #tpu.memory_space<vmem>>, vector<1x128xf32>
    tpu.vector_store %arg6[%c84, %c0_506], %1016 {strides = array<i32>} : memref<128x128xf32, #tpu.memory_space<vmem>>, vector<1x128xf32>,
    %1018 = arith.index_cast %1014 : i32 to index
    %c0_507 = arith.constant 0 : index
    %1019 = vector.load %arg4[%1018, %c0_507] : memref<96x128xf32, #tpu.memory_space<vmem>>, vector<1x128xf32>
    %c84_508 = arith.constant 84 : index
    %c0_509 = arith.constant 0 : index
    %1020 = vector.load %arg7[%c84_508, %c0_509] : memref<128x128xf32, #tpu.memory_space<vmem>>, vector<1x128xf32>
    tpu.vector_store %arg7[%c84_508, %c0_509], %1019 {strides = array<i32>} : memref<128x128xf32, #tpu.memory_space<vmem>>, vector<1x128xf32>,
    %c85_i32 = arith.constant 85 : i32
    %1021 = arith.addi %0, %c85_i32 : i32
    %1022 = arith.index_cast %1021 : i32 to index
    %1023 = memref.load %arg1[%1022] : memref<256xi32, #tpu.memory_space<smem>>
    %c85_i32_510 = arith.constant 85 : i32
    %1024 = arith.addi %0, %c85_i32_510 : i32
    %1025 = arith.index_cast %1024 : i32 to index
    %1026 = memref.load %arg2[%1025] : memref<256xi32, #tpu.memory_space<smem>>
    %1027 = arith.index_cast %1023 : i32 to index
    %c0_511 = arith.constant 0 : index
    %1028 = vector.load %arg3[%1027, %c0_511] : memref<64x128xf32, #tpu.memory_space<vmem>>, vector<1x128xf32>
    %c85 = arith.constant 85 : index
    %c0_512 = arith.constant 0 : index
    %1029 = vector.load %arg6[%c85, %c0_512] : memref<128x128xf32, #tpu.memory_space<vmem>>, vector<1x128xf32>
    tpu.vector_store %arg6[%c85, %c0_512], %1028 {strides = array<i32>} : memref<128x128xf32, #tpu.memory_space<vmem>>, vector<1x128xf32>,
    %1030 = arith.index_cast %1026 : i32 to index
    %c0_513 = arith.constant 0 : index
    %1031 = vector.load %arg4[%1030, %c0_513] : memref<96x128xf32, #tpu.memory_space<vmem>>, vector<1x128xf32>
    %c85_514 = arith.constant 85 : index
    %c0_515 = arith.constant 0 : index
    %1032 = vector.load %arg7[%c85_514, %c0_515] : memref<128x128xf32, #tpu.memory_space<vmem>>, vector<1x128xf32>
    tpu.vector_store %arg7[%c85_514, %c0_515], %1031 {strides = array<i32>} : memref<128x128xf32, #tpu.memory_space<vmem>>, vector<1x128xf32>,
    %c86_i32 = arith.constant 86 : i32
    %1033 = arith.addi %0, %c86_i32 : i32
    %1034 = arith.index_cast %1033 : i32 to index
    %1035 = memref.load %arg1[%1034] : memref<256xi32, #tpu.memory_space<smem>>
    %c86_i32_516 = arith.constant 86 : i32
    %1036 = arith.addi %0, %c86_i32_516 : i32
    %1037 = arith.index_cast %1036 : i32 to index
    %1038 = memref.load %arg2[%1037] : memref<256xi32, #tpu.memory_space<smem>>
    %1039 = arith.index_cast %1035 : i32 to index
    %c0_517 = arith.constant 0 : index
    %1040 = vector.load %arg3[%1039, %c0_517] : memref<64x128xf32, #tpu.memory_space<vmem>>, vector<1x128xf32>
    %c86 = arith.constant 86 : index
    %c0_518 = arith.constant 0 : index
    %1041 = vector.load %arg6[%c86, %c0_518] : memref<128x128xf32, #tpu.memory_space<vmem>>, vector<1x128xf32>
    tpu.vector_store %arg6[%c86, %c0_518], %1040 {strides = array<i32>} : memref<128x128xf32, #tpu.memory_space<vmem>>, vector<1x128xf32>,
    %1042 = arith.index_cast %1038 : i32 to index
    %c0_519 = arith.constant 0 : index
    %1043 = vector.load %arg4[%1042, %c0_519] : memref<96x128xf32, #tpu.memory_space<vmem>>, vector<1x128xf32>
    %c86_520 = arith.constant 86 : index
    %c0_521 = arith.constant 0 : index
    %1044 = vector.load %arg7[%c86_520, %c0_521] : memref<128x128xf32, #tpu.memory_space<vmem>>, vector<1x128xf32>
    tpu.vector_store %arg7[%c86_520, %c0_521], %1043 {strides = array<i32>} : memref<128x128xf32, #tpu.memory_space<vmem>>, vector<1x128xf32>,
    %c87_i32 = arith.constant 87 : i32
    %1045 = arith.addi %0, %c87_i32 : i32
    %1046 = arith.index_cast %1045 : i32 to index
    %1047 = memref.load %arg1[%1046] : memref<256xi32, #tpu.memory_space<smem>>
    %c87_i32_522 = arith.constant 87 : i32
    %1048 = arith.addi %0, %c87_i32_522 : i32
    %1049 = arith.index_cast %1048 : i32 to index
    %1050 = memref.load %arg2[%1049] : memref<256xi32, #tpu.memory_space<smem>>
    %1051 = arith.index_cast %1047 : i32 to index
    %c0_523 = arith.constant 0 : index
    %1052 = vector.load %arg3[%1051, %c0_523] : memref<64x128xf32, #tpu.memory_space<vmem>>, vector<1x128xf32>
    %c87 = arith.constant 87 : index
    %c0_524 = arith.constant 0 : index
    %1053 = vector.load %arg6[%c87, %c0_524] : memref<128x128xf32, #tpu.memory_space<vmem>>, vector<1x128xf32>
    tpu.vector_store %arg6[%c87, %c0_524], %1052 {strides = array<i32>} : memref<128x128xf32, #tpu.memory_space<vmem>>, vector<1x128xf32>,
    %1054 = arith.index_cast %1050 : i32 to index
    %c0_525 = arith.constant 0 : index
    %1055 = vector.load %arg4[%1054, %c0_525] : memref<96x128xf32, #tpu.memory_space<vmem>>, vector<1x128xf32>
    %c87_526 = arith.constant 87 : index
    %c0_527 = arith.constant 0 : index
    %1056 = vector.load %arg7[%c87_526, %c0_527] : memref<128x128xf32, #tpu.memory_space<vmem>>, vector<1x128xf32>
    tpu.vector_store %arg7[%c87_526, %c0_527], %1055 {strides = array<i32>} : memref<128x128xf32, #tpu.memory_space<vmem>>, vector<1x128xf32>,
    %c88_i32 = arith.constant 88 : i32
    %1057 = arith.addi %0, %c88_i32 : i32
    %1058 = arith.index_cast %1057 : i32 to index
    %1059 = memref.load %arg1[%1058] : memref<256xi32, #tpu.memory_space<smem>>
    %c88_i32_528 = arith.constant 88 : i32
    %1060 = arith.addi %0, %c88_i32_528 : i32
    %1061 = arith.index_cast %1060 : i32 to index
    %1062 = memref.load %arg2[%1061] : memref<256xi32, #tpu.memory_space<smem>>
    %1063 = arith.index_cast %1059 : i32 to index
    %c0_529 = arith.constant 0 : index
    %1064 = vector.load %arg3[%1063, %c0_529] : memref<64x128xf32, #tpu.memory_space<vmem>>, vector<1x128xf32>
    %c88 = arith.constant 88 : index
    %c0_530 = arith.constant 0 : index
    %1065 = vector.load %arg6[%c88, %c0_530] : memref<128x128xf32, #tpu.memory_space<vmem>>, vector<1x128xf32>
    tpu.vector_store %arg6[%c88, %c0_530], %1064 {strides = array<i32>} : memref<128x128xf32, #tpu.memory_space<vmem>>, vector<1x128xf32>,
    %1066 = arith.index_cast %1062 : i32 to index
    %c0_531 = arith.constant 0 : index
    %1067 = vector.load %arg4[%1066, %c0_531] : memref<96x128xf32, #tpu.memory_space<vmem>>, vector<1x128xf32>
    %c88_532 = arith.constant 88 : index
    %c0_533 = arith.constant 0 : index
    %1068 = vector.load %arg7[%c88_532, %c0_533] : memref<128x128xf32, #tpu.memory_space<vmem>>, vector<1x128xf32>
    tpu.vector_store %arg7[%c88_532, %c0_533], %1067 {strides = array<i32>} : memref<128x128xf32, #tpu.memory_space<vmem>>, vector<1x128xf32>,
    %c89_i32 = arith.constant 89 : i32
    %1069 = arith.addi %0, %c89_i32 : i32
    %1070 = arith.index_cast %1069 : i32 to index
    %1071 = memref.load %arg1[%1070] : memref<256xi32, #tpu.memory_space<smem>>
    %c89_i32_534 = arith.constant 89 : i32
    %1072 = arith.addi %0, %c89_i32_534 : i32
    %1073 = arith.index_cast %1072 : i32 to index
    %1074 = memref.load %arg2[%1073] : memref<256xi32, #tpu.memory_space<smem>>
    %1075 = arith.index_cast %1071 : i32 to index
    %c0_535 = arith.constant 0 : index
    %1076 = vector.load %arg3[%1075, %c0_535] : memref<64x128xf32, #tpu.memory_space<vmem>>, vector<1x128xf32>
    %c89 = arith.constant 89 : index
    %c0_536 = arith.constant 0 : index
    %1077 = vector.load %arg6[%c89, %c0_536] : memref<128x128xf32, #tpu.memory_space<vmem>>, vector<1x128xf32>
    tpu.vector_store %arg6[%c89, %c0_536], %1076 {strides = array<i32>} : memref<128x128xf32, #tpu.memory_space<vmem>>, vector<1x128xf32>,
    %1078 = arith.index_cast %1074 : i32 to index
    %c0_537 = arith.constant 0 : index
    %1079 = vector.load %arg4[%1078, %c0_537] : memref<96x128xf32, #tpu.memory_space<vmem>>, vector<1x128xf32>
    %c89_538 = arith.constant 89 : index
    %c0_539 = arith.constant 0 : index
    %1080 = vector.load %arg7[%c89_538, %c0_539] : memref<128x128xf32, #tpu.memory_space<vmem>>, vector<1x128xf32>
    tpu.vector_store %arg7[%c89_538, %c0_539], %1079 {strides = array<i32>} : memref<128x128xf32, #tpu.memory_space<vmem>>, vector<1x128xf32>,
    %c90_i32 = arith.constant 90 : i32
    %1081 = arith.addi %0, %c90_i32 : i32
    %1082 = arith.index_cast %1081 : i32 to index
    %1083 = memref.load %arg1[%1082] : memref<256xi32, #tpu.memory_space<smem>>
    %c90_i32_540 = arith.constant 90 : i32
    %1084 = arith.addi %0, %c90_i32_540 : i32
    %1085 = arith.index_cast %1084 : i32 to index
    %1086 = memref.load %arg2[%1085] : memref<256xi32, #tpu.memory_space<smem>>
    %1087 = arith.index_cast %1083 : i32 to index
    %c0_541 = arith.constant 0 : index
    %1088 = vector.load %arg3[%1087, %c0_541] : memref<64x128xf32, #tpu.memory_space<vmem>>, vector<1x128xf32>
    %c90 = arith.constant 90 : index
    %c0_542 = arith.constant 0 : index
    %1089 = vector.load %arg6[%c90, %c0_542] : memref<128x128xf32, #tpu.memory_space<vmem>>, vector<1x128xf32>
    tpu.vector_store %arg6[%c90, %c0_542], %1088 {strides = array<i32>} : memref<128x128xf32, #tpu.memory_space<vmem>>, vector<1x128xf32>,
    %1090 = arith.index_cast %1086 : i32 to index
    %c0_543 = arith.constant 0 : index
    %1091 = vector.load %arg4[%1090, %c0_543] : memref<96x128xf32, #tpu.memory_space<vmem>>, vector<1x128xf32>
    %c90_544 = arith.constant 90 : index
    %c0_545 = arith.constant 0 : index
    %1092 = vector.load %arg7[%c90_544, %c0_545] : memref<128x128xf32, #tpu.memory_space<vmem>>, vector<1x128xf32>
    tpu.vector_store %arg7[%c90_544, %c0_545], %1091 {strides = array<i32>} : memref<128x128xf32, #tpu.memory_space<vmem>>, vector<1x128xf32>,
    %c91_i32 = arith.constant 91 : i32
    %1093 = arith.addi %0, %c91_i32 : i32
    %1094 = arith.index_cast %1093 : i32 to index
    %1095 = memref.load %arg1[%1094] : memref<256xi32, #tpu.memory_space<smem>>
    %c91_i32_546 = arith.constant 91 : i32
    %1096 = arith.addi %0, %c91_i32_546 : i32
    %1097 = arith.index_cast %1096 : i32 to index
    %1098 = memref.load %arg2[%1097] : memref<256xi32, #tpu.memory_space<smem>>
    %1099 = arith.index_cast %1095 : i32 to index
    %c0_547 = arith.constant 0 : index
    %1100 = vector.load %arg3[%1099, %c0_547] : memref<64x128xf32, #tpu.memory_space<vmem>>, vector<1x128xf32>
    %c91 = arith.constant 91 : index
    %c0_548 = arith.constant 0 : index
    %1101 = vector.load %arg6[%c91, %c0_548] : memref<128x128xf32, #tpu.memory_space<vmem>>, vector<1x128xf32>
    tpu.vector_store %arg6[%c91, %c0_548], %1100 {strides = array<i32>} : memref<128x128xf32, #tpu.memory_space<vmem>>, vector<1x128xf32>,
    %1102 = arith.index_cast %1098 : i32 to index
    %c0_549 = arith.constant 0 : index
    %1103 = vector.load %arg4[%1102, %c0_549] : memref<96x128xf32, #tpu.memory_space<vmem>>, vector<1x128xf32>
    %c91_550 = arith.constant 91 : index
    %c0_551 = arith.constant 0 : index
    %1104 = vector.load %arg7[%c91_550, %c0_551] : memref<128x128xf32, #tpu.memory_space<vmem>>, vector<1x128xf32>
    tpu.vector_store %arg7[%c91_550, %c0_551], %1103 {strides = array<i32>} : memref<128x128xf32, #tpu.memory_space<vmem>>, vector<1x128xf32>,
    %c92_i32 = arith.constant 92 : i32
    %1105 = arith.addi %0, %c92_i32 : i32
    %1106 = arith.index_cast %1105 : i32 to index
    %1107 = memref.load %arg1[%1106] : memref<256xi32, #tpu.memory_space<smem>>
    %c92_i32_552 = arith.constant 92 : i32
    %1108 = arith.addi %0, %c92_i32_552 : i32
    %1109 = arith.index_cast %1108 : i32 to index
    %1110 = memref.load %arg2[%1109] : memref<256xi32, #tpu.memory_space<smem>>
    %1111 = arith.index_cast %1107 : i32 to index
    %c0_553 = arith.constant 0 : index
    %1112 = vector.load %arg3[%1111, %c0_553] : memref<64x128xf32, #tpu.memory_space<vmem>>, vector<1x128xf32>
    %c92 = arith.constant 92 : index
    %c0_554 = arith.constant 0 : index
    %1113 = vector.load %arg6[%c92, %c0_554] : memref<128x128xf32, #tpu.memory_space<vmem>>, vector<1x128xf32>
    tpu.vector_store %arg6[%c92, %c0_554], %1112 {strides = array<i32>} : memref<128x128xf32, #tpu.memory_space<vmem>>, vector<1x128xf32>,
    %1114 = arith.index_cast %1110 : i32 to index
    %c0_555 = arith.constant 0 : index
    %1115 = vector.load %arg4[%1114, %c0_555] : memref<96x128xf32, #tpu.memory_space<vmem>>, vector<1x128xf32>
    %c92_556 = arith.constant 92 : index
    %c0_557 = arith.constant 0 : index
    %1116 = vector.load %arg7[%c92_556, %c0_557] : memref<128x128xf32, #tpu.memory_space<vmem>>, vector<1x128xf32>
    tpu.vector_store %arg7[%c92_556, %c0_557], %1115 {strides = array<i32>} : memref<128x128xf32, #tpu.memory_space<vmem>>, vector<1x128xf32>,
    %c93_i32 = arith.constant 93 : i32
    %1117 = arith.addi %0, %c93_i32 : i32
    %1118 = arith.index_cast %1117 : i32 to index
    %1119 = memref.load %arg1[%1118] : memref<256xi32, #tpu.memory_space<smem>>
    %c93_i32_558 = arith.constant 93 : i32
    %1120 = arith.addi %0, %c93_i32_558 : i32
    %1121 = arith.index_cast %1120 : i32 to index
    %1122 = memref.load %arg2[%1121] : memref<256xi32, #tpu.memory_space<smem>>
    %1123 = arith.index_cast %1119 : i32 to index
    %c0_559 = arith.constant 0 : index
    %1124 = vector.load %arg3[%1123, %c0_559] : memref<64x128xf32, #tpu.memory_space<vmem>>, vector<1x128xf32>
    %c93 = arith.constant 93 : index
    %c0_560 = arith.constant 0 : index
    %1125 = vector.load %arg6[%c93, %c0_560] : memref<128x128xf32, #tpu.memory_space<vmem>>, vector<1x128xf32>
    tpu.vector_store %arg6[%c93, %c0_560], %1124 {strides = array<i32>} : memref<128x128xf32, #tpu.memory_space<vmem>>, vector<1x128xf32>,
    %1126 = arith.index_cast %1122 : i32 to index
    %c0_561 = arith.constant 0 : index
    %1127 = vector.load %arg4[%1126, %c0_561] : memref<96x128xf32, #tpu.memory_space<vmem>>, vector<1x128xf32>
    %c93_562 = arith.constant 93 : index
    %c0_563 = arith.constant 0 : index
    %1128 = vector.load %arg7[%c93_562, %c0_563] : memref<128x128xf32, #tpu.memory_space<vmem>>, vector<1x128xf32>
    tpu.vector_store %arg7[%c93_562, %c0_563], %1127 {strides = array<i32>} : memref<128x128xf32, #tpu.memory_space<vmem>>, vector<1x128xf32>,
    %c94_i32 = arith.constant 94 : i32
    %1129 = arith.addi %0, %c94_i32 : i32
    %1130 = arith.index_cast %1129 : i32 to index
    %1131 = memref.load %arg1[%1130] : memref<256xi32, #tpu.memory_space<smem>>
    %c94_i32_564 = arith.constant 94 : i32
    %1132 = arith.addi %0, %c94_i32_564 : i32
    %1133 = arith.index_cast %1132 : i32 to index
    %1134 = memref.load %arg2[%1133] : memref<256xi32, #tpu.memory_space<smem>>
    %1135 = arith.index_cast %1131 : i32 to index
    %c0_565 = arith.constant 0 : index
    %1136 = vector.load %arg3[%1135, %c0_565] : memref<64x128xf32, #tpu.memory_space<vmem>>, vector<1x128xf32>
    %c94 = arith.constant 94 : index
    %c0_566 = arith.constant 0 : index
    %1137 = vector.load %arg6[%c94, %c0_566] : memref<128x128xf32, #tpu.memory_space<vmem>>, vector<1x128xf32>
    tpu.vector_store %arg6[%c94, %c0_566], %1136 {strides = array<i32>} : memref<128x128xf32, #tpu.memory_space<vmem>>, vector<1x128xf32>,
    %1138 = arith.index_cast %1134 : i32 to index
    %c0_567 = arith.constant 0 : index
    %1139 = vector.load %arg4[%1138, %c0_567] : memref<96x128xf32, #tpu.memory_space<vmem>>, vector<1x128xf32>
    %c94_568 = arith.constant 94 : index
    %c0_569 = arith.constant 0 : index
    %1140 = vector.load %arg7[%c94_568, %c0_569] : memref<128x128xf32, #tpu.memory_space<vmem>>, vector<1x128xf32>
    tpu.vector_store %arg7[%c94_568, %c0_569], %1139 {strides = array<i32>} : memref<128x128xf32, #tpu.memory_space<vmem>>, vector<1x128xf32>,
    %c95_i32 = arith.constant 95 : i32
    %1141 = arith.addi %0, %c95_i32 : i32
    %1142 = arith.index_cast %1141 : i32 to index
    %1143 = memref.load %arg1[%1142] : memref<256xi32, #tpu.memory_space<smem>>
    %c95_i32_570 = arith.constant 95 : i32
    %1144 = arith.addi %0, %c95_i32_570 : i32
    %1145 = arith.index_cast %1144 : i32 to index
    %1146 = memref.load %arg2[%1145] : memref<256xi32, #tpu.memory_space<smem>>
    %1147 = arith.index_cast %1143 : i32 to index
    %c0_571 = arith.constant 0 : index
    %1148 = vector.load %arg3[%1147, %c0_571] : memref<64x128xf32, #tpu.memory_space<vmem>>, vector<1x128xf32>
    %c95 = arith.constant 95 : index
    %c0_572 = arith.constant 0 : index
    %1149 = vector.load %arg6[%c95, %c0_572] : memref<128x128xf32, #tpu.memory_space<vmem>>, vector<1x128xf32>
    tpu.vector_store %arg6[%c95, %c0_572], %1148 {strides = array<i32>} : memref<128x128xf32, #tpu.memory_space<vmem>>, vector<1x128xf32>,
    %1150 = arith.index_cast %1146 : i32 to index
    %c0_573 = arith.constant 0 : index
    %1151 = vector.load %arg4[%1150, %c0_573] : memref<96x128xf32, #tpu.memory_space<vmem>>, vector<1x128xf32>
    %c95_574 = arith.constant 95 : index
    %c0_575 = arith.constant 0 : index
    %1152 = vector.load %arg7[%c95_574, %c0_575] : memref<128x128xf32, #tpu.memory_space<vmem>>, vector<1x128xf32>
    tpu.vector_store %arg7[%c95_574, %c0_575], %1151 {strides = array<i32>} : memref<128x128xf32, #tpu.memory_space<vmem>>, vector<1x128xf32>,
    %c96_i32 = arith.constant 96 : i32
    %1153 = arith.addi %0, %c96_i32 : i32
    %1154 = arith.index_cast %1153 : i32 to index
    %1155 = memref.load %arg1[%1154] : memref<256xi32, #tpu.memory_space<smem>>
    %c96_i32_576 = arith.constant 96 : i32
    %1156 = arith.addi %0, %c96_i32_576 : i32
    %1157 = arith.index_cast %1156 : i32 to index
    %1158 = memref.load %arg2[%1157] : memref<256xi32, #tpu.memory_space<smem>>
    %1159 = arith.index_cast %1155 : i32 to index
    %c0_577 = arith.constant 0 : index
    %1160 = vector.load %arg3[%1159, %c0_577] : memref<64x128xf32, #tpu.memory_space<vmem>>, vector<1x128xf32>
    %c96 = arith.constant 96 : index
    %c0_578 = arith.constant 0 : index
    %1161 = vector.load %arg6[%c96, %c0_578] : memref<128x128xf32, #tpu.memory_space<vmem>>, vector<1x128xf32>
    tpu.vector_store %arg6[%c96, %c0_578], %1160 {strides = array<i32>} : memref<128x128xf32, #tpu.memory_space<vmem>>, vector<1x128xf32>,
    %1162 = arith.index_cast %1158 : i32 to index
    %c0_579 = arith.constant 0 : index
    %1163 = vector.load %arg4[%1162, %c0_579] : memref<96x128xf32, #tpu.memory_space<vmem>>, vector<1x128xf32>
    %c96_580 = arith.constant 96 : index
    %c0_581 = arith.constant 0 : index
    %1164 = vector.load %arg7[%c96_580, %c0_581] : memref<128x128xf32, #tpu.memory_space<vmem>>, vector<1x128xf32>
    tpu.vector_store %arg7[%c96_580, %c0_581], %1163 {strides = array<i32>} : memref<128x128xf32, #tpu.memory_space<vmem>>, vector<1x128xf32>,
    %c97_i32 = arith.constant 97 : i32
    %1165 = arith.addi %0, %c97_i32 : i32
    %1166 = arith.index_cast %1165 : i32 to index
    %1167 = memref.load %arg1[%1166] : memref<256xi32, #tpu.memory_space<smem>>
    %c97_i32_582 = arith.constant 97 : i32
    %1168 = arith.addi %0, %c97_i32_582 : i32
    %1169 = arith.index_cast %1168 : i32 to index
    %1170 = memref.load %arg2[%1169] : memref<256xi32, #tpu.memory_space<smem>>
    %1171 = arith.index_cast %1167 : i32 to index
    %c0_583 = arith.constant 0 : index
    %1172 = vector.load %arg3[%1171, %c0_583] : memref<64x128xf32, #tpu.memory_space<vmem>>, vector<1x128xf32>
    %c97 = arith.constant 97 : index
    %c0_584 = arith.constant 0 : index
    %1173 = vector.load %arg6[%c97, %c0_584] : memref<128x128xf32, #tpu.memory_space<vmem>>, vector<1x128xf32>
    tpu.vector_store %arg6[%c97, %c0_584], %1172 {strides = array<i32>} : memref<128x128xf32, #tpu.memory_space<vmem>>, vector<1x128xf32>,
    %1174 = arith.index_cast %1170 : i32 to index
    %c0_585 = arith.constant 0 : index
    %1175 = vector.load %arg4[%1174, %c0_585] : memref<96x128xf32, #tpu.memory_space<vmem>>, vector<1x128xf32>
    %c97_586 = arith.constant 97 : index
    %c0_587 = arith.constant 0 : index
    %1176 = vector.load %arg7[%c97_586, %c0_587] : memref<128x128xf32, #tpu.memory_space<vmem>>, vector<1x128xf32>
    tpu.vector_store %arg7[%c97_586, %c0_587], %1175 {strides = array<i32>} : memref<128x128xf32, #tpu.memory_space<vmem>>, vector<1x128xf32>,
    %c98_i32 = arith.constant 98 : i32
    %1177 = arith.addi %0, %c98_i32 : i32
    %1178 = arith.index_cast %1177 : i32 to index
    %1179 = memref.load %arg1[%1178] : memref<256xi32, #tpu.memory_space<smem>>
    %c98_i32_588 = arith.constant 98 : i32
    %1180 = arith.addi %0, %c98_i32_588 : i32
    %1181 = arith.index_cast %1180 : i32 to index
    %1182 = memref.load %arg2[%1181] : memref<256xi32, #tpu.memory_space<smem>>
    %1183 = arith.index_cast %1179 : i32 to index
    %c0_589 = arith.constant 0 : index
    %1184 = vector.load %arg3[%1183, %c0_589] : memref<64x128xf32, #tpu.memory_space<vmem>>, vector<1x128xf32>
    %c98 = arith.constant 98 : index
    %c0_590 = arith.constant 0 : index
    %1185 = vector.load %arg6[%c98, %c0_590] : memref<128x128xf32, #tpu.memory_space<vmem>>, vector<1x128xf32>
    tpu.vector_store %arg6[%c98, %c0_590], %1184 {strides = array<i32>} : memref<128x128xf32, #tpu.memory_space<vmem>>, vector<1x128xf32>,
    %1186 = arith.index_cast %1182 : i32 to index
    %c0_591 = arith.constant 0 : index
    %1187 = vector.load %arg4[%1186, %c0_591] : memref<96x128xf32, #tpu.memory_space<vmem>>, vector<1x128xf32>
    %c98_592 = arith.constant 98 : index
    %c0_593 = arith.constant 0 : index
    %1188 = vector.load %arg7[%c98_592, %c0_593] : memref<128x128xf32, #tpu.memory_space<vmem>>, vector<1x128xf32>
    tpu.vector_store %arg7[%c98_592, %c0_593], %1187 {strides = array<i32>} : memref<128x128xf32, #tpu.memory_space<vmem>>, vector<1x128xf32>,
    %c99_i32 = arith.constant 99 : i32
    %1189 = arith.addi %0, %c99_i32 : i32
    %1190 = arith.index_cast %1189 : i32 to index
    %1191 = memref.load %arg1[%1190] : memref<256xi32, #tpu.memory_space<smem>>
    %c99_i32_594 = arith.constant 99 : i32
    %1192 = arith.addi %0, %c99_i32_594 : i32
    %1193 = arith.index_cast %1192 : i32 to index
    %1194 = memref.load %arg2[%1193] : memref<256xi32, #tpu.memory_space<smem>>
    %1195 = arith.index_cast %1191 : i32 to index
    %c0_595 = arith.constant 0 : index
    %1196 = vector.load %arg3[%1195, %c0_595] : memref<64x128xf32, #tpu.memory_space<vmem>>, vector<1x128xf32>
    %c99 = arith.constant 99 : index
    %c0_596 = arith.constant 0 : index
    %1197 = vector.load %arg6[%c99, %c0_596] : memref<128x128xf32, #tpu.memory_space<vmem>>, vector<1x128xf32>
    tpu.vector_store %arg6[%c99, %c0_596], %1196 {strides = array<i32>} : memref<128x128xf32, #tpu.memory_space<vmem>>, vector<1x128xf32>,
    %1198 = arith.index_cast %1194 : i32 to index
    %c0_597 = arith.constant 0 : index
    %1199 = vector.load %arg4[%1198, %c0_597] : memref<96x128xf32, #tpu.memory_space<vmem>>, vector<1x128xf32>
    %c99_598 = arith.constant 99 : index
    %c0_599 = arith.constant 0 : index
    %1200 = vector.load %arg7[%c99_598, %c0_599] : memref<128x128xf32, #tpu.memory_space<vmem>>, vector<1x128xf32>
    tpu.vector_store %arg7[%c99_598, %c0_599], %1199 {strides = array<i32>} : memref<128x128xf32, #tpu.memory_space<vmem>>, vector<1x128xf32>,
    %c100_i32 = arith.constant 100 : i32
    %1201 = arith.addi %0, %c100_i32 : i32
    %1202 = arith.index_cast %1201 : i32 to index
    %1203 = memref.load %arg1[%1202] : memref<256xi32, #tpu.memory_space<smem>>
    %c100_i32_600 = arith.constant 100 : i32
    %1204 = arith.addi %0, %c100_i32_600 : i32
    %1205 = arith.index_cast %1204 : i32 to index
    %1206 = memref.load %arg2[%1205] : memref<256xi32, #tpu.memory_space<smem>>
    %1207 = arith.index_cast %1203 : i32 to index
    %c0_601 = arith.constant 0 : index
    %1208 = vector.load %arg3[%1207, %c0_601] : memref<64x128xf32, #tpu.memory_space<vmem>>, vector<1x128xf32>
    %c100 = arith.constant 100 : index
    %c0_602 = arith.constant 0 : index
    %1209 = vector.load %arg6[%c100, %c0_602] : memref<128x128xf32, #tpu.memory_space<vmem>>, vector<1x128xf32>
    tpu.vector_store %arg6[%c100, %c0_602], %1208 {strides = array<i32>} : memref<128x128xf32, #tpu.memory_space<vmem>>, vector<1x128xf32>,
    %1210 = arith.index_cast %1206 : i32 to index
    %c0_603 = arith.constant 0 : index
    %1211 = vector.load %arg4[%1210, %c0_603] : memref<96x128xf32, #tpu.memory_space<vmem>>, vector<1x128xf32>
    %c100_604 = arith.constant 100 : index
    %c0_605 = arith.constant 0 : index
    %1212 = vector.load %arg7[%c100_604, %c0_605] : memref<128x128xf32, #tpu.memory_space<vmem>>, vector<1x128xf32>
    tpu.vector_store %arg7[%c100_604, %c0_605], %1211 {strides = array<i32>} : memref<128x128xf32, #tpu.memory_space<vmem>>, vector<1x128xf32>,
    %c101_i32 = arith.constant 101 : i32
    %1213 = arith.addi %0, %c101_i32 : i32
    %1214 = arith.index_cast %1213 : i32 to index
    %1215 = memref.load %arg1[%1214] : memref<256xi32, #tpu.memory_space<smem>>
    %c101_i32_606 = arith.constant 101 : i32
    %1216 = arith.addi %0, %c101_i32_606 : i32
    %1217 = arith.index_cast %1216 : i32 to index
    %1218 = memref.load %arg2[%1217] : memref<256xi32, #tpu.memory_space<smem>>
    %1219 = arith.index_cast %1215 : i32 to index
    %c0_607 = arith.constant 0 : index
    %1220 = vector.load %arg3[%1219, %c0_607] : memref<64x128xf32, #tpu.memory_space<vmem>>, vector<1x128xf32>
    %c101 = arith.constant 101 : index
    %c0_608 = arith.constant 0 : index
    %1221 = vector.load %arg6[%c101, %c0_608] : memref<128x128xf32, #tpu.memory_space<vmem>>, vector<1x128xf32>
    tpu.vector_store %arg6[%c101, %c0_608], %1220 {strides = array<i32>} : memref<128x128xf32, #tpu.memory_space<vmem>>, vector<1x128xf32>,
    %1222 = arith.index_cast %1218 : i32 to index
    %c0_609 = arith.constant 0 : index
    %1223 = vector.load %arg4[%1222, %c0_609] : memref<96x128xf32, #tpu.memory_space<vmem>>, vector<1x128xf32>
    %c101_610 = arith.constant 101 : index
    %c0_611 = arith.constant 0 : index
    %1224 = vector.load %arg7[%c101_610, %c0_611] : memref<128x128xf32, #tpu.memory_space<vmem>>, vector<1x128xf32>
    tpu.vector_store %arg7[%c101_610, %c0_611], %1223 {strides = array<i32>} : memref<128x128xf32, #tpu.memory_space<vmem>>, vector<1x128xf32>,
    %c102_i32 = arith.constant 102 : i32
    %1225 = arith.addi %0, %c102_i32 : i32
    %1226 = arith.index_cast %1225 : i32 to index
    %1227 = memref.load %arg1[%1226] : memref<256xi32, #tpu.memory_space<smem>>
    %c102_i32_612 = arith.constant 102 : i32
    %1228 = arith.addi %0, %c102_i32_612 : i32
    %1229 = arith.index_cast %1228 : i32 to index
    %1230 = memref.load %arg2[%1229] : memref<256xi32, #tpu.memory_space<smem>>
    %1231 = arith.index_cast %1227 : i32 to index
    %c0_613 = arith.constant 0 : index
    %1232 = vector.load %arg3[%1231, %c0_613] : memref<64x128xf32, #tpu.memory_space<vmem>>, vector<1x128xf32>
    %c102 = arith.constant 102 : index
    %c0_614 = arith.constant 0 : index
    %1233 = vector.load %arg6[%c102, %c0_614] : memref<128x128xf32, #tpu.memory_space<vmem>>, vector<1x128xf32>
    tpu.vector_store %arg6[%c102, %c0_614], %1232 {strides = array<i32>} : memref<128x128xf32, #tpu.memory_space<vmem>>, vector<1x128xf32>,
    %1234 = arith.index_cast %1230 : i32 to index
    %c0_615 = arith.constant 0 : index
    %1235 = vector.load %arg4[%1234, %c0_615] : memref<96x128xf32, #tpu.memory_space<vmem>>, vector<1x128xf32>
    %c102_616 = arith.constant 102 : index
    %c0_617 = arith.constant 0 : index
    %1236 = vector.load %arg7[%c102_616, %c0_617] : memref<128x128xf32, #tpu.memory_space<vmem>>, vector<1x128xf32>
    tpu.vector_store %arg7[%c102_616, %c0_617], %1235 {strides = array<i32>} : memref<128x128xf32, #tpu.memory_space<vmem>>, vector<1x128xf32>,
    %c103_i32 = arith.constant 103 : i32
    %1237 = arith.addi %0, %c103_i32 : i32
    %1238 = arith.index_cast %1237 : i32 to index
    %1239 = memref.load %arg1[%1238] : memref<256xi32, #tpu.memory_space<smem>>
    %c103_i32_618 = arith.constant 103 : i32
    %1240 = arith.addi %0, %c103_i32_618 : i32
    %1241 = arith.index_cast %1240 : i32 to index
    %1242 = memref.load %arg2[%1241] : memref<256xi32, #tpu.memory_space<smem>>
    %1243 = arith.index_cast %1239 : i32 to index
    %c0_619 = arith.constant 0 : index
    %1244 = vector.load %arg3[%1243, %c0_619] : memref<64x128xf32, #tpu.memory_space<vmem>>, vector<1x128xf32>
    %c103 = arith.constant 103 : index
    %c0_620 = arith.constant 0 : index
    %1245 = vector.load %arg6[%c103, %c0_620] : memref<128x128xf32, #tpu.memory_space<vmem>>, vector<1x128xf32>
    tpu.vector_store %arg6[%c103, %c0_620], %1244 {strides = array<i32>} : memref<128x128xf32, #tpu.memory_space<vmem>>, vector<1x128xf32>,
    %1246 = arith.index_cast %1242 : i32 to index
    %c0_621 = arith.constant 0 : index
    %1247 = vector.load %arg4[%1246, %c0_621] : memref<96x128xf32, #tpu.memory_space<vmem>>, vector<1x128xf32>
    %c103_622 = arith.constant 103 : index
    %c0_623 = arith.constant 0 : index
    %1248 = vector.load %arg7[%c103_622, %c0_623] : memref<128x128xf32, #tpu.memory_space<vmem>>, vector<1x128xf32>
    tpu.vector_store %arg7[%c103_622, %c0_623], %1247 {strides = array<i32>} : memref<128x128xf32, #tpu.memory_space<vmem>>, vector<1x128xf32>,
    %c104_i32 = arith.constant 104 : i32
    %1249 = arith.addi %0, %c104_i32 : i32
    %1250 = arith.index_cast %1249 : i32 to index
    %1251 = memref.load %arg1[%1250] : memref<256xi32, #tpu.memory_space<smem>>
    %c104_i32_624 = arith.constant 104 : i32
    %1252 = arith.addi %0, %c104_i32_624 : i32
    %1253 = arith.index_cast %1252 : i32 to index
    %1254 = memref.load %arg2[%1253] : memref<256xi32, #tpu.memory_space<smem>>
    %1255 = arith.index_cast %1251 : i32 to index
    %c0_625 = arith.constant 0 : index
    %1256 = vector.load %arg3[%1255, %c0_625] : memref<64x128xf32, #tpu.memory_space<vmem>>, vector<1x128xf32>
    %c104 = arith.constant 104 : index
    %c0_626 = arith.constant 0 : index
    %1257 = vector.load %arg6[%c104, %c0_626] : memref<128x128xf32, #tpu.memory_space<vmem>>, vector<1x128xf32>
    tpu.vector_store %arg6[%c104, %c0_626], %1256 {strides = array<i32>} : memref<128x128xf32, #tpu.memory_space<vmem>>, vector<1x128xf32>,
    %1258 = arith.index_cast %1254 : i32 to index
    %c0_627 = arith.constant 0 : index
    %1259 = vector.load %arg4[%1258, %c0_627] : memref<96x128xf32, #tpu.memory_space<vmem>>, vector<1x128xf32>
    %c104_628 = arith.constant 104 : index
    %c0_629 = arith.constant 0 : index
    %1260 = vector.load %arg7[%c104_628, %c0_629] : memref<128x128xf32, #tpu.memory_space<vmem>>, vector<1x128xf32>
    tpu.vector_store %arg7[%c104_628, %c0_629], %1259 {strides = array<i32>} : memref<128x128xf32, #tpu.memory_space<vmem>>, vector<1x128xf32>,
    %c105_i32 = arith.constant 105 : i32
    %1261 = arith.addi %0, %c105_i32 : i32
    %1262 = arith.index_cast %1261 : i32 to index
    %1263 = memref.load %arg1[%1262] : memref<256xi32, #tpu.memory_space<smem>>
    %c105_i32_630 = arith.constant 105 : i32
    %1264 = arith.addi %0, %c105_i32_630 : i32
    %1265 = arith.index_cast %1264 : i32 to index
    %1266 = memref.load %arg2[%1265] : memref<256xi32, #tpu.memory_space<smem>>
    %1267 = arith.index_cast %1263 : i32 to index
    %c0_631 = arith.constant 0 : index
    %1268 = vector.load %arg3[%1267, %c0_631] : memref<64x128xf32, #tpu.memory_space<vmem>>, vector<1x128xf32>
    %c105 = arith.constant 105 : index
    %c0_632 = arith.constant 0 : index
    %1269 = vector.load %arg6[%c105, %c0_632] : memref<128x128xf32, #tpu.memory_space<vmem>>, vector<1x128xf32>
    tpu.vector_store %arg6[%c105, %c0_632], %1268 {strides = array<i32>} : memref<128x128xf32, #tpu.memory_space<vmem>>, vector<1x128xf32>,
    %1270 = arith.index_cast %1266 : i32 to index
    %c0_633 = arith.constant 0 : index
    %1271 = vector.load %arg4[%1270, %c0_633] : memref<96x128xf32, #tpu.memory_space<vmem>>, vector<1x128xf32>
    %c105_634 = arith.constant 105 : index
    %c0_635 = arith.constant 0 : index
    %1272 = vector.load %arg7[%c105_634, %c0_635] : memref<128x128xf32, #tpu.memory_space<vmem>>, vector<1x128xf32>
    tpu.vector_store %arg7[%c105_634, %c0_635], %1271 {strides = array<i32>} : memref<128x128xf32, #tpu.memory_space<vmem>>, vector<1x128xf32>,
    %c106_i32 = arith.constant 106 : i32
    %1273 = arith.addi %0, %c106_i32 : i32
    %1274 = arith.index_cast %1273 : i32 to index
    %1275 = memref.load %arg1[%1274] : memref<256xi32, #tpu.memory_space<smem>>
    %c106_i32_636 = arith.constant 106 : i32
    %1276 = arith.addi %0, %c106_i32_636 : i32
    %1277 = arith.index_cast %1276 : i32 to index
    %1278 = memref.load %arg2[%1277] : memref<256xi32, #tpu.memory_space<smem>>
    %1279 = arith.index_cast %1275 : i32 to index
    %c0_637 = arith.constant 0 : index
    %1280 = vector.load %arg3[%1279, %c0_637] : memref<64x128xf32, #tpu.memory_space<vmem>>, vector<1x128xf32>
    %c106 = arith.constant 106 : index
    %c0_638 = arith.constant 0 : index
    %1281 = vector.load %arg6[%c106, %c0_638] : memref<128x128xf32, #tpu.memory_space<vmem>>, vector<1x128xf32>
    tpu.vector_store %arg6[%c106, %c0_638], %1280 {strides = array<i32>} : memref<128x128xf32, #tpu.memory_space<vmem>>, vector<1x128xf32>,
    %1282 = arith.index_cast %1278 : i32 to index
    %c0_639 = arith.constant 0 : index
    %1283 = vector.load %arg4[%1282, %c0_639] : memref<96x128xf32, #tpu.memory_space<vmem>>, vector<1x128xf32>
    %c106_640 = arith.constant 106 : index
    %c0_641 = arith.constant 0 : index
    %1284 = vector.load %arg7[%c106_640, %c0_641] : memref<128x128xf32, #tpu.memory_space<vmem>>, vector<1x128xf32>
    tpu.vector_store %arg7[%c106_640, %c0_641], %1283 {strides = array<i32>} : memref<128x128xf32, #tpu.memory_space<vmem>>, vector<1x128xf32>,
    %c107_i32 = arith.constant 107 : i32
    %1285 = arith.addi %0, %c107_i32 : i32
    %1286 = arith.index_cast %1285 : i32 to index
    %1287 = memref.load %arg1[%1286] : memref<256xi32, #tpu.memory_space<smem>>
    %c107_i32_642 = arith.constant 107 : i32
    %1288 = arith.addi %0, %c107_i32_642 : i32
    %1289 = arith.index_cast %1288 : i32 to index
    %1290 = memref.load %arg2[%1289] : memref<256xi32, #tpu.memory_space<smem>>
    %1291 = arith.index_cast %1287 : i32 to index
    %c0_643 = arith.constant 0 : index
    %1292 = vector.load %arg3[%1291, %c0_643] : memref<64x128xf32, #tpu.memory_space<vmem>>, vector<1x128xf32>
    %c107 = arith.constant 107 : index
    %c0_644 = arith.constant 0 : index
    %1293 = vector.load %arg6[%c107, %c0_644] : memref<128x128xf32, #tpu.memory_space<vmem>>, vector<1x128xf32>
    tpu.vector_store %arg6[%c107, %c0_644], %1292 {strides = array<i32>} : memref<128x128xf32, #tpu.memory_space<vmem>>, vector<1x128xf32>,
    %1294 = arith.index_cast %1290 : i32 to index
    %c0_645 = arith.constant 0 : index
    %1295 = vector.load %arg4[%1294, %c0_645] : memref<96x128xf32, #tpu.memory_space<vmem>>, vector<1x128xf32>
    %c107_646 = arith.constant 107 : index
    %c0_647 = arith.constant 0 : index
    %1296 = vector.load %arg7[%c107_646, %c0_647] : memref<128x128xf32, #tpu.memory_space<vmem>>, vector<1x128xf32>
    tpu.vector_store %arg7[%c107_646, %c0_647], %1295 {strides = array<i32>} : memref<128x128xf32, #tpu.memory_space<vmem>>, vector<1x128xf32>,
    %c108_i32 = arith.constant 108 : i32
    %1297 = arith.addi %0, %c108_i32 : i32
    %1298 = arith.index_cast %1297 : i32 to index
    %1299 = memref.load %arg1[%1298] : memref<256xi32, #tpu.memory_space<smem>>
    %c108_i32_648 = arith.constant 108 : i32
    %1300 = arith.addi %0, %c108_i32_648 : i32
    %1301 = arith.index_cast %1300 : i32 to index
    %1302 = memref.load %arg2[%1301] : memref<256xi32, #tpu.memory_space<smem>>
    %1303 = arith.index_cast %1299 : i32 to index
    %c0_649 = arith.constant 0 : index
    %1304 = vector.load %arg3[%1303, %c0_649] : memref<64x128xf32, #tpu.memory_space<vmem>>, vector<1x128xf32>
    %c108 = arith.constant 108 : index
    %c0_650 = arith.constant 0 : index
    %1305 = vector.load %arg6[%c108, %c0_650] : memref<128x128xf32, #tpu.memory_space<vmem>>, vector<1x128xf32>
    tpu.vector_store %arg6[%c108, %c0_650], %1304 {strides = array<i32>} : memref<128x128xf32, #tpu.memory_space<vmem>>, vector<1x128xf32>,
    %1306 = arith.index_cast %1302 : i32 to index
    %c0_651 = arith.constant 0 : index
    %1307 = vector.load %arg4[%1306, %c0_651] : memref<96x128xf32, #tpu.memory_space<vmem>>, vector<1x128xf32>
    %c108_652 = arith.constant 108 : index
    %c0_653 = arith.constant 0 : index
    %1308 = vector.load %arg7[%c108_652, %c0_653] : memref<128x128xf32, #tpu.memory_space<vmem>>, vector<1x128xf32>
    tpu.vector_store %arg7[%c108_652, %c0_653], %1307 {strides = array<i32>} : memref<128x128xf32, #tpu.memory_space<vmem>>, vector<1x128xf32>,
    %c109_i32 = arith.constant 109 : i32
    %1309 = arith.addi %0, %c109_i32 : i32
    %1310 = arith.index_cast %1309 : i32 to index
    %1311 = memref.load %arg1[%1310] : memref<256xi32, #tpu.memory_space<smem>>
    %c109_i32_654 = arith.constant 109 : i32
    %1312 = arith.addi %0, %c109_i32_654 : i32
    %1313 = arith.index_cast %1312 : i32 to index
    %1314 = memref.load %arg2[%1313] : memref<256xi32, #tpu.memory_space<smem>>
    %1315 = arith.index_cast %1311 : i32 to index
    %c0_655 = arith.constant 0 : index
    %1316 = vector.load %arg3[%1315, %c0_655] : memref<64x128xf32, #tpu.memory_space<vmem>>, vector<1x128xf32>
    %c109 = arith.constant 109 : index
    %c0_656 = arith.constant 0 : index
    %1317 = vector.load %arg6[%c109, %c0_656] : memref<128x128xf32, #tpu.memory_space<vmem>>, vector<1x128xf32>
    tpu.vector_store %arg6[%c109, %c0_656], %1316 {strides = array<i32>} : memref<128x128xf32, #tpu.memory_space<vmem>>, vector<1x128xf32>,
    %1318 = arith.index_cast %1314 : i32 to index
    %c0_657 = arith.constant 0 : index
    %1319 = vector.load %arg4[%1318, %c0_657] : memref<96x128xf32, #tpu.memory_space<vmem>>, vector<1x128xf32>
    %c109_658 = arith.constant 109 : index
    %c0_659 = arith.constant 0 : index
    %1320 = vector.load %arg7[%c109_658, %c0_659] : memref<128x128xf32, #tpu.memory_space<vmem>>, vector<1x128xf32>
    tpu.vector_store %arg7[%c109_658, %c0_659], %1319 {strides = array<i32>} : memref<128x128xf32, #tpu.memory_space<vmem>>, vector<1x128xf32>,
    %c110_i32 = arith.constant 110 : i32
    %1321 = arith.addi %0, %c110_i32 : i32
    %1322 = arith.index_cast %1321 : i32 to index
    %1323 = memref.load %arg1[%1322] : memref<256xi32, #tpu.memory_space<smem>>
    %c110_i32_660 = arith.constant 110 : i32
    %1324 = arith.addi %0, %c110_i32_660 : i32
    %1325 = arith.index_cast %1324 : i32 to index
    %1326 = memref.load %arg2[%1325] : memref<256xi32, #tpu.memory_space<smem>>
    %1327 = arith.index_cast %1323 : i32 to index
    %c0_661 = arith.constant 0 : index
    %1328 = vector.load %arg3[%1327, %c0_661] : memref<64x128xf32, #tpu.memory_space<vmem>>, vector<1x128xf32>
    %c110 = arith.constant 110 : index
    %c0_662 = arith.constant 0 : index
    %1329 = vector.load %arg6[%c110, %c0_662] : memref<128x128xf32, #tpu.memory_space<vmem>>, vector<1x128xf32>
    tpu.vector_store %arg6[%c110, %c0_662], %1328 {strides = array<i32>} : memref<128x128xf32, #tpu.memory_space<vmem>>, vector<1x128xf32>,
    %1330 = arith.index_cast %1326 : i32 to index
    %c0_663 = arith.constant 0 : index
    %1331 = vector.load %arg4[%1330, %c0_663] : memref<96x128xf32, #tpu.memory_space<vmem>>, vector<1x128xf32>
    %c110_664 = arith.constant 110 : index
    %c0_665 = arith.constant 0 : index
    %1332 = vector.load %arg7[%c110_664, %c0_665] : memref<128x128xf32, #tpu.memory_space<vmem>>, vector<1x128xf32>
    tpu.vector_store %arg7[%c110_664, %c0_665], %1331 {strides = array<i32>} : memref<128x128xf32, #tpu.memory_space<vmem>>, vector<1x128xf32>,
    %c111_i32 = arith.constant 111 : i32
    %1333 = arith.addi %0, %c111_i32 : i32
    %1334 = arith.index_cast %1333 : i32 to index
    %1335 = memref.load %arg1[%1334] : memref<256xi32, #tpu.memory_space<smem>>
    %c111_i32_666 = arith.constant 111 : i32
    %1336 = arith.addi %0, %c111_i32_666 : i32
    %1337 = arith.index_cast %1336 : i32 to index
    %1338 = memref.load %arg2[%1337] : memref<256xi32, #tpu.memory_space<smem>>
    %1339 = arith.index_cast %1335 : i32 to index
    %c0_667 = arith.constant 0 : index
    %1340 = vector.load %arg3[%1339, %c0_667] : memref<64x128xf32, #tpu.memory_space<vmem>>, vector<1x128xf32>
    %c111 = arith.constant 111 : index
    %c0_668 = arith.constant 0 : index
    %1341 = vector.load %arg6[%c111, %c0_668] : memref<128x128xf32, #tpu.memory_space<vmem>>, vector<1x128xf32>
    tpu.vector_store %arg6[%c111, %c0_668], %1340 {strides = array<i32>} : memref<128x128xf32, #tpu.memory_space<vmem>>, vector<1x128xf32>,
    %1342 = arith.index_cast %1338 : i32 to index
    %c0_669 = arith.constant 0 : index
    %1343 = vector.load %arg4[%1342, %c0_669] : memref<96x128xf32, #tpu.memory_space<vmem>>, vector<1x128xf32>
    %c111_670 = arith.constant 111 : index
    %c0_671 = arith.constant 0 : index
    %1344 = vector.load %arg7[%c111_670, %c0_671] : memref<128x128xf32, #tpu.memory_space<vmem>>, vector<1x128xf32>
    tpu.vector_store %arg7[%c111_670, %c0_671], %1343 {strides = array<i32>} : memref<128x128xf32, #tpu.memory_space<vmem>>, vector<1x128xf32>,
    %c112_i32 = arith.constant 112 : i32
    %1345 = arith.addi %0, %c112_i32 : i32
    %1346 = arith.index_cast %1345 : i32 to index
    %1347 = memref.load %arg1[%1346] : memref<256xi32, #tpu.memory_space<smem>>
    %c112_i32_672 = arith.constant 112 : i32
    %1348 = arith.addi %0, %c112_i32_672 : i32
    %1349 = arith.index_cast %1348 : i32 to index
    %1350 = memref.load %arg2[%1349] : memref<256xi32, #tpu.memory_space<smem>>
    %1351 = arith.index_cast %1347 : i32 to index
    %c0_673 = arith.constant 0 : index
    %1352 = vector.load %arg3[%1351, %c0_673] : memref<64x128xf32, #tpu.memory_space<vmem>>, vector<1x128xf32>
    %c112 = arith.constant 112 : index
    %c0_674 = arith.constant 0 : index
    %1353 = vector.load %arg6[%c112, %c0_674] : memref<128x128xf32, #tpu.memory_space<vmem>>, vector<1x128xf32>
    tpu.vector_store %arg6[%c112, %c0_674], %1352 {strides = array<i32>} : memref<128x128xf32, #tpu.memory_space<vmem>>, vector<1x128xf32>,
    %1354 = arith.index_cast %1350 : i32 to index
    %c0_675 = arith.constant 0 : index
    %1355 = vector.load %arg4[%1354, %c0_675] : memref<96x128xf32, #tpu.memory_space<vmem>>, vector<1x128xf32>
    %c112_676 = arith.constant 112 : index
    %c0_677 = arith.constant 0 : index
    %1356 = vector.load %arg7[%c112_676, %c0_677] : memref<128x128xf32, #tpu.memory_space<vmem>>, vector<1x128xf32>
    tpu.vector_store %arg7[%c112_676, %c0_677], %1355 {strides = array<i32>} : memref<128x128xf32, #tpu.memory_space<vmem>>, vector<1x128xf32>,
    %c113_i32 = arith.constant 113 : i32
    %1357 = arith.addi %0, %c113_i32 : i32
    %1358 = arith.index_cast %1357 : i32 to index
    %1359 = memref.load %arg1[%1358] : memref<256xi32, #tpu.memory_space<smem>>
    %c113_i32_678 = arith.constant 113 : i32
    %1360 = arith.addi %0, %c113_i32_678 : i32
    %1361 = arith.index_cast %1360 : i32 to index
    %1362 = memref.load %arg2[%1361] : memref<256xi32, #tpu.memory_space<smem>>
    %1363 = arith.index_cast %1359 : i32 to index
    %c0_679 = arith.constant 0 : index
    %1364 = vector.load %arg3[%1363, %c0_679] : memref<64x128xf32, #tpu.memory_space<vmem>>, vector<1x128xf32>
    %c113 = arith.constant 113 : index
    %c0_680 = arith.constant 0 : index
    %1365 = vector.load %arg6[%c113, %c0_680] : memref<128x128xf32, #tpu.memory_space<vmem>>, vector<1x128xf32>
    tpu.vector_store %arg6[%c113, %c0_680], %1364 {strides = array<i32>} : memref<128x128xf32, #tpu.memory_space<vmem>>, vector<1x128xf32>,
    %1366 = arith.index_cast %1362 : i32 to index
    %c0_681 = arith.constant 0 : index
    %1367 = vector.load %arg4[%1366, %c0_681] : memref<96x128xf32, #tpu.memory_space<vmem>>, vector<1x128xf32>
    %c113_682 = arith.constant 113 : index
    %c0_683 = arith.constant 0 : index
    %1368 = vector.load %arg7[%c113_682, %c0_683] : memref<128x128xf32, #tpu.memory_space<vmem>>, vector<1x128xf32>
    tpu.vector_store %arg7[%c113_682, %c0_683], %1367 {strides = array<i32>} : memref<128x128xf32, #tpu.memory_space<vmem>>, vector<1x128xf32>,
    %c114_i32 = arith.constant 114 : i32
    %1369 = arith.addi %0, %c114_i32 : i32
    %1370 = arith.index_cast %1369 : i32 to index
    %1371 = memref.load %arg1[%1370] : memref<256xi32, #tpu.memory_space<smem>>
    %c114_i32_684 = arith.constant 114 : i32
    %1372 = arith.addi %0, %c114_i32_684 : i32
    %1373 = arith.index_cast %1372 : i32 to index
    %1374 = memref.load %arg2[%1373] : memref<256xi32, #tpu.memory_space<smem>>
    %1375 = arith.index_cast %1371 : i32 to index
    %c0_685 = arith.constant 0 : index
    %1376 = vector.load %arg3[%1375, %c0_685] : memref<64x128xf32, #tpu.memory_space<vmem>>, vector<1x128xf32>
    %c114 = arith.constant 114 : index
    %c0_686 = arith.constant 0 : index
    %1377 = vector.load %arg6[%c114, %c0_686] : memref<128x128xf32, #tpu.memory_space<vmem>>, vector<1x128xf32>
    tpu.vector_store %arg6[%c114, %c0_686], %1376 {strides = array<i32>} : memref<128x128xf32, #tpu.memory_space<vmem>>, vector<1x128xf32>,
    %1378 = arith.index_cast %1374 : i32 to index
    %c0_687 = arith.constant 0 : index
    %1379 = vector.load %arg4[%1378, %c0_687] : memref<96x128xf32, #tpu.memory_space<vmem>>, vector<1x128xf32>
    %c114_688 = arith.constant 114 : index
    %c0_689 = arith.constant 0 : index
    %1380 = vector.load %arg7[%c114_688, %c0_689] : memref<128x128xf32, #tpu.memory_space<vmem>>, vector<1x128xf32>
    tpu.vector_store %arg7[%c114_688, %c0_689], %1379 {strides = array<i32>} : memref<128x128xf32, #tpu.memory_space<vmem>>, vector<1x128xf32>,
    %c115_i32 = arith.constant 115 : i32
    %1381 = arith.addi %0, %c115_i32 : i32
    %1382 = arith.index_cast %1381 : i32 to index
    %1383 = memref.load %arg1[%1382] : memref<256xi32, #tpu.memory_space<smem>>
    %c115_i32_690 = arith.constant 115 : i32
    %1384 = arith.addi %0, %c115_i32_690 : i32
    %1385 = arith.index_cast %1384 : i32 to index
    %1386 = memref.load %arg2[%1385] : memref<256xi32, #tpu.memory_space<smem>>
    %1387 = arith.index_cast %1383 : i32 to index
    %c0_691 = arith.constant 0 : index
    %1388 = vector.load %arg3[%1387, %c0_691] : memref<64x128xf32, #tpu.memory_space<vmem>>, vector<1x128xf32>
    %c115 = arith.constant 115 : index
    %c0_692 = arith.constant 0 : index
    %1389 = vector.load %arg6[%c115, %c0_692] : memref<128x128xf32, #tpu.memory_space<vmem>>, vector<1x128xf32>
    tpu.vector_store %arg6[%c115, %c0_692], %1388 {strides = array<i32>} : memref<128x128xf32, #tpu.memory_space<vmem>>, vector<1x128xf32>,
    %1390 = arith.index_cast %1386 : i32 to index
    %c0_693 = arith.constant 0 : index
    %1391 = vector.load %arg4[%1390, %c0_693] : memref<96x128xf32, #tpu.memory_space<vmem>>, vector<1x128xf32>
    %c115_694 = arith.constant 115 : index
    %c0_695 = arith.constant 0 : index
    %1392 = vector.load %arg7[%c115_694, %c0_695] : memref<128x128xf32, #tpu.memory_space<vmem>>, vector<1x128xf32>
    tpu.vector_store %arg7[%c115_694, %c0_695], %1391 {strides = array<i32>} : memref<128x128xf32, #tpu.memory_space<vmem>>, vector<1x128xf32>,
    %c116_i32 = arith.constant 116 : i32
    %1393 = arith.addi %0, %c116_i32 : i32
    %1394 = arith.index_cast %1393 : i32 to index
    %1395 = memref.load %arg1[%1394] : memref<256xi32, #tpu.memory_space<smem>>
    %c116_i32_696 = arith.constant 116 : i32
    %1396 = arith.addi %0, %c116_i32_696 : i32
    %1397 = arith.index_cast %1396 : i32 to index
    %1398 = memref.load %arg2[%1397] : memref<256xi32, #tpu.memory_space<smem>>
    %1399 = arith.index_cast %1395 : i32 to index
    %c0_697 = arith.constant 0 : index
    %1400 = vector.load %arg3[%1399, %c0_697] : memref<64x128xf32, #tpu.memory_space<vmem>>, vector<1x128xf32>
    %c116 = arith.constant 116 : index
    %c0_698 = arith.constant 0 : index
    %1401 = vector.load %arg6[%c116, %c0_698] : memref<128x128xf32, #tpu.memory_space<vmem>>, vector<1x128xf32>
    tpu.vector_store %arg6[%c116, %c0_698], %1400 {strides = array<i32>} : memref<128x128xf32, #tpu.memory_space<vmem>>, vector<1x128xf32>,
    %1402 = arith.index_cast %1398 : i32 to index
    %c0_699 = arith.constant 0 : index
    %1403 = vector.load %arg4[%1402, %c0_699] : memref<96x128xf32, #tpu.memory_space<vmem>>, vector<1x128xf32>
    %c116_700 = arith.constant 116 : index
    %c0_701 = arith.constant 0 : index
    %1404 = vector.load %arg7[%c116_700, %c0_701] : memref<128x128xf32, #tpu.memory_space<vmem>>, vector<1x128xf32>
    tpu.vector_store %arg7[%c116_700, %c0_701], %1403 {strides = array<i32>} : memref<128x128xf32, #tpu.memory_space<vmem>>, vector<1x128xf32>,
    %c117_i32 = arith.constant 117 : i32
    %1405 = arith.addi %0, %c117_i32 : i32
    %1406 = arith.index_cast %1405 : i32 to index
    %1407 = memref.load %arg1[%1406] : memref<256xi32, #tpu.memory_space<smem>>
    %c117_i32_702 = arith.constant 117 : i32
    %1408 = arith.addi %0, %c117_i32_702 : i32
    %1409 = arith.index_cast %1408 : i32 to index
    %1410 = memref.load %arg2[%1409] : memref<256xi32, #tpu.memory_space<smem>>
    %1411 = arith.index_cast %1407 : i32 to index
    %c0_703 = arith.constant 0 : index
    %1412 = vector.load %arg3[%1411, %c0_703] : memref<64x128xf32, #tpu.memory_space<vmem>>, vector<1x128xf32>
    %c117 = arith.constant 117 : index
    %c0_704 = arith.constant 0 : index
    %1413 = vector.load %arg6[%c117, %c0_704] : memref<128x128xf32, #tpu.memory_space<vmem>>, vector<1x128xf32>
    tpu.vector_store %arg6[%c117, %c0_704], %1412 {strides = array<i32>} : memref<128x128xf32, #tpu.memory_space<vmem>>, vector<1x128xf32>,
    %1414 = arith.index_cast %1410 : i32 to index
    %c0_705 = arith.constant 0 : index
    %1415 = vector.load %arg4[%1414, %c0_705] : memref<96x128xf32, #tpu.memory_space<vmem>>, vector<1x128xf32>
    %c117_706 = arith.constant 117 : index
    %c0_707 = arith.constant 0 : index
    %1416 = vector.load %arg7[%c117_706, %c0_707] : memref<128x128xf32, #tpu.memory_space<vmem>>, vector<1x128xf32>
    tpu.vector_store %arg7[%c117_706, %c0_707], %1415 {strides = array<i32>} : memref<128x128xf32, #tpu.memory_space<vmem>>, vector<1x128xf32>,
    %c118_i32 = arith.constant 118 : i32
    %1417 = arith.addi %0, %c118_i32 : i32
    %1418 = arith.index_cast %1417 : i32 to index
    %1419 = memref.load %arg1[%1418] : memref<256xi32, #tpu.memory_space<smem>>
    %c118_i32_708 = arith.constant 118 : i32
    %1420 = arith.addi %0, %c118_i32_708 : i32
    %1421 = arith.index_cast %1420 : i32 to index
    %1422 = memref.load %arg2[%1421] : memref<256xi32, #tpu.memory_space<smem>>
    %1423 = arith.index_cast %1419 : i32 to index
    %c0_709 = arith.constant 0 : index
    %1424 = vector.load %arg3[%1423, %c0_709] : memref<64x128xf32, #tpu.memory_space<vmem>>, vector<1x128xf32>
    %c118 = arith.constant 118 : index
    %c0_710 = arith.constant 0 : index
    %1425 = vector.load %arg6[%c118, %c0_710] : memref<128x128xf32, #tpu.memory_space<vmem>>, vector<1x128xf32>
    tpu.vector_store %arg6[%c118, %c0_710], %1424 {strides = array<i32>} : memref<128x128xf32, #tpu.memory_space<vmem>>, vector<1x128xf32>,
    %1426 = arith.index_cast %1422 : i32 to index
    %c0_711 = arith.constant 0 : index
    %1427 = vector.load %arg4[%1426, %c0_711] : memref<96x128xf32, #tpu.memory_space<vmem>>, vector<1x128xf32>
    %c118_712 = arith.constant 118 : index
    %c0_713 = arith.constant 0 : index
    %1428 = vector.load %arg7[%c118_712, %c0_713] : memref<128x128xf32, #tpu.memory_space<vmem>>, vector<1x128xf32>
    tpu.vector_store %arg7[%c118_712, %c0_713], %1427 {strides = array<i32>} : memref<128x128xf32, #tpu.memory_space<vmem>>, vector<1x128xf32>,
    %c119_i32 = arith.constant 119 : i32
    %1429 = arith.addi %0, %c119_i32 : i32
    %1430 = arith.index_cast %1429 : i32 to index
    %1431 = memref.load %arg1[%1430] : memref<256xi32, #tpu.memory_space<smem>>
    %c119_i32_714 = arith.constant 119 : i32
    %1432 = arith.addi %0, %c119_i32_714 : i32
    %1433 = arith.index_cast %1432 : i32 to index
    %1434 = memref.load %arg2[%1433] : memref<256xi32, #tpu.memory_space<smem>>
    %1435 = arith.index_cast %1431 : i32 to index
    %c0_715 = arith.constant 0 : index
    %1436 = vector.load %arg3[%1435, %c0_715] : memref<64x128xf32, #tpu.memory_space<vmem>>, vector<1x128xf32>
    %c119 = arith.constant 119 : index
    %c0_716 = arith.constant 0 : index
    %1437 = vector.load %arg6[%c119, %c0_716] : memref<128x128xf32, #tpu.memory_space<vmem>>, vector<1x128xf32>
    tpu.vector_store %arg6[%c119, %c0_716], %1436 {strides = array<i32>} : memref<128x128xf32, #tpu.memory_space<vmem>>, vector<1x128xf32>,
    %1438 = arith.index_cast %1434 : i32 to index
    %c0_717 = arith.constant 0 : index
    %1439 = vector.load %arg4[%1438, %c0_717] : memref<96x128xf32, #tpu.memory_space<vmem>>, vector<1x128xf32>
    %c119_718 = arith.constant 119 : index
    %c0_719 = arith.constant 0 : index
    %1440 = vector.load %arg7[%c119_718, %c0_719] : memref<128x128xf32, #tpu.memory_space<vmem>>, vector<1x128xf32>
    tpu.vector_store %arg7[%c119_718, %c0_719], %1439 {strides = array<i32>} : memref<128x128xf32, #tpu.memory_space<vmem>>, vector<1x128xf32>,
    %c120_i32 = arith.constant 120 : i32
    %1441 = arith.addi %0, %c120_i32 : i32
    %1442 = arith.index_cast %1441 : i32 to index
    %1443 = memref.load %arg1[%1442] : memref<256xi32, #tpu.memory_space<smem>>
    %c120_i32_720 = arith.constant 120 : i32
    %1444 = arith.addi %0, %c120_i32_720 : i32
    %1445 = arith.index_cast %1444 : i32 to index
    %1446 = memref.load %arg2[%1445] : memref<256xi32, #tpu.memory_space<smem>>
    %1447 = arith.index_cast %1443 : i32 to index
    %c0_721 = arith.constant 0 : index
    %1448 = vector.load %arg3[%1447, %c0_721] : memref<64x128xf32, #tpu.memory_space<vmem>>, vector<1x128xf32>
    %c120 = arith.constant 120 : index
    %c0_722 = arith.constant 0 : index
    %1449 = vector.load %arg6[%c120, %c0_722] : memref<128x128xf32, #tpu.memory_space<vmem>>, vector<1x128xf32>
    tpu.vector_store %arg6[%c120, %c0_722], %1448 {strides = array<i32>} : memref<128x128xf32, #tpu.memory_space<vmem>>, vector<1x128xf32>,
    %1450 = arith.index_cast %1446 : i32 to index
    %c0_723 = arith.constant 0 : index
    %1451 = vector.load %arg4[%1450, %c0_723] : memref<96x128xf32, #tpu.memory_space<vmem>>, vector<1x128xf32>
    %c120_724 = arith.constant 120 : index
    %c0_725 = arith.constant 0 : index
    %1452 = vector.load %arg7[%c120_724, %c0_725] : memref<128x128xf32, #tpu.memory_space<vmem>>, vector<1x128xf32>
    tpu.vector_store %arg7[%c120_724, %c0_725], %1451 {strides = array<i32>} : memref<128x128xf32, #tpu.memory_space<vmem>>, vector<1x128xf32>,
    %c121_i32 = arith.constant 121 : i32
    %1453 = arith.addi %0, %c121_i32 : i32
    %1454 = arith.index_cast %1453 : i32 to index
    %1455 = memref.load %arg1[%1454] : memref<256xi32, #tpu.memory_space<smem>>
    %c121_i32_726 = arith.constant 121 : i32
    %1456 = arith.addi %0, %c121_i32_726 : i32
    %1457 = arith.index_cast %1456 : i32 to index
    %1458 = memref.load %arg2[%1457] : memref<256xi32, #tpu.memory_space<smem>>
    %1459 = arith.index_cast %1455 : i32 to index
    %c0_727 = arith.constant 0 : index
    %1460 = vector.load %arg3[%1459, %c0_727] : memref<64x128xf32, #tpu.memory_space<vmem>>, vector<1x128xf32>
    %c121 = arith.constant 121 : index
    %c0_728 = arith.constant 0 : index
    %1461 = vector.load %arg6[%c121, %c0_728] : memref<128x128xf32, #tpu.memory_space<vmem>>, vector<1x128xf32>
    tpu.vector_store %arg6[%c121, %c0_728], %1460 {strides = array<i32>} : memref<128x128xf32, #tpu.memory_space<vmem>>, vector<1x128xf32>,
    %1462 = arith.index_cast %1458 : i32 to index
    %c0_729 = arith.constant 0 : index
    %1463 = vector.load %arg4[%1462, %c0_729] : memref<96x128xf32, #tpu.memory_space<vmem>>, vector<1x128xf32>
    %c121_730 = arith.constant 121 : index
    %c0_731 = arith.constant 0 : index
    %1464 = vector.load %arg7[%c121_730, %c0_731] : memref<128x128xf32, #tpu.memory_space<vmem>>, vector<1x128xf32>
    tpu.vector_store %arg7[%c121_730, %c0_731], %1463 {strides = array<i32>} : memref<128x128xf32, #tpu.memory_space<vmem>>, vector<1x128xf32>,
    %c122_i32 = arith.constant 122 : i32
    %1465 = arith.addi %0, %c122_i32 : i32
    %1466 = arith.index_cast %1465 : i32 to index
    %1467 = memref.load %arg1[%1466] : memref<256xi32, #tpu.memory_space<smem>>
    %c122_i32_732 = arith.constant 122 : i32
    %1468 = arith.addi %0, %c122_i32_732 : i32
    %1469 = arith.index_cast %1468 : i32 to index
    %1470 = memref.load %arg2[%1469] : memref<256xi32, #tpu.memory_space<smem>>
    %1471 = arith.index_cast %1467 : i32 to index
    %c0_733 = arith.constant 0 : index
    %1472 = vector.load %arg3[%1471, %c0_733] : memref<64x128xf32, #tpu.memory_space<vmem>>, vector<1x128xf32>
    %c122 = arith.constant 122 : index
    %c0_734 = arith.constant 0 : index
    %1473 = vector.load %arg6[%c122, %c0_734] : memref<128x128xf32, #tpu.memory_space<vmem>>, vector<1x128xf32>
    tpu.vector_store %arg6[%c122, %c0_734], %1472 {strides = array<i32>} : memref<128x128xf32, #tpu.memory_space<vmem>>, vector<1x128xf32>,
    %1474 = arith.index_cast %1470 : i32 to index
    %c0_735 = arith.constant 0 : index
    %1475 = vector.load %arg4[%1474, %c0_735] : memref<96x128xf32, #tpu.memory_space<vmem>>, vector<1x128xf32>
    %c122_736 = arith.constant 122 : index
    %c0_737 = arith.constant 0 : index
    %1476 = vector.load %arg7[%c122_736, %c0_737] : memref<128x128xf32, #tpu.memory_space<vmem>>, vector<1x128xf32>
    tpu.vector_store %arg7[%c122_736, %c0_737], %1475 {strides = array<i32>} : memref<128x128xf32, #tpu.memory_space<vmem>>, vector<1x128xf32>,
    %c123_i32 = arith.constant 123 : i32
    %1477 = arith.addi %0, %c123_i32 : i32
    %1478 = arith.index_cast %1477 : i32 to index
    %1479 = memref.load %arg1[%1478] : memref<256xi32, #tpu.memory_space<smem>>
    %c123_i32_738 = arith.constant 123 : i32
    %1480 = arith.addi %0, %c123_i32_738 : i32
    %1481 = arith.index_cast %1480 : i32 to index
    %1482 = memref.load %arg2[%1481] : memref<256xi32, #tpu.memory_space<smem>>
    %1483 = arith.index_cast %1479 : i32 to index
    %c0_739 = arith.constant 0 : index
    %1484 = vector.load %arg3[%1483, %c0_739] : memref<64x128xf32, #tpu.memory_space<vmem>>, vector<1x128xf32>
    %c123 = arith.constant 123 : index
    %c0_740 = arith.constant 0 : index
    %1485 = vector.load %arg6[%c123, %c0_740] : memref<128x128xf32, #tpu.memory_space<vmem>>, vector<1x128xf32>
    tpu.vector_store %arg6[%c123, %c0_740], %1484 {strides = array<i32>} : memref<128x128xf32, #tpu.memory_space<vmem>>, vector<1x128xf32>,
    %1486 = arith.index_cast %1482 : i32 to index
    %c0_741 = arith.constant 0 : index
    %1487 = vector.load %arg4[%1486, %c0_741] : memref<96x128xf32, #tpu.memory_space<vmem>>, vector<1x128xf32>
    %c123_742 = arith.constant 123 : index
    %c0_743 = arith.constant 0 : index
    %1488 = vector.load %arg7[%c123_742, %c0_743] : memref<128x128xf32, #tpu.memory_space<vmem>>, vector<1x128xf32>
    tpu.vector_store %arg7[%c123_742, %c0_743], %1487 {strides = array<i32>} : memref<128x128xf32, #tpu.memory_space<vmem>>, vector<1x128xf32>,
    %c124_i32 = arith.constant 124 : i32
    %1489 = arith.addi %0, %c124_i32 : i32
    %1490 = arith.index_cast %1489 : i32 to index
    %1491 = memref.load %arg1[%1490] : memref<256xi32, #tpu.memory_space<smem>>
    %c124_i32_744 = arith.constant 124 : i32
    %1492 = arith.addi %0, %c124_i32_744 : i32
    %1493 = arith.index_cast %1492 : i32 to index
    %1494 = memref.load %arg2[%1493] : memref<256xi32, #tpu.memory_space<smem>>
    %1495 = arith.index_cast %1491 : i32 to index
    %c0_745 = arith.constant 0 : index
    %1496 = vector.load %arg3[%1495, %c0_745] : memref<64x128xf32, #tpu.memory_space<vmem>>, vector<1x128xf32>
    %c124 = arith.constant 124 : index
    %c0_746 = arith.constant 0 : index
    %1497 = vector.load %arg6[%c124, %c0_746] : memref<128x128xf32, #tpu.memory_space<vmem>>, vector<1x128xf32>
    tpu.vector_store %arg6[%c124, %c0_746], %1496 {strides = array<i32>} : memref<128x128xf32, #tpu.memory_space<vmem>>, vector<1x128xf32>,
    %1498 = arith.index_cast %1494 : i32 to index
    %c0_747 = arith.constant 0 : index
    %1499 = vector.load %arg4[%1498, %c0_747] : memref<96x128xf32, #tpu.memory_space<vmem>>, vector<1x128xf32>
    %c124_748 = arith.constant 124 : index
    %c0_749 = arith.constant 0 : index
    %1500 = vector.load %arg7[%c124_748, %c0_749] : memref<128x128xf32, #tpu.memory_space<vmem>>, vector<1x128xf32>
    tpu.vector_store %arg7[%c124_748, %c0_749], %1499 {strides = array<i32>} : memref<128x128xf32, #tpu.memory_space<vmem>>, vector<1x128xf32>,
    %c125_i32 = arith.constant 125 : i32
    %1501 = arith.addi %0, %c125_i32 : i32
    %1502 = arith.index_cast %1501 : i32 to index
    %1503 = memref.load %arg1[%1502] : memref<256xi32, #tpu.memory_space<smem>>
    %c125_i32_750 = arith.constant 125 : i32
    %1504 = arith.addi %0, %c125_i32_750 : i32
    %1505 = arith.index_cast %1504 : i32 to index
    %1506 = memref.load %arg2[%1505] : memref<256xi32, #tpu.memory_space<smem>>
    %1507 = arith.index_cast %1503 : i32 to index
    %c0_751 = arith.constant 0 : index
    %1508 = vector.load %arg3[%1507, %c0_751] : memref<64x128xf32, #tpu.memory_space<vmem>>, vector<1x128xf32>
    %c125 = arith.constant 125 : index
    %c0_752 = arith.constant 0 : index
    %1509 = vector.load %arg6[%c125, %c0_752] : memref<128x128xf32, #tpu.memory_space<vmem>>, vector<1x128xf32>
    tpu.vector_store %arg6[%c125, %c0_752], %1508 {strides = array<i32>} : memref<128x128xf32, #tpu.memory_space<vmem>>, vector<1x128xf32>,
    %1510 = arith.index_cast %1506 : i32 to index
    %c0_753 = arith.constant 0 : index
    %1511 = vector.load %arg4[%1510, %c0_753] : memref<96x128xf32, #tpu.memory_space<vmem>>, vector<1x128xf32>
    %c125_754 = arith.constant 125 : index
    %c0_755 = arith.constant 0 : index
    %1512 = vector.load %arg7[%c125_754, %c0_755] : memref<128x128xf32, #tpu.memory_space<vmem>>, vector<1x128xf32>
    tpu.vector_store %arg7[%c125_754, %c0_755], %1511 {strides = array<i32>} : memref<128x128xf32, #tpu.memory_space<vmem>>, vector<1x128xf32>,
    %c126_i32 = arith.constant 126 : i32
    %1513 = arith.addi %0, %c126_i32 : i32
    %1514 = arith.index_cast %1513 : i32 to index
    %1515 = memref.load %arg1[%1514] : memref<256xi32, #tpu.memory_space<smem>>
    %c126_i32_756 = arith.constant 126 : i32
    %1516 = arith.addi %0, %c126_i32_756 : i32
    %1517 = arith.index_cast %1516 : i32 to index
    %1518 = memref.load %arg2[%1517] : memref<256xi32, #tpu.memory_space<smem>>
    %1519 = arith.index_cast %1515 : i32 to index
    %c0_757 = arith.constant 0 : index
    %1520 = vector.load %arg3[%1519, %c0_757] : memref<64x128xf32, #tpu.memory_space<vmem>>, vector<1x128xf32>
    %c126 = arith.constant 126 : index
    %c0_758 = arith.constant 0 : index
    %1521 = vector.load %arg6[%c126, %c0_758] : memref<128x128xf32, #tpu.memory_space<vmem>>, vector<1x128xf32>
    tpu.vector_store %arg6[%c126, %c0_758], %1520 {strides = array<i32>} : memref<128x128xf32, #tpu.memory_space<vmem>>, vector<1x128xf32>,
    %1522 = arith.index_cast %1518 : i32 to index
    %c0_759 = arith.constant 0 : index
    %1523 = vector.load %arg4[%1522, %c0_759] : memref<96x128xf32, #tpu.memory_space<vmem>>, vector<1x128xf32>
    %c126_760 = arith.constant 126 : index
    %c0_761 = arith.constant 0 : index
    %1524 = vector.load %arg7[%c126_760, %c0_761] : memref<128x128xf32, #tpu.memory_space<vmem>>, vector<1x128xf32>
    tpu.vector_store %arg7[%c126_760, %c0_761], %1523 {strides = array<i32>} : memref<128x128xf32, #tpu.memory_space<vmem>>, vector<1x128xf32>,
    %c127_i32 = arith.constant 127 : i32
    %1525 = arith.addi %0, %c127_i32 : i32
    %1526 = arith.index_cast %1525 : i32 to index
    %1527 = memref.load %arg1[%1526] : memref<256xi32, #tpu.memory_space<smem>>
    %c127_i32_762 = arith.constant 127 : i32
    %1528 = arith.addi %0, %c127_i32_762 : i32
    %1529 = arith.index_cast %1528 : i32 to index
    %1530 = memref.load %arg2[%1529] : memref<256xi32, #tpu.memory_space<smem>>
    %1531 = arith.index_cast %1527 : i32 to index
    %c0_763 = arith.constant 0 : index
    %1532 = vector.load %arg3[%1531, %c0_763] : memref<64x128xf32, #tpu.memory_space<vmem>>, vector<1x128xf32>
    %c127 = arith.constant 127 : index
    %c0_764 = arith.constant 0 : index
    %1533 = vector.load %arg6[%c127, %c0_764] : memref<128x128xf32, #tpu.memory_space<vmem>>, vector<1x128xf32>
    tpu.vector_store %arg6[%c127, %c0_764], %1532 {strides = array<i32>} : memref<128x128xf32, #tpu.memory_space<vmem>>, vector<1x128xf32>,
    %1534 = arith.index_cast %1530 : i32 to index
    %c0_765 = arith.constant 0 : index
    %1535 = vector.load %arg4[%1534, %c0_765] : memref<96x128xf32, #tpu.memory_space<vmem>>, vector<1x128xf32>
    %c127_766 = arith.constant 127 : index
    %c0_767 = arith.constant 0 : index
    %1536 = vector.load %arg7[%c127_766, %c0_767] : memref<128x128xf32, #tpu.memory_space<vmem>>, vector<1x128xf32>
    tpu.vector_store %arg7[%c127_766, %c0_767], %1535 {strides = array<i32>} : memref<128x128xf32, #tpu.memory_space<vmem>>, vector<1x128xf32>,
    %c0_768 = arith.constant 0 : index
    %c0_769 = arith.constant 0 : index
    %1537 = vector.load %arg6[%c0_768, %c0_769] : memref<128x128xf32, #tpu.memory_space<vmem>>, vector<128x128xf32>
    %c0_770 = arith.constant 0 : index
    %c0_771 = arith.constant 0 : index
    %1538 = vector.load %arg7[%c0_770, %c0_771] : memref<128x128xf32, #tpu.memory_space<vmem>>, vector<128x128xf32>
    %1539 = arith.mulf %1537, %1538 : vector<128x128xf32>
    %cst = arith.constant dense<0.000000e+00> : vector<128xf32>
    %1540 = vector.multi_reduction <add>, %1539, %cst [1] : vector<128x128xf32> to vector<128xf32>
    %1541 = vector.shape_cast %1540 : vector<128xf32> to vector<128x1xf32>
    %c0_772 = arith.constant 0 : index
    %c0_773 = arith.constant 0 : index
    %1542 = vector.load %arg5[%c0_772, %c0_773] : memref<128x1xf32, #tpu.memory_space<vmem>>, vector<128x1xf32>
    tpu.vector_store %arg5[%c0_772, %c0_773], %1541 {strides = array<i32>} : memref<128x1xf32, #tpu.memory_space<vmem>>, vector<128x1xf32>,
    return
  }
  func.func @transform_0(%arg0: i32, %arg1: memref<256xi32, #tpu.memory_space<smem>>, %arg2: memref<256xi32, #tpu.memory_space<smem>>) -> (i32, i32) {
    %c0_i32 = arith.constant 0 : i32
    %c0_i32_0 = arith.constant 0 : i32
    %c0_i32_1 = arith.constant 0 : i32
    return %c0_i32, %c0_i32_0 : i32, i32
  }
  func.func @transform_1(%arg0: i32, %arg1: memref<256xi32, #tpu.memory_space<smem>>, %arg2: memref<256xi32, #tpu.memory_space<smem>>) -> (i32, i32) {
    %c0_i32 = arith.constant 0 : i32
    %c0_i32_0 = arith.constant 0 : i32
    %c0_i32_1 = arith.constant 0 : i32
    return %c0_i32, %c0_i32_0 : i32, i32
  }
  func.func @transform_2(%arg0: i32, %arg1: memref<256xi32, #tpu.memory_space<smem>>, %arg2: memref<256xi32, #tpu.memory_space<smem>>) -> (i32, i32) {
    %c0_i32 = arith.constant 0 : i32
    %c0_i32_0 = arith.constant 0 : i32
    return %arg0, %c0_i32 : i32, i32
  }
}

</mosaic_0001>

<llo_original>
// kernel: tpu_custom_call.1
$region0: #{tpu_custom_call.1}
  #allocation0 [shape = 'u32[]', space=smem, size = 0x4, offset = 0x4, fixed_abs, tag = 'smem constant byte address 0x4 - core index']
  #allocation1 [shape = 'u32[144,128]{1,0:T(1,128)}', space=vmem, size = 0x12000, scoped, tag = 'internal scratch']
  #allocation2 [shape = 'f32[128,128]{1,0:T(8,128)}', space=vmem, size = 0x10000, scoped, tag = 'scratch operand']
  #allocation3 [shape = 'f32[128,128]{1,0:T(8,128)}', space=vmem, size = 0x10000, scoped, tag = 'scratch operand']
  #allocation4 [shape = 's32[1]{0}', space=sflag, size = 0x4, scoped, tag = 'scoped memory for tpu_custom_call.1']
  #allocation5 [shape = 'u8[1024]{0}', space=smem, size = 0x400, scoped, tag = 'prefetched SMEM operand 0']
  #allocation6 [shape = 'u8[1024]{0}', space=smem, size = 0x400, scoped, tag = 'prefetched SMEM operand 1']
  %s0 = inlined_call_operand.hbm [shape: s32[256], index: 0, kind: input, shape index: {}]
  %s1 = inlined_call_operand.hbm [shape: s32[256], index: 1, kind: input, shape index: {}]
  %s2 = inlined_call_operand.hbm [shape: f32[64,128], index: 2, kind: input, shape index: {}]
  %s3 = inlined_call_operand.hbm [shape: f32[96,128], index: 3, kind: input, shape index: {}]
  %s4 = inlined_call_operand.vmem [shape: f32[256,1], index: 4, kind: output, shape index: {}]
  %s5 = sld [smem:[#allocation0]]
  $region49: #{tpu_custom_call.1} parent=0
    _
  %s7 = ssub.s32 1, %s5
  %s8 = scalar_select 0, %s7, %s5
  %10 = dma.hbm_to_smem %s0, 32, [#allocation5], [#allocation4]
  %12 = dma.hbm_to_smem %s1, 32, [#allocation6], [#allocation4]
  %13 = dma.done [#allocation4], 64
  %14 = sfence
  $region1: #{tpu_custom_call.1} parent=0
    #allocation7 [shape = 'u8[32768]{0}', space=vmem, size = 0x8000, scoped, tag = 'input window, operand 2, single buffered']
    #allocation8 [shape = 's32[2]{0}', space=sflag, size = 0x8, scoped, tag = 'scoped memory for tpu_custom_call.1']
    #allocation9 [shape = 'u8[49152]{0}', space=vmem, size = 0xc000, scoped, tag = 'input window, operand 3, single buffered']
    #allocation10 [shape = 's32[1]{0}', space=sflag, size = 0x4, scoped, tag = 'scoped memory for tpu_custom_call.1']
    %15 = vsyncpa [#allocation8], 0
    %16 = vsyncpa [#allocation10], 0
    loop: start=0, step=1, limit=4
    $region2: #{tpu_custom_call.1} parent=1 // loop_pre_header
      _
    $region3: #{tpu_custom_call.1} parent=1 // loop_header
      %s18 = sphi 0, %s22
      %p19 = scmp.ge.s32.totalorder %s18, 4
      %s26 = sphi 0, %s26
      %s28 = sphi 0, %s26
      %s29 = sphi 0, %s28
      %s43 = sphi 0, %s29
      %s47 = sphi 0, %s47
      %s49 = sphi 0, %s47
      %s50 = sphi 0, %s49
      %s64 = sphi 0, %s50
      %s70 = sphi 0, %s72
      %s73 = sphi 0, %s70
      %s74 = sphi 0, %s73
      %s90 = sphi 0, %s74
    $region4: #{tpu_custom_call.1} parent=1 // loop_header_branch
      %21 = sbr.rel (%p19) target = $region8
    $region5: #{tpu_custom_call.1} parent=1 // loop_body
      %s23 = ssub.s32 %s18, 1
      %s24 = ssub.s32 %s18, 2
      %s25 = sadd.s32 %s18, 1
      %s27 = sadd.s32 %s26, 1
      %p30 = scmp.eq.s32.totalorder %s18, 1
      %p31 = scmp.ne.s32.totalorder %s26, %s28
      %p32 = scmp.eq.s32.totalorder %s18, 0
      %p33 = por %p31, %p32
      %p34 = scmp.ne.s32.totalorder %s26, %s28
      %p35 = scmp.eq.s32.totalorder %s23, 1
      %p36 = por %p34, %p35
      %p37 = scmp.ne.s32.totalorder %s28, %s29
      %p38 = scmp.eq.s32.totalorder %s23, 0
      %p39 = por %p37, %p38
      %p40 = scmp.ne.s32.totalorder %s28, %s29
      %p41 = scmp.eq.s32.totalorder %s24, 1
      %p42 = por %p40, %p41
      %p44 = scmp.ne.s32.totalorder %s29, %s43
      %p45 = scmp.eq.s32.totalorder %s24, 0
      %p46 = por %p44, %p45
      %s48 = sadd.s32 %s47, 1
      %p51 = scmp.eq.s32.totalorder %s18, 1
      %p52 = scmp.ne.s32.totalorder %s47, %s49
      %p53 = scmp.eq.s32.totalorder %s18, 0
      %p54 = por %p52, %p53
      %p55 = scmp.ne.s32.totalorder %s47, %s49
      %p56 = scmp.eq.s32.totalorder %s23, 1
      %p57 = por %p55, %p56
      %p58 = scmp.ne.s32.totalorder %s49, %s50
      %p59 = scmp.eq.s32.totalorder %s23, 0
      %p60 = por %p58, %p59
      %p61 = scmp.ne.s32.totalorder %s49, %s50
      %p62 = scmp.eq.s32.totalorder %s24, 1
      %p63 = por %p61, %p62
      %p65 = scmp.ne.s32.totalorder %s50, %s64
      %p66 = scmp.eq.s32.totalorder %s24, 0
      %p67 = por %p65, %p66
      %s68 = ssub.s32 %s18, %s25
      %p69 = scmp.eq.s32.totalorder %s68, 0
      %s71 = sadd.s32 %s70, 1
      %s72 = scalar_select %p69, %s70, %s71
      %p75 = pneg %p69
      %p76 = scmp.eq.s32.totalorder %s18, 1
      %p77 = por %p75, %p76
      %p78 = scmp.ne.s32.totalorder %s70, %s73
      %p79 = scmp.eq.s32.totalorder %s18, 0
      %p80 = por %p78, %p79
      %p81 = scmp.ne.s32.totalorder %s70, %s73
      %p82 = scmp.eq.s32.totalorder %s23, 1
      %p83 = por %p81, %p82
      %p84 = scmp.ne.s32.totalorder %s73, %s74
      %p85 = scmp.eq.s32.totalorder %s23, 0
      %p86 = por %p84, %p85
      %p87 = scmp.ne.s32.totalorder %s73, %s74
      %p88 = scmp.eq.s32.totalorder %s24, 1
      %p89 = por %p87, %p88
      %p91 = scmp.ne.s32.totalorder %s74, %s90
      %p92 = scmp.eq.s32.totalorder %s24, 0
      %p93 = por %p91, %p92
      %p94 = scmp.le.s32.totalorder 1, %s18
      %p95 = scmp.lt.s32.totalorder %s18, 3
      %p96 = pnand %p94, %p95
      %p97 = pneg %p96
      // Predicated region
      $region9: #{tpu_custom_call.1} parent=5 // pred_check
        _
      $region10: #{tpu_custom_call.1} parent=5 // pred_check_branch
        %99 = sbr.rel (%p96) target = $region12
      $region11: #{tpu_custom_call.1} parent=5 // pred_region
        %s100 = ssub.s32 %s18, 1
        // Predicated region
        $region13: #{tpu_custom_call.1} parent=11 // pred_check
          %p101 = pneg %p39
        $region14: #{tpu_custom_call.1} parent=11 // pred_check_branch
          %103 = sbr.rel (%p101) target = $region16
        $region15: #{tpu_custom_call.1} parent=11 // pred_region
          %s105 = ssub.s32 1024, 1024
          %106 = vsyncadd [#allocation8], %s105
          %s107 = sshll.u32 [#allocation7], 4
          %s108 = int_to_ptr.vmem [resolvable:$true] %s107
          %113 = dma.hbm_to_vmem [thread:$0]  %s2, 1024, %s108, [#allocation8], 128, 128, 8
        $region16: #{tpu_custom_call.1} parent=11 // pred_fallthru
          _
        // Predicated region
        $region17: #{tpu_custom_call.1} parent=11 // pred_check
          %p114 = pneg %p60
        $region18: #{tpu_custom_call.1} parent=11 // pred_check_branch
          %116 = sbr.rel (%p114) target = $region20
        $region19: #{tpu_custom_call.1} parent=11 // pred_region
          %s118 = ssub.s32 1536, 1536
          %119 = vsyncadd [#allocation10], %s118
          %s120 = sshll.u32 [#allocation9], 4
          %s121 = int_to_ptr.vmem [resolvable:$true] %s120
          %126 = dma.hbm_to_vmem [thread:$0]  %s3, 1536, %s121, [#allocation10], 128, 128, 8
        $region20: #{tpu_custom_call.1} parent=11 // pred_fallthru
          _
      $region12: #{tpu_custom_call.1} parent=5 // pred_fallthru
        _
      %p127 = scmp.lt.s32.totalorder %s18, 2
      // Predicated region
      $region21: #{tpu_custom_call.1} parent=5 // pred_check
        %p128 = pneg %p127
      $region22: #{tpu_custom_call.1} parent=5 // pred_check_branch
        %130 = sbr.rel (%p128) target = $region24
      $region23: #{tpu_custom_call.1} parent=5 // pred_region
        _
      $region24: #{tpu_custom_call.1} parent=5 // pred_fallthru
        _
      %p131 = scmp.le.s32.totalorder 1, %s18
      %p132 = scmp.lt.s32.totalorder %s18, 3
      %p133 = pnand %p131, %p132
      %p134 = pneg %p133
      // Predicated region
      $region25: #{tpu_custom_call.1} parent=5 // pred_check
        _
      $region26: #{tpu_custom_call.1} parent=5 // pred_check_branch
        %136 = sbr.rel (%p133) target = $region28
      $region27: #{tpu_custom_call.1} parent=5 // pred_region
        %s137 = ssub.s32 %s18, 1
        // Predicated region
        $region29: #{tpu_custom_call.1} parent=27 // pred_check
          %p138 = pneg %p39
        $region30: #{tpu_custom_call.1} parent=27 // pred_check_branch
          %140 = sbr.rel (%p138) target = $region32
        $region31: #{tpu_custom_call.1} parent=27 // pred_region
          %141 = dma.done [#allocation8], 1024
        $region32: #{tpu_custom_call.1} parent=27 // pred_fallthru
          _
        // Predicated region
        $region33: #{tpu_custom_call.1} parent=27 // pred_check
          %p142 = pneg %p60
        $region34: #{tpu_custom_call.1} parent=27 // pred_check_branch
          %144 = sbr.rel (%p142) target = $region36
        $region35: #{tpu_custom_call.1} parent=27 // pred_region
          %145 = dma.done [#allocation10], 1536
        $region36: #{tpu_custom_call.1} parent=27 // pred_fallthru
          _
        %p146 = pneg %p39
        %p147 = pneg %p36
        %p148 = pneg %p60
        %p149 = pneg %p57
        %p150 = pneg %p86
        %p151 = pneg %p83
        %s152 = smul.u32 16, %s23
        %p153 = scmp.lt.s32.totalorder %s152, 31
        %s154 = scalar_select %p153, %s152, 31
        %s155 = smul.addr %s154, 8
        %s156 = scalar_lea.vmem %s4, %s155
        %s157 = smul.u32 16, %s23
        %p158 = scmp.lt.s32.totalorder %s157, 31
        %s159 = scalar_select %p158, %s157, 31
        %s160 = smul.addr %s159, 8
        %s161 = scalar_lea.vmem %s4, %s160
        %s162 = smul.u32 16, %s23
        %s163 = smul.u32 %s23, 128
        %s164 = sld [smem:[#allocation5 + %s163]]
        %s165 = sld [smem:[#allocation6 + %s163]]
        %s166 = scalar_lea.vmem [#allocation7], %s164
        %v167 = vld [vmem:[%s166] sm:$0x1]
        %168 = vst [vmem:[#allocation2] sm:$0x1] %v167
        %s169 = scalar_lea.vmem [#allocation9], %s165
        %v170 = vld [vmem:[%s169] sm:$0x1]
        %171 = vst [vmem:[#allocation3] sm:$0x1] %v170
        %s172 = sadd.s32 %s163, 1
        %s173 = sld [smem:[#allocation5 + %s172]]
        %s174 = sld [smem:[#allocation6 + %s172]]
        %s175 = scalar_lea.vmem [#allocation7], %s173
        %v176 = vld [vmem:[%s175] sm:$0x1]
        %177 = vst [vmem:[#allocation2 + $0x1] sm:$0x1] %v176
        %s178 = scalar_lea.vmem [#allocation9], %s174
        %v179 = vld [vmem:[%s178] sm:$0x1]
        %180 = vst [vmem:[#allocation3 + $0x1] sm:$0x1] %v179
        %s181 = sadd.s32 %s163, 2
        %s182 = sld [smem:[#allocation5 + %s181]]
        %s183 = sld [smem:[#allocation6 + %s181]]
        %s184 = scalar_lea.vmem [#allocation7], %s182
        %v185 = vld [vmem:[%s184] sm:$0x1]
        %186 = vst [vmem:[#allocation2 + $0x2] sm:$0x1] %v185
        %s187 = scalar_lea.vmem [#allocation9], %s183
        %v188 = vld [vmem:[%s187] sm:$0x1]
        %189 = vst [vmem:[#allocation3 + $0x2] sm:$0x1] %v188
        %s190 = sadd.s32 %s163, 3
        %s191 = sld [smem:[#allocation5 + %s190]]
        %s192 = sld [smem:[#allocation6 + %s190]]
        %s193 = scalar_lea.vmem [#allocation7], %s191
        %v194 = vld [vmem:[%s193] sm:$0x1]
        %195 = vst [vmem:[#allocation2 + $0x3] sm:$0x1] %v194
        %s196 = scalar_lea.vmem [#allocation9], %s192
        %v197 = vld [vmem:[%s196] sm:$0x1]
        %198 = vst [vmem:[#allocation3 + $0x3] sm:$0x1] %v197
        %s199 = sadd.s32 %s163, 4
        %s200 = sld [smem:[#allocation5 + %s199]]
        %s201 = sld [smem:[#allocation6 + %s199]]
        %s202 = scalar_lea.vmem [#allocation7], %s200
        %v203 = vld [vmem:[%s202] sm:$0x1]
        %204 = vst [vmem:[#allocation2 + $0x4] sm:$0x1] %v203
        %s205 = scalar_lea.vmem [#allocation9], %s201
        %v206 = vld [vmem:[%s205] sm:$0x1]
        %207 = vst [vmem:[#allocation3 + $0x4] sm:$0x1] %v206
        %s208 = sadd.s32 %s163, 5
        %s209 = sld [smem:[#allocation5 + %s208]]
        %s210 = sld [smem:[#allocation6 + %s208]]
        %s211 = scalar_lea.vmem [#allocation7], %s209
        %v212 = vld [vmem:[%s211] sm:$0x1]
        %213 = vst [vmem:[#allocation2 + $0x5] sm:$0x1] %v212
        %s214 = scalar_lea.vmem [#allocation9], %s210
        %v215 = vld [vmem:[%s214] sm:$0x1]
        %216 = vst [vmem:[#allocation3 + $0x5] sm:$0x1] %v215
        %s217 = sadd.s32 %s163, 6
        %s218 = sld [smem:[#allocation5 + %s217]]
        %s219 = sld [smem:[#allocation6 + %s217]]
        %s220 = scalar_lea.vmem [#allocation7], %s218
        %v221 = vld [vmem:[%s220] sm:$0x1]
        %222 = vst [vmem:[#allocation2 + $0x6] sm:$0x1] %v221
        %s223 = scalar_lea.vmem [#allocation9], %s219
        %v224 = vld [vmem:[%s223] sm:$0x1]
        %225 = vst [vmem:[#allocation3 + $0x6] sm:$0x1] %v224
        %s226 = sadd.s32 %s163, 7
        %s227 = sld [smem:[#allocation5 + %s226]]
        %s228 = sld [smem:[#allocation6 + %s226]]
        %s229 = scalar_lea.vmem [#allocation7], %s227
        %v230 = vld [vmem:[%s229] sm:$0x1]
        %231 = vst [vmem:[#allocation2 + $0x7] sm:$0x1] %v230
        %s232 = scalar_lea.vmem [#allocation9], %s228
        %v233 = vld [vmem:[%s232] sm:$0x1]
        %234 = vst [vmem:[#allocation3 + $0x7] sm:$0x1] %v233
        %s235 = sadd.s32 %s163, 8
        %s236 = sld [smem:[#allocation5 + %s235]]
        %s237 = sld [smem:[#allocation6 + %s235]]
        %s238 = scalar_lea.vmem [#allocation7], %s236
        %v239 = vld [vmem:[%s238] sm:$0x1]
        %240 = vst [vmem:[#allocation2 + $0x8] sm:$0x1] %v239
        %s241 = scalar_lea.vmem [#allocation9], %s237
        %v242 = vld [vmem:[%s241] sm:$0x1]
        %243 = vst [vmem:[#allocation3 + $0x8] sm:$0x1] %v242
        %s244 = sadd.s32 %s163, 9
        %s245 = sld [smem:[#allocation5 + %s244]]
        %s246 = sld [smem:[#allocation6 + %s244]]
        %s247 = scalar_lea.vmem [#allocation7], %s245
        %v248 = vld [vmem:[%s247] sm:$0x1]
        %249 = vst [vmem:[#allocation2 + $0x9] sm:$0x1] %v248
        %s250 = scalar_lea.vmem [#allocation9], %s246
        %v251 = vld [vmem:[%s250] sm:$0x1]
        %252 = vst [vmem:[#allocation3 + $0x9] sm:$0x1] %v251
        %s253 = sadd.s32 %s163, 10
        %s254 = sld [smem:[#allocation5 + %s253]]
        %s255 = sld [smem:[#allocation6 + %s253]]
        %s256 = scalar_lea.vmem [#allocation7], %s254
        %v257 = vld [vmem:[%s256] sm:$0x1]
        %258 = vst [vmem:[#allocation2 + $0xa] sm:$0x1] %v257
        %s259 = scalar_lea.vmem [#allocation9], %s255
        %v260 = vld [vmem:[%s259] sm:$0x1]
        %261 = vst [vmem:[#allocation3 + $0xa] sm:$0x1] %v260
        %s262 = sadd.s32 %s163, 11
        %s263 = sld [smem:[#allocation5 + %s262]]
        %s264 = sld [smem:[#allocation6 + %s262]]
        %s265 = scalar_lea.vmem [#allocation7], %s263
        %v266 = vld [vmem:[%s265] sm:$0x1]
        %267 = vst [vmem:[#allocation2 + $0xb] sm:$0x1] %v266
        %s268 = scalar_lea.vmem [#allocation9], %s264
        %v269 = vld [vmem:[%s268] sm:$0x1]
        %270 = vst [vmem:[#allocation3 + $0xb] sm:$0x1] %v269
        %s271 = sadd.s32 %s163, 12
        %s272 = sld [smem:[#allocation5 + %s271]]
        %s273 = sld [smem:[#allocation6 + %s271]]
        %s274 = scalar_lea.vmem [#allocation7], %s272
        %v275 = vld [vmem:[%s274] sm:$0x1]
        %276 = vst [vmem:[#allocation2 + $0xc] sm:$0x1] %v275
        %s277 = scalar_lea.vmem [#allocation9], %s273
        %v278 = vld [vmem:[%s277] sm:$0x1]
        %279 = vst [vmem:[#allocation3 + $0xc] sm:$0x1] %v278
        %s280 = sadd.s32 %s163, 13
        %s281 = sld [smem:[#allocation5 + %s280]]
        %s282 = sld [smem:[#allocation6 + %s280]]
        %s283 = scalar_lea.vmem [#allocation7], %s281
        %v284 = vld [vmem:[%s283] sm:$0x1]
        %285 = vst [vmem:[#allocation2 + $0xd] sm:$0x1] %v284
        %s286 = scalar_lea.vmem [#allocation9], %s282
        %v287 = vld [vmem:[%s286] sm:$0x1]
        %288 = vst [vmem:[#allocation3 + $0xd] sm:$0x1] %v287
        %s289 = sadd.s32 %s163, 14
        %s290 = sld [smem:[#allocation5 + %s289]]
        %s291 = sld [smem:[#allocation6 + %s289]]
        %s292 = scalar_lea.vmem [#allocation7], %s290
        %v293 = vld [vmem:[%s292] sm:$0x1]
        %294 = vst [vmem:[#allocation2 + $0xe] sm:$0x1] %v293
        %s295 = scalar_lea.vmem [#allocation9], %s291
        %v296 = vld [vmem:[%s295] sm:$0x1]
        %297 = vst [vmem:[#allocation3 + $0xe] sm:$0x1] %v296
        %s298 = sadd.s32 %s163, 15
        %s299 = sld [smem:[#allocation5 + %s298]]
        %s300 = sld [smem:[#allocation6 + %s298]]
        %s301 = scalar_lea.vmem [#allocation7], %s299
        %v302 = vld [vmem:[%s301] sm:$0x1]
        %303 = vst [vmem:[#allocation2 + $0xf] sm:$0x1] %v302
        %s304 = scalar_lea.vmem [#allocation9], %s300
        %v305 = vld [vmem:[%s304] sm:$0x1]
        %306 = vst [vmem:[#allocation3 + $0xf] sm:$0x1] %v305
        %s307 = sadd.s32 %s163, 16
        %s308 = sld [smem:[#allocation5 + %s307]]
        %s309 = sld [smem:[#allocation6 + %s307]]
        %s310 = scalar_lea.vmem [#allocation7], %s308
        %v311 = vld [vmem:[%s310] sm:$0x1]
        %312 = vst [vmem:[#allocation2 + $0x10] sm:$0x1] %v311
        %s313 = scalar_lea.vmem [#allocation9], %s309
        %v314 = vld [vmem:[%s313] sm:$0x1]
        %315 = vst [vmem:[#allocation3 + $0x10] sm:$0x1] %v314
        %s316 = sadd.s32 %s163, 17
        %s317 = sld [smem:[#allocation5 + %s316]]
        %s318 = sld [smem:[#allocation6 + %s316]]
        %s319 = scalar_lea.vmem [#allocation7], %s317
        %v320 = vld [vmem:[%s319] sm:$0x1]
        %321 = vst [vmem:[#allocation2 + $0x11] sm:$0x1] %v320
        %s322 = scalar_lea.vmem [#allocation9], %s318
        %v323 = vld [vmem:[%s322] sm:$0x1]
        %324 = vst [vmem:[#allocation3 + $0x11] sm:$0x1] %v323
        %s325 = sadd.s32 %s163, 18
        %s326 = sld [smem:[#allocation5 + %s325]]
        %s327 = sld [smem:[#allocation6 + %s325]]
        %s328 = scalar_lea.vmem [#allocation7], %s326
        %v329 = vld [vmem:[%s328] sm:$0x1]
        %330 = vst [vmem:[#allocation2 + $0x12] sm:$0x1] %v329
        %s331 = scalar_lea.vmem [#allocation9], %s327
        %v332 = vld [vmem:[%s331] sm:$0x1]
        %333 = vst [vmem:[#allocation3 + $0x12] sm:$0x1] %v332
        %s334 = sadd.s32 %s163, 19
        %s335 = sld [smem:[#allocation5 + %s334]]
        %s336 = sld [smem:[#allocation6 + %s334]]
        %s337 = scalar_lea.vmem [#allocation7], %s335
        %v338 = vld [vmem:[%s337] sm:$0x1]
        %339 = vst [vmem:[#allocation2 + $0x13] sm:$0x1] %v338
        %s340 = scalar_lea.vmem [#allocation9], %s336
        %v341 = vld [vmem:[%s340] sm:$0x1]
        %342 = vst [vmem:[#allocation3 + $0x13] sm:$0x1] %v341
        %s343 = sadd.s32 %s163, 20
        %s344 = sld [smem:[#allocation5 + %s343]]
        %s345 = sld [smem:[#allocation6 + %s343]]
        %s346 = scalar_lea.vmem [#allocation7], %s344
        %v347 = vld [vmem:[%s346] sm:$0x1]
        %348 = vst [vmem:[#allocation2 + $0x14] sm:$0x1] %v347
        %s349 = scalar_lea.vmem [#allocation9], %s345
        %v350 = vld [vmem:[%s349] sm:$0x1]
        %351 = vst [vmem:[#allocation3 + $0x14] sm:$0x1] %v350
        %s352 = sadd.s32 %s163, 21
        %s353 = sld [smem:[#allocation5 + %s352]]
        %s354 = sld [smem:[#allocation6 + %s352]]
        %s355 = scalar_lea.vmem [#allocation7], %s353
        %v356 = vld [vmem:[%s355] sm:$0x1]
        %357 = vst [vmem:[#allocation2 + $0x15] sm:$0x1] %v356
        %s358 = scalar_lea.vmem [#allocation9], %s354
        %v359 = vld [vmem:[%s358] sm:$0x1]
        %360 = vst [vmem:[#allocation3 + $0x15] sm:$0x1] %v359
        %s361 = sadd.s32 %s163, 22
        %s362 = sld [smem:[#allocation5 + %s361]]
        %s363 = sld [smem:[#allocation6 + %s361]]
        %s364 = scalar_lea.vmem [#allocation7], %s362
        %v365 = vld [vmem:[%s364] sm:$0x1]
        %366 = vst [vmem:[#allocation2 + $0x16] sm:$0x1] %v365
        %s367 = scalar_lea.vmem [#allocation9], %s363
        %v368 = vld [vmem:[%s367] sm:$0x1]
        %369 = vst [vmem:[#allocation3 + $0x16] sm:$0x1] %v368
        %s370 = sadd.s32 %s163, 23
        %s371 = sld [smem:[#allocation5 + %s370]]
        %s372 = sld [smem:[#allocation6 + %s370]]
        %s373 = scalar_lea.vmem [#allocation7], %s371
        %v374 = vld [vmem:[%s373] sm:$0x1]
        %375 = vst [vmem:[#allocation2 + $0x17] sm:$0x1] %v374
        %s376 = scalar_lea.vmem [#allocation9], %s372
        %v377 = vld [vmem:[%s376] sm:$0x1]
        %378 = vst [vmem:[#allocation3 + $0x17] sm:$0x1] %v377
        %s379 = sadd.s32 %s163, 24
        %s380 = sld [smem:[#allocation5 + %s379]]
        %s381 = sld [smem:[#allocation6 + %s379]]
        %s382 = scalar_lea.vmem [#allocation7], %s380
        %v383 = vld [vmem:[%s382] sm:$0x1]
        %384 = vst [vmem:[#allocation2 + $0x18] sm:$0x1] %v383
        %s385 = scalar_lea.vmem [#allocation9], %s381
        %v386 = vld [vmem:[%s385] sm:$0x1]
        %387 = vst [vmem:[#allocation3 + $0x18] sm:$0x1] %v386
        %s388 = sadd.s32 %s163, 25
        %s389 = sld [smem:[#allocation5 + %s388]]
        %s390 = sld [smem:[#allocation6 + %s388]]
        %s391 = scalar_lea.vmem [#allocation7], %s389
        %v392 = vld [vmem:[%s391] sm:$0x1]
        %393 = vst [vmem:[#allocation2 + $0x19] sm:$0x1] %v392
        %s394 = scalar_lea.vmem [#allocation9], %s390
        %v395 = vld [vmem:[%s394] sm:$0x1]
        %396 = vst [vmem:[#allocation3 + $0x19] sm:$0x1] %v395
        %s397 = sadd.s32 %s163, 26
        %s398 = sld [smem:[#allocation5 + %s397]]
        %s399 = sld [smem:[#allocation6 + %s397]]
        %s400 = scalar_lea.vmem [#allocation7], %s398
        %v401 = vld [vmem:[%s400] sm:$0x1]
        %402 = vst [vmem:[#allocation2 + $0x1a] sm:$0x1] %v401
        %s403 = scalar_lea.vmem [#allocation9], %s399
        %v404 = vld [vmem:[%s403] sm:$0x1]
        %405 = vst [vmem:[#allocation3 + $0x1a] sm:$0x1] %v404
        %s406 = sadd.s32 %s163, 27
        %s407 = sld [smem:[#allocation5 + %s406]]
        %s408 = sld [smem:[#allocation6 + %s406]]
        %s409 = scalar_lea.vmem [#allocation7], %s407
        %v410 = vld [vmem:[%s409] sm:$0x1]
        %411 = vst [vmem:[#allocation2 + $0x1b] sm:$0x1] %v410
        %s412 = scalar_lea.vmem [#allocation9], %s408
        %v413 = vld [vmem:[%s412] sm:$0x1]
        %414 = vst [vmem:[#allocation3 + $0x1b] sm:$0x1] %v413
        %s415 = sadd.s32 %s163, 28
        %s416 = sld [smem:[#allocation5 + %s415]]
        %s417 = sld [smem:[#allocation6 + %s415]]
        %s418 = scalar_lea.vmem [#allocation7], %s416
        %v419 = vld [vmem:[%s418] sm:$0x1]
        %420 = vst [vmem:[#allocation2 + $0x1c] sm:$0x1] %v419
        %s421 = scalar_lea.vmem [#allocation9], %s417
        %v422 = vld [vmem:[%s421] sm:$0x1]
        %423 = vst [vmem:[#allocation3 + $0x1c] sm:$0x1] %v422
        %s424 = sadd.s32 %s163, 29
        %s425 = sld [smem:[#allocation5 + %s424]]
        %s426 = sld [smem:[#allocation6 + %s424]]
        %s427 = scalar_lea.vmem [#allocation7], %s425
        %v428 = vld [vmem:[%s427] sm:$0x1]
        %429 = vst [vmem:[#allocation2 + $0x1d] sm:$0x1] %v428
        %s430 = scalar_lea.vmem [#allocation9], %s426
        %v431 = vld [vmem:[%s430] sm:$0x1]
        %432 = vst [vmem:[#allocation3 + $0x1d] sm:$0x1] %v431
        %s433 = sadd.s32 %s163, 30
        %s434 = sld [smem:[#allocation5 + %s433]]
        %s435 = sld [smem:[#allocation6 + %s433]]
        %s436 = scalar_lea.vmem [#allocation7], %s434
        %v437 = vld [vmem:[%s436] sm:$0x1]
        %438 = vst [vmem:[#allocation2 + $0x1e] sm:$0x1] %v437
        %s439 = scalar_lea.vmem [#allocation9], %s435
        %v440 = vld [vmem:[%s439] sm:$0x1]
        %441 = vst [vmem:[#allocation3 + $0x1e] sm:$0x1] %v440
        %s442 = sadd.s32 %s163, 31
        %s443 = sld [smem:[#allocation5 + %s442]]
        %s444 = sld [smem:[#allocation6 + %s442]]
        %s445 = scalar_lea.vmem [#allocation7], %s443
        %v446 = vld [vmem:[%s445] sm:$0x1]
        %447 = vst [vmem:[#allocation2 + $0x1f] sm:$0x1] %v446
        %s448 = scalar_lea.vmem [#allocation9], %s444
        %v449 = vld [vmem:[%s448] sm:$0x1]
        %450 = vst [vmem:[#allocation3 + $0x1f] sm:$0x1] %v449
        %s451 = sadd.s32 %s163, 32
        %s452 = sld [smem:[#allocation5 + %s451]]
        %s453 = sld [smem:[#allocation6 + %s451]]
        %s454 = scalar_lea.vmem [#allocation7], %s452
        %v455 = vld [vmem:[%s454] sm:$0x1]
        %456 = vst [vmem:[#allocation2 + $0x20] sm:$0x1] %v455
        %s457 = scalar_lea.vmem [#allocation9], %s453
        %v458 = vld [vmem:[%s457] sm:$0x1]
        %459 = vst [vmem:[#allocation3 + $0x20] sm:$0x1] %v458
        %s460 = sadd.s32 %s163, 33
        %s461 = sld [smem:[#allocation5 + %s460]]
        %s462 = sld [smem:[#allocation6 + %s460]]
        %s463 = scalar_lea.vmem [#allocation7], %s461
        %v464 = vld [vmem:[%s463] sm:$0x1]
        %465 = vst [vmem:[#allocation2 + $0x21] sm:$0x1] %v464
        %s466 = scalar_lea.vmem [#allocation9], %s462
        %v467 = vld [vmem:[%s466] sm:$0x1]
        %468 = vst [vmem:[#allocation3 + $0x21] sm:$0x1] %v467
        %s469 = sadd.s32 %s163, 34
        %s470 = sld [smem:[#allocation5 + %s469]]
        %s471 = sld [smem:[#allocation6 + %s469]]
        %s472 = scalar_lea.vmem [#allocation7], %s470
        %v473 = vld [vmem:[%s472] sm:$0x1]
        %474 = vst [vmem:[#allocation2 + $0x22] sm:$0x1] %v473
        %s475 = scalar_lea.vmem [#allocation9], %s471
        %v476 = vld [vmem:[%s475] sm:$0x1]
        %477 = vst [vmem:[#allocation3 + $0x22] sm:$0x1] %v476
        %s478 = sadd.s32 %s163, 35
        %s479 = sld [smem:[#allocation5 + %s478]]
        %s480 = sld [smem:[#allocation6 + %s478]]
        %s481 = scalar_lea.vmem [#allocation7], %s479
        %v482 = vld [vmem:[%s481] sm:$0x1]
        %483 = vst [vmem:[#allocation2 + $0x23] sm:$0x1] %v482
        %s484 = scalar_lea.vmem [#allocation9], %s480
        %v485 = vld [vmem:[%s484] sm:$0x1]
        %486 = vst [vmem:[#allocation3 + $0x23] sm:$0x1] %v485
        %s487 = sadd.s32 %s163, 36
        %s488 = sld [smem:[#allocation5 + %s487]]
        %s489 = sld [smem:[#allocation6 + %s487]]
        %s490 = scalar_lea.vmem [#allocation7], %s488
        %v491 = vld [vmem:[%s490] sm:$0x1]
        %492 = vst [vmem:[#allocation2 + $0x24] sm:$0x1] %v491
        %s493 = scalar_lea.vmem [#allocation9], %s489
        %v494 = vld [vmem:[%s493] sm:$0x1]
        %495 = vst [vmem:[#allocation3 + $0x24] sm:$0x1] %v494
        %s496 = sadd.s32 %s163, 37
        %s497 = sld [smem:[#allocation5 + %s496]]
        %s498 = sld [smem:[#allocation6 + %s496]]
        %s499 = scalar_lea.vmem [#allocation7], %s497
        %v500 = vld [vmem:[%s499] sm:$0x1]
        %501 = vst [vmem:[#allocation2 + $0x25] sm:$0x1] %v500
        %s502 = scalar_lea.vmem [#allocation9], %s498
        %v503 = vld [vmem:[%s502] sm:$0x1]
        %504 = vst [vmem:[#allocation3 + $0x25] sm:$0x1] %v503
        %s505 = sadd.s32 %s163, 38
        %s506 = sld [smem:[#allocation5 + %s505]]
        %s507 = sld [smem:[#allocation6 + %s505]]
        %s508 = scalar_lea.vmem [#allocation7], %s506
        %v509 = vld [vmem:[%s508] sm:$0x1]
        %510 = vst [vmem:[#allocation2 + $0x26] sm:$0x1] %v509
        %s511 = scalar_lea.vmem [#allocation9], %s507
        %v512 = vld [vmem:[%s511] sm:$0x1]
        %513 = vst [vmem:[#allocation3 + $0x26] sm:$0x1] %v512
        %s514 = sadd.s32 %s163, 39
        %s515 = sld [smem:[#allocation5 + %s514]]
        %s516 = sld [smem:[#allocation6 + %s514]]
        %s517 = scalar_lea.vmem [#allocation7], %s515
        %v518 = vld [vmem:[%s517] sm:$0x1]
        %519 = vst [vmem:[#allocation2 + $0x27] sm:$0x1] %v518
        %s520 = scalar_lea.vmem [#allocation9], %s516
        %v521 = vld [vmem:[%s520] sm:$0x1]
        %522 = vst [vmem:[#allocation3 + $0x27] sm:$0x1] %v521
        %s523 = sadd.s32 %s163, 40
        %s524 = sld [smem:[#allocation5 + %s523]]
        %s525 = sld [smem:[#allocation6 + %s523]]
        %s526 = scalar_lea.vmem [#allocation7], %s524
        %v527 = vld [vmem:[%s526] sm:$0x1]
        %528 = vst [vmem:[#allocation2 + $0x28] sm:$0x1] %v527
        %s529 = scalar_lea.vmem [#allocation9], %s525
        %v530 = vld [vmem:[%s529] sm:$0x1]
        %531 = vst [vmem:[#allocation3 + $0x28] sm:$0x1] %v530
        %s532 = sadd.s32 %s163, 41
        %s533 = sld [smem:[#allocation5 + %s532]]
        %s534 = sld [smem:[#allocation6 + %s532]]
        %s535 = scalar_lea.vmem [#allocation7], %s533
        %v536 = vld [vmem:[%s535] sm:$0x1]
        %537 = vst [vmem:[#allocation2 + $0x29] sm:$0x1] %v536
        %s538 = scalar_lea.vmem [#allocation9], %s534
        %v539 = vld [vmem:[%s538] sm:$0x1]
        %540 = vst [vmem:[#allocation3 + $0x29] sm:$0x1] %v539
        %s541 = sadd.s32 %s163, 42
        %s542 = sld [smem:[#allocation5 + %s541]]
        %s543 = sld [smem:[#allocation6 + %s541]]
        %s544 = scalar_lea.vmem [#allocation7], %s542
        %v545 = vld [vmem:[%s544] sm:$0x1]
        %546 = vst [vmem:[#allocation2 + $0x2a] sm:$0x1] %v545
        %s547 = scalar_lea.vmem [#allocation9], %s543
        %v548 = vld [vmem:[%s547] sm:$0x1]
        %549 = vst [vmem:[#allocation3 + $0x2a] sm:$0x1] %v548
        %s550 = sadd.s32 %s163, 43
        %s551 = sld [smem:[#allocation5 + %s550]]
        %s552 = sld [smem:[#allocation6 + %s550]]
        %s553 = scalar_lea.vmem [#allocation7], %s551
        %v554 = vld [vmem:[%s553] sm:$0x1]
        %555 = vst [vmem:[#allocation2 + $0x2b] sm:$0x1] %v554
        %s556 = scalar_lea.vmem [#allocation9], %s552
        %v557 = vld [vmem:[%s556] sm:$0x1]
        %558 = vst [vmem:[#allocation3 + $0x2b] sm:$0x1] %v557
        %s559 = sadd.s32 %s163, 44
        %s560 = sld [smem:[#allocation5 + %s559]]
        %s561 = sld [smem:[#allocation6 + %s559]]
        %s562 = scalar_lea.vmem [#allocation7], %s560
        %v563 = vld [vmem:[%s562] sm:$0x1]
        %564 = vst [vmem:[#allocation2 + $0x2c] sm:$0x1] %v563
        %s565 = scalar_lea.vmem [#allocation9], %s561
        %v566 = vld [vmem:[%s565] sm:$0x1]
        %567 = vst [vmem:[#allocation3 + $0x2c] sm:$0x1] %v566
        %s568 = sadd.s32 %s163, 45
        %s569 = sld [smem:[#allocation5 + %s568]]
        %s570 = sld [smem:[#allocation6 + %s568]]
        %s571 = scalar_lea.vmem [#allocation7], %s569
        %v572 = vld [vmem:[%s571] sm:$0x1]
        %573 = vst [vmem:[#allocation2 + $0x2d] sm:$0x1] %v572
        %s574 = scalar_lea.vmem [#allocation9], %s570
        %v575 = vld [vmem:[%s574] sm:$0x1]
        %576 = vst [vmem:[#allocation3 + $0x2d] sm:$0x1] %v575
        %s577 = sadd.s32 %s163, 46
        %s578 = sld [smem:[#allocation5 + %s577]]
        %s579 = sld [smem:[#allocation6 + %s577]]
        %s580 = scalar_lea.vmem [#allocation7], %s578
        %v581 = vld [vmem:[%s580] sm:$0x1]
        %582 = vst [vmem:[#allocation2 + $0x2e] sm:$0x1] %v581
        %s583 = scalar_lea.vmem [#allocation9], %s579
        %v584 = vld [vmem:[%s583] sm:$0x1]
        %585 = vst [vmem:[#allocation3 + $0x2e] sm:$0x1] %v584
        %s586 = sadd.s32 %s163, 47
        %s587 = sld [smem:[#allocation5 + %s586]]
        %s588 = sld [smem:[#allocation6 + %s586]]
        %s589 = scalar_lea.vmem [#allocation7], %s587
        %v590 = vld [vmem:[%s589] sm:$0x1]
        %591 = vst [vmem:[#allocation2 + $0x2f] sm:$0x1] %v590
        %s592 = scalar_lea.vmem [#allocation9], %s588
        %v593 = vld [vmem:[%s592] sm:$0x1]
        %594 = vst [vmem:[#allocation3 + $0x2f] sm:$0x1] %v593
        %s595 = sadd.s32 %s163, 48
        %s596 = sld [smem:[#allocation5 + %s595]]
        %s597 = sld [smem:[#allocation6 + %s595]]
        %s598 = scalar_lea.vmem [#allocation7], %s596
        %v599 = vld [vmem:[%s598] sm:$0x1]
        %600 = vst [vmem:[#allocation2 + $0x30] sm:$0x1] %v599
        %s601 = scalar_lea.vmem [#allocation9], %s597
        %v602 = vld [vmem:[%s601] sm:$0x1]
        %603 = vst [vmem:[#allocation3 + $0x30] sm:$0x1] %v602
        %s604 = sadd.s32 %s163, 49
        %s605 = sld [smem:[#allocation5 + %s604]]
        %s606 = sld [smem:[#allocation6 + %s604]]
        %s607 = scalar_lea.vmem [#allocation7], %s605
        %v608 = vld [vmem:[%s607] sm:$0x1]
        %609 = vst [vmem:[#allocation2 + $0x31] sm:$0x1] %v608
        %s610 = scalar_lea.vmem [#allocation9], %s606
        %v611 = vld [vmem:[%s610] sm:$0x1]
        %612 = vst [vmem:[#allocation3 + $0x31] sm:$0x1] %v611
        %s613 = sadd.s32 %s163, 50
        %s614 = sld [smem:[#allocation5 + %s613]]
        %s615 = sld [smem:[#allocation6 + %s613]]
        %s616 = scalar_lea.vmem [#allocation7], %s614
        %v617 = vld [vmem:[%s616] sm:$0x1]
        %618 = vst [vmem:[#allocation2 + $0x32] sm:$0x1] %v617
        %s619 = scalar_lea.vmem [#allocation9], %s615
        %v620 = vld [vmem:[%s619] sm:$0x1]
        %621 = vst [vmem:[#allocation3 + $0x32] sm:$0x1] %v620
        %s622 = sadd.s32 %s163, 51
        %s623 = sld [smem:[#allocation5 + %s622]]
        %s624 = sld [smem:[#allocation6 + %s622]]
        %s625 = scalar_lea.vmem [#allocation7], %s623
        %v626 = vld [vmem:[%s625] sm:$0x1]
        %627 = vst [vmem:[#allocation2 + $0x33] sm:$0x1] %v626
        %s628 = scalar_lea.vmem [#allocation9], %s624
        %v629 = vld [vmem:[%s628] sm:$0x1]
        %630 = vst [vmem:[#allocation3 + $0x33] sm:$0x1] %v629
        %s631 = sadd.s32 %s163, 52
        %s632 = sld [smem:[#allocation5 + %s631]]
        %s633 = sld [smem:[#allocation6 + %s631]]
        %s634 = scalar_lea.vmem [#allocation7], %s632
        %v635 = vld [vmem:[%s634] sm:$0x1]
        %636 = vst [vmem:[#allocation2 + $0x34] sm:$0x1] %v635
        %s637 = scalar_lea.vmem [#allocation9], %s633
        %v638 = vld [vmem:[%s637] sm:$0x1]
        %639 = vst [vmem:[#allocation3 + $0x34] sm:$0x1] %v638
        %s640 = sadd.s32 %s163, 53
        %s641 = sld [smem:[#allocation5 + %s640]]
        %s642 = sld [smem:[#allocation6 + %s640]]
        %s643 = scalar_lea.vmem [#allocation7], %s641
        %v644 = vld [vmem:[%s643] sm:$0x1]
        %645 = vst [vmem:[#allocation2 + $0x35] sm:$0x1] %v644
        %s646 = scalar_lea.vmem [#allocation9], %s642
        %v647 = vld [vmem:[%s646] sm:$0x1]
        %648 = vst [vmem:[#allocation3 + $0x35] sm:$0x1] %v647
        %s649 = sadd.s32 %s163, 54
        %s650 = sld [smem:[#allocation5 + %s649]]
        %s651 = sld [smem:[#allocation6 + %s649]]
        %s652 = scalar_lea.vmem [#allocation7], %s650
        %v653 = vld [vmem:[%s652] sm:$0x1]
        %654 = vst [vmem:[#allocation2 + $0x36] sm:$0x1] %v653
        %s655 = scalar_lea.vmem [#allocation9], %s651
        %v656 = vld [vmem:[%s655] sm:$0x1]
        %657 = vst [vmem:[#allocation3 + $0x36] sm:$0x1] %v656
        %s658 = sadd.s32 %s163, 55
        %s659 = sld [smem:[#allocation5 + %s658]]
        %s660 = sld [smem:[#allocation6 + %s658]]
        %s661 = scalar_lea.vmem [#allocation7], %s659
        %v662 = vld [vmem:[%s661] sm:$0x1]
        %663 = vst [vmem:[#allocation2 + $0x37] sm:$0x1] %v662
        %s664 = scalar_lea.vmem [#allocation9], %s660
        %v665 = vld [vmem:[%s664] sm:$0x1]
        %666 = vst [vmem:[#allocation3 + $0x37] sm:$0x1] %v665
        %s667 = sadd.s32 %s163, 56
        %s668 = sld [smem:[#allocation5 + %s667]]
        %s669 = sld [smem:[#allocation6 + %s667]]
        %s670 = scalar_lea.vmem [#allocation7], %s668
        %v671 = vld [vmem:[%s670] sm:$0x1]
        %672 = vst [vmem:[#allocation2 + $0x38] sm:$0x1] %v671
        %s673 = scalar_lea.vmem [#allocation9], %s669
        %v674 = vld [vmem:[%s673] sm:$0x1]
        %675 = vst [vmem:[#allocation3 + $0x38] sm:$0x1] %v674
        %s676 = sadd.s32 %s163, 57
        %s677 = sld [smem:[#allocation5 + %s676]]
        %s678 = sld [smem:[#allocation6 + %s676]]
        %s679 = scalar_lea.vmem [#allocation7], %s677
        %v680 = vld [vmem:[%s679] sm:$0x1]
        %681 = vst [vmem:[#allocation2 + $0x39] sm:$0x1] %v680
        %s682 = scalar_lea.vmem [#allocation9], %s678
        %v683 = vld [vmem:[%s682] sm:$0x1]
        %684 = vst [vmem:[#allocation3 + $0x39] sm:$0x1] %v683
        %s685 = sadd.s32 %s163, 58
        %s686 = sld [smem:[#allocation5 + %s685]]
        %s687 = sld [smem:[#allocation6 + %s685]]
        %s688 = scalar_lea.vmem [#allocation7], %s686
        %v689 = vld [vmem:[%s688] sm:$0x1]
        %690 = vst [vmem:[#allocation2 + $0x3a] sm:$0x1] %v689
        %s691 = scalar_lea.vmem [#allocation9], %s687
        %v692 = vld [vmem:[%s691] sm:$0x1]
        %693 = vst [vmem:[#allocation3 + $0x3a] sm:$0x1] %v692
        %s694 = sadd.s32 %s163, 59
        %s695 = sld [smem:[#allocation5 + %s694]]
        %s696 = sld [smem:[#allocation6 + %s694]]
        %s697 = scalar_lea.vmem [#allocation7], %s695
        %v698 = vld [vmem:[%s697] sm:$0x1]
        %699 = vst [vmem:[#allocation2 + $0x3b] sm:$0x1] %v698
        %s700 = scalar_lea.vmem [#allocation9], %s696
        %v701 = vld [vmem:[%s700] sm:$0x1]
        %702 = vst [vmem:[#allocation3 + $0x3b] sm:$0x1] %v701
        %s703 = sadd.s32 %s163, 60
        %s704 = sld [smem:[#allocation5 + %s703]]
        %s705 = sld [smem:[#allocation6 + %s703]]
        %s706 = scalar_lea.vmem [#allocation7], %s704
        %v707 = vld [vmem:[%s706] sm:$0x1]
        %708 = vst [vmem:[#allocation2 + $0x3c] sm:$0x1] %v707
        %s709 = scalar_lea.vmem [#allocation9], %s705
        %v710 = vld [vmem:[%s709] sm:$0x1]
        %711 = vst [vmem:[#allocation3 + $0x3c] sm:$0x1] %v710
        %s712 = sadd.s32 %s163, 61
        %s713 = sld [smem:[#allocation5 + %s712]]
        %s714 = sld [smem:[#allocation6 + %s712]]
        %s715 = scalar_lea.vmem [#allocation7], %s713
        %v716 = vld [vmem:[%s715] sm:$0x1]
        %717 = vst [vmem:[#allocation2 + $0x3d] sm:$0x1] %v716
        %s718 = scalar_lea.vmem [#allocation9], %s714
        %v719 = vld [vmem:[%s718] sm:$0x1]
        %720 = vst [vmem:[#allocation3 + $0x3d] sm:$0x1] %v719
        %s721 = sadd.s32 %s163, 62
        %s722 = sld [smem:[#allocation5 + %s721]]
        %s723 = sld [smem:[#allocation6 + %s721]]
        %s724 = scalar_lea.vmem [#allocation7], %s722
        %v725 = vld [vmem:[%s724] sm:$0x1]
        %726 = vst [vmem:[#allocation2 + $0x3e] sm:$0x1] %v725
        %s727 = scalar_lea.vmem [#allocation9], %s723
        %v728 = vld [vmem:[%s727] sm:$0x1]
        %729 = vst [vmem:[#allocation3 + $0x3e] sm:$0x1] %v728
        %s730 = sadd.s32 %s163, 63
        %s731 = sld [smem:[#allocation5 + %s730]]
        %s732 = sld [smem:[#allocation6 + %s730]]
        %s733 = scalar_lea.vmem [#allocation7], %s731
        %v734 = vld [vmem:[%s733] sm:$0x1]
        %735 = vst [vmem:[#allocation2 + $0x3f] sm:$0x1] %v734
        %s736 = scalar_lea.vmem [#allocation9], %s732
        %v737 = vld [vmem:[%s736] sm:$0x1]
        %738 = vst [vmem:[#allocation3 + $0x3f] sm:$0x1] %v737
        %s739 = sadd.s32 %s163, 64
        %s740 = sld [smem:[#allocation5 + %s739]]
        %s741 = sld [smem:[#allocation6 + %s739]]
        %s742 = scalar_lea.vmem [#allocation7], %s740
        %v743 = vld [vmem:[%s742] sm:$0x1]
        %744 = vst [vmem:[#allocation2 + $0x40] sm:$0x1] %v743
        %s745 = scalar_lea.vmem [#allocation9], %s741
        %v746 = vld [vmem:[%s745] sm:$0x1]
        %747 = vst [vmem:[#allocation3 + $0x40] sm:$0x1] %v746
        %s748 = sadd.s32 %s163, 65
        %s749 = sld [smem:[#allocation5 + %s748]]
        %s750 = sld [smem:[#allocation6 + %s748]]
        %s751 = scalar_lea.vmem [#allocation7], %s749
        %v752 = vld [vmem:[%s751] sm:$0x1]
        %753 = vst [vmem:[#allocation2 + $0x41] sm:$0x1] %v752
        %s754 = scalar_lea.vmem [#allocation9], %s750
        %v755 = vld [vmem:[%s754] sm:$0x1]
        %756 = vst [vmem:[#allocation3 + $0x41] sm:$0x1] %v755
        %s757 = sadd.s32 %s163, 66
        %s758 = sld [smem:[#allocation5 + %s757]]
        %s759 = sld [smem:[#allocation6 + %s757]]
        %s760 = scalar_lea.vmem [#allocation7], %s758
        %v761 = vld [vmem:[%s760] sm:$0x1]
        %762 = vst [vmem:[#allocation2 + $0x42] sm:$0x1] %v761
        %s763 = scalar_lea.vmem [#allocation9], %s759
        %v764 = vld [vmem:[%s763] sm:$0x1]
        %765 = vst [vmem:[#allocation3 + $0x42] sm:$0x1] %v764
        %s766 = sadd.s32 %s163, 67
        %s767 = sld [smem:[#allocation5 + %s766]]
        %s768 = sld [smem:[#allocation6 + %s766]]
        %s769 = scalar_lea.vmem [#allocation7], %s767
        %v770 = vld [vmem:[%s769] sm:$0x1]
        %771 = vst [vmem:[#allocation2 + $0x43] sm:$0x1] %v770
        %s772 = scalar_lea.vmem [#allocation9], %s768
        %v773 = vld [vmem:[%s772] sm:$0x1]
        %774 = vst [vmem:[#allocation3 + $0x43] sm:$0x1] %v773
        %s775 = sadd.s32 %s163, 68
        %s776 = sld [smem:[#allocation5 + %s775]]
        %s777 = sld [smem:[#allocation6 + %s775]]
        %s778 = scalar_lea.vmem [#allocation7], %s776
        %v779 = vld [vmem:[%s778] sm:$0x1]
        %780 = vst [vmem:[#allocation2 + $0x44] sm:$0x1] %v779
        %s781 = scalar_lea.vmem [#allocation9], %s777
        %v782 = vld [vmem:[%s781] sm:$0x1]
        %783 = vst [vmem:[#allocation3 + $0x44] sm:$0x1] %v782
        %s784 = sadd.s32 %s163, 69
        %s785 = sld [smem:[#allocation5 + %s784]]
        %s786 = sld [smem:[#allocation6 + %s784]]
        %s787 = scalar_lea.vmem [#allocation7], %s785
        %v788 = vld [vmem:[%s787] sm:$0x1]
        %789 = vst [vmem:[#allocation2 + $0x45] sm:$0x1] %v788
        %s790 = scalar_lea.vmem [#allocation9], %s786
        %v791 = vld [vmem:[%s790] sm:$0x1]
        %792 = vst [vmem:[#allocation3 + $0x45] sm:$0x1] %v791
        %s793 = sadd.s32 %s163, 70
        %s794 = sld [smem:[#allocation5 + %s793]]
        %s795 = sld [smem:[#allocation6 + %s793]]
        %s796 = scalar_lea.vmem [#allocation7], %s794
        %v797 = vld [vmem:[%s796] sm:$0x1]
        %798 = vst [vmem:[#allocation2 + $0x46] sm:$0x1] %v797
        %s799 = scalar_lea.vmem [#allocation9], %s795
        %v800 = vld [vmem:[%s799] sm:$0x1]
        %801 = vst [vmem:[#allocation3 + $0x46] sm:$0x1] %v800
        %s802 = sadd.s32 %s163, 71
        %s803 = sld [smem:[#allocation5 + %s802]]
        %s804 = sld [smem:[#allocation6 + %s802]]
        %s805 = scalar_lea.vmem [#allocation7], %s803
        %v806 = vld [vmem:[%s805] sm:$0x1]
        %807 = vst [vmem:[#allocation2 + $0x47] sm:$0x1] %v806
        %s808 = scalar_lea.vmem [#allocation9], %s804
        %v809 = vld [vmem:[%s808] sm:$0x1]
        %810 = vst [vmem:[#allocation3 + $0x47] sm:$0x1] %v809
        %s811 = sadd.s32 %s163, 72
        %s812 = sld [smem:[#allocation5 + %s811]]
        %s813 = sld [smem:[#allocation6 + %s811]]
        %s814 = scalar_lea.vmem [#allocation7], %s812
        %v815 = vld [vmem:[%s814] sm:$0x1]
        %816 = vst [vmem:[#allocation2 + $0x48] sm:$0x1] %v815
        %s817 = scalar_lea.vmem [#allocation9], %s813
        %v818 = vld [vmem:[%s817] sm:$0x1]
        %819 = vst [vmem:[#allocation3 + $0x48] sm:$0x1] %v818
        %s820 = sadd.s32 %s163, 73
        %s821 = sld [smem:[#allocation5 + %s820]]
        %s822 = sld [smem:[#allocation6 + %s820]]
        %s823 = scalar_lea.vmem [#allocation7], %s821
        %v824 = vld [vmem:[%s823] sm:$0x1]
        %825 = vst [vmem:[#allocation2 + $0x49] sm:$0x1] %v824
        %s826 = scalar_lea.vmem [#allocation9], %s822
        %v827 = vld [vmem:[%s826] sm:$0x1]
        %828 = vst [vmem:[#allocation3 + $0x49] sm:$0x1] %v827
        %s829 = sadd.s32 %s163, 74
        %s830 = sld [smem:[#allocation5 + %s829]]
        %s831 = sld [smem:[#allocation6 + %s829]]
        %s832 = scalar_lea.vmem [#allocation7], %s830
        %v833 = vld [vmem:[%s832] sm:$0x1]
        %834 = vst [vmem:[#allocation2 + $0x4a] sm:$0x1] %v833
        %s835 = scalar_lea.vmem [#allocation9], %s831
        %v836 = vld [vmem:[%s835] sm:$0x1]
        %837 = vst [vmem:[#allocation3 + $0x4a] sm:$0x1] %v836
        %s838 = sadd.s32 %s163, 75
        %s839 = sld [smem:[#allocation5 + %s838]]
        %s840 = sld [smem:[#allocation6 + %s838]]
        %s841 = scalar_lea.vmem [#allocation7], %s839
        %v842 = vld [vmem:[%s841] sm:$0x1]
        %843 = vst [vmem:[#allocation2 + $0x4b] sm:$0x1] %v842
        %s844 = scalar_lea.vmem [#allocation9], %s840
        %v845 = vld [vmem:[%s844] sm:$0x1]
        %846 = vst [vmem:[#allocation3 + $0x4b] sm:$0x1] %v845
        %s847 = sadd.s32 %s163, 76
        %s848 = sld [smem:[#allocation5 + %s847]]
        %s849 = sld [smem:[#allocation6 + %s847]]
        %s850 = scalar_lea.vmem [#allocation7], %s848
        %v851 = vld [vmem:[%s850] sm:$0x1]
        %852 = vst [vmem:[#allocation2 + $0x4c] sm:$0x1] %v851
        %s853 = scalar_lea.vmem [#allocation9], %s849
        %v854 = vld [vmem:[%s853] sm:$0x1]
        %855 = vst [vmem:[#allocation3 + $0x4c] sm:$0x1] %v854
        %s856 = sadd.s32 %s163, 77
        %s857 = sld [smem:[#allocation5 + %s856]]
        %s858 = sld [smem:[#allocation6 + %s856]]
        %s859 = scalar_lea.vmem [#allocation7], %s857
        %v860 = vld [vmem:[%s859] sm:$0x1]
        %861 = vst [vmem:[#allocation2 + $0x4d] sm:$0x1] %v860
        %s862 = scalar_lea.vmem [#allocation9], %s858
        %v863 = vld [vmem:[%s862] sm:$0x1]
        %864 = vst [vmem:[#allocation3 + $0x4d] sm:$0x1] %v863
        %s865 = sadd.s32 %s163, 78
        %s866 = sld [smem:[#allocation5 + %s865]]
        %s867 = sld [smem:[#allocation6 + %s865]]
        %s868 = scalar_lea.vmem [#allocation7], %s866
        %v869 = vld [vmem:[%s868] sm:$0x1]
        %870 = vst [vmem:[#allocation2 + $0x4e] sm:$0x1] %v869
        %s871 = scalar_lea.vmem [#allocation9], %s867
        %v872 = vld [vmem:[%s871] sm:$0x1]
        %873 = vst [vmem:[#allocation3 + $0x4e] sm:$0x1] %v872
        %s874 = sadd.s32 %s163, 79
        %s875 = sld [smem:[#allocation5 + %s874]]
        %s876 = sld [smem:[#allocation6 + %s874]]
        %s877 = scalar_lea.vmem [#allocation7], %s875
        %v878 = vld [vmem:[%s877] sm:$0x1]
        %879 = vst [vmem:[#allocation2 + $0x4f] sm:$0x1] %v878
        %s880 = scalar_lea.vmem [#allocation9], %s876
        %v881 = vld [vmem:[%s880] sm:$0x1]
        %882 = vst [vmem:[#allocation3 + $0x4f] sm:$0x1] %v881
        %s883 = sadd.s32 %s163, 80
        %s884 = sld [smem:[#allocation5 + %s883]]
        %s885 = sld [smem:[#allocation6 + %s883]]
        %s886 = scalar_lea.vmem [#allocation7], %s884
        %v887 = vld [vmem:[%s886] sm:$0x1]
        %888 = vst [vmem:[#allocation2 + $0x50] sm:$0x1] %v887
        %s889 = scalar_lea.vmem [#allocation9], %s885
        %v890 = vld [vmem:[%s889] sm:$0x1]
        %891 = vst [vmem:[#allocation3 + $0x50] sm:$0x1] %v890
        %s892 = sadd.s32 %s163, 81
        %s893 = sld [smem:[#allocation5 + %s892]]
        %s894 = sld [smem:[#allocation6 + %s892]]
        %s895 = scalar_lea.vmem [#allocation7], %s893
        %v896 = vld [vmem:[%s895] sm:$0x1]
        %897 = vst [vmem:[#allocation2 + $0x51] sm:$0x1] %v896
        %s898 = scalar_lea.vmem [#allocation9], %s894
        %v899 = vld [vmem:[%s898] sm:$0x1]
        %900 = vst [vmem:[#allocation3 + $0x51] sm:$0x1] %v899
        %s901 = sadd.s32 %s163, 82
        %s902 = sld [smem:[#allocation5 + %s901]]
        %s903 = sld [smem:[#allocation6 + %s901]]
        %s904 = scalar_lea.vmem [#allocation7], %s902
        %v905 = vld [vmem:[%s904] sm:$0x1]
        %906 = vst [vmem:[#allocation2 + $0x52] sm:$0x1] %v905
        %s907 = scalar_lea.vmem [#allocation9], %s903
        %v908 = vld [vmem:[%s907] sm:$0x1]
        %909 = vst [vmem:[#allocation3 + $0x52] sm:$0x1] %v908
        %s910 = sadd.s32 %s163, 83
        %s911 = sld [smem:[#allocation5 + %s910]]
        %s912 = sld [smem:[#allocation6 + %s910]]
        %s913 = scalar_lea.vmem [#allocation7], %s911
        %v914 = vld [vmem:[%s913] sm:$0x1]
        %915 = vst [vmem:[#allocation2 + $0x53] sm:$0x1] %v914
        %s916 = scalar_lea.vmem [#allocation9], %s912
        %v917 = vld [vmem:[%s916] sm:$0x1]
        %918 = vst [vmem:[#allocation3 + $0x53] sm:$0x1] %v917
        %s919 = sadd.s32 %s163, 84
        %s920 = sld [smem:[#allocation5 + %s919]]
        %s921 = sld [smem:[#allocation6 + %s919]]
        %s922 = scalar_lea.vmem [#allocation7], %s920
        %v923 = vld [vmem:[%s922] sm:$0x1]
        %924 = vst [vmem:[#allocation2 + $0x54] sm:$0x1] %v923
        %s925 = scalar_lea.vmem [#allocation9], %s921
        %v926 = vld [vmem:[%s925] sm:$0x1]
        %927 = vst [vmem:[#allocation3 + $0x54] sm:$0x1] %v926
        %s928 = sadd.s32 %s163, 85
        %s929 = sld [smem:[#allocation5 + %s928]]
        %s930 = sld [smem:[#allocation6 + %s928]]
        %s931 = scalar_lea.vmem [#allocation7], %s929
        %v932 = vld [vmem:[%s931] sm:$0x1]
        %933 = vst [vmem:[#allocation2 + $0x55] sm:$0x1] %v932
        %s934 = scalar_lea.vmem [#allocation9], %s930
        %v935 = vld [vmem:[%s934] sm:$0x1]
        %936 = vst [vmem:[#allocation3 + $0x55] sm:$0x1] %v935
        %s937 = sadd.s32 %s163, 86
        %s938 = sld [smem:[#allocation5 + %s937]]
        %s939 = sld [smem:[#allocation6 + %s937]]
        %s940 = scalar_lea.vmem [#allocation7], %s938
        %v941 = vld [vmem:[%s940] sm:$0x1]
        %942 = vst [vmem:[#allocation2 + $0x56] sm:$0x1] %v941
        %s943 = scalar_lea.vmem [#allocation9], %s939
        %v944 = vld [vmem:[%s943] sm:$0x1]
        %945 = vst [vmem:[#allocation3 + $0x56] sm:$0x1] %v944
        %s946 = sadd.s32 %s163, 87
        %s947 = sld [smem:[#allocation5 + %s946]]
        %s948 = sld [smem:[#allocation6 + %s946]]
        %s949 = scalar_lea.vmem [#allocation7], %s947
        %v950 = vld [vmem:[%s949] sm:$0x1]
        %951 = vst [vmem:[#allocation2 + $0x57] sm:$0x1] %v950
        %s952 = scalar_lea.vmem [#allocation9], %s948
        %v953 = vld [vmem:[%s952] sm:$0x1]
        %954 = vst [vmem:[#allocation3 + $0x57] sm:$0x1] %v953
        %s955 = sadd.s32 %s163, 88
        %s956 = sld [smem:[#allocation5 + %s955]]
        %s957 = sld [smem:[#allocation6 + %s955]]
        %s958 = scalar_lea.vmem [#allocation7], %s956
        %v959 = vld [vmem:[%s958] sm:$0x1]
        %960 = vst [vmem:[#allocation2 + $0x58] sm:$0x1] %v959
        %s961 = scalar_lea.vmem [#allocation9], %s957
        %v962 = vld [vmem:[%s961] sm:$0x1]
        %963 = vst [vmem:[#allocation3 + $0x58] sm:$0x1] %v962
        %s964 = sadd.s32 %s163, 89
        %s965 = sld [smem:[#allocation5 + %s964]]
        %s966 = sld [smem:[#allocation6 + %s964]]
        %s967 = scalar_lea.vmem [#allocation7], %s965
        %v968 = vld [vmem:[%s967] sm:$0x1]
        %969 = vst [vmem:[#allocation2 + $0x59] sm:$0x1] %v968
        %s970 = scalar_lea.vmem [#allocation9], %s966
        %v971 = vld [vmem:[%s970] sm:$0x1]
        %972 = vst [vmem:[#allocation3 + $0x59] sm:$0x1] %v971
        %s973 = sadd.s32 %s163, 90
        %s974 = sld [smem:[#allocation5 + %s973]]
        %s975 = sld [smem:[#allocation6 + %s973]]
        %s976 = scalar_lea.vmem [#allocation7], %s974
        %v977 = vld [vmem:[%s976] sm:$0x1]
        %978 = vst [vmem:[#allocation2 + $0x5a] sm:$0x1] %v977
        %s979 = scalar_lea.vmem [#allocation9], %s975
        %v980 = vld [vmem:[%s979] sm:$0x1]
        %981 = vst [vmem:[#allocation3 + $0x5a] sm:$0x1] %v980
        %s982 = sadd.s32 %s163, 91
        %s983 = sld [smem:[#allocation5 + %s982]]
        %s984 = sld [smem:[#allocation6 + %s982]]
        %s985 = scalar_lea.vmem [#allocation7], %s983
        %v986 = vld [vmem:[%s985] sm:$0x1]
        %987 = vst [vmem:[#allocation2 + $0x5b] sm:$0x1] %v986
        %s988 = scalar_lea.vmem [#allocation9], %s984
        %v989 = vld [vmem:[%s988] sm:$0x1]
        %990 = vst [vmem:[#allocation3 + $0x5b] sm:$0x1] %v989
        %s991 = sadd.s32 %s163, 92
        %s992 = sld [smem:[#allocation5 + %s991]]
        %s993 = sld [smem:[#allocation6 + %s991]]
        %s994 = scalar_lea.vmem [#allocation7], %s992
        %v995 = vld [vmem:[%s994] sm:$0x1]
        %996 = vst [vmem:[#allocation2 + $0x5c] sm:$0x1] %v995
        %s997 = scalar_lea.vmem [#allocation9], %s993
        %v998 = vld [vmem:[%s997] sm:$0x1]
        %999 = vst [vmem:[#allocation3 + $0x5c] sm:$0x1] %v998
        %s1000 = sadd.s32 %s163, 93
        %s1001 = sld [smem:[#allocation5 + %s1000]]
        %s1002 = sld [smem:[#allocation6 + %s1000]]
        %s1003 = scalar_lea.vmem [#allocation7], %s1001
        %v1004 = vld [vmem:[%s1003] sm:$0x1]
        %1005 = vst [vmem:[#allocation2 + $0x5d] sm:$0x1] %v1004
        %s1006 = scalar_lea.vmem [#allocation9], %s1002
        %v1007 = vld [vmem:[%s1006] sm:$0x1]
        %1008 = vst [vmem:[#allocation3 + $0x5d] sm:$0x1] %v1007
        %s1009 = sadd.s32 %s163, 94
        %s1010 = sld [smem:[#allocation5 + %s1009]]
        %s1011 = sld [smem:[#allocation6 + %s1009]]
        %s1012 = scalar_lea.vmem [#allocation7], %s1010
        %v1013 = vld [vmem:[%s1012] sm:$0x1]
        %1014 = vst [vmem:[#allocation2 + $0x5e] sm:$0x1] %v1013
        %s1015 = scalar_lea.vmem [#allocation9], %s1011
        %v1016 = vld [vmem:[%s1015] sm:$0x1]
        %1017 = vst [vmem:[#allocation3 + $0x5e] sm:$0x1] %v1016
        %s1018 = sadd.s32 %s163, 95
        %s1019 = sld [smem:[#allocation5 + %s1018]]
        %s1020 = sld [smem:[#allocation6 + %s1018]]
        %s1021 = scalar_lea.vmem [#allocation7], %s1019
        %v1022 = vld [vmem:[%s1021] sm:$0x1]
        %1023 = vst [vmem:[#allocation2 + $0x5f] sm:$0x1] %v1022
        %s1024 = scalar_lea.vmem [#allocation9], %s1020
        %v1025 = vld [vmem:[%s1024] sm:$0x1]
        %1026 = vst [vmem:[#allocation3 + $0x5f] sm:$0x1] %v1025
        %s1027 = sadd.s32 %s163, 96
        %s1028 = sld [smem:[#allocation5 + %s1027]]
        %s1029 = sld [smem:[#allocation6 + %s1027]]
        %s1030 = scalar_lea.vmem [#allocation7], %s1028
        %v1031 = vld [vmem:[%s1030] sm:$0x1]
        %1032 = vst [vmem:[#allocation2 + $0x60] sm:$0x1] %v1031
        %s1033 = scalar_lea.vmem [#allocation9], %s1029
        %v1034 = vld [vmem:[%s1033] sm:$0x1]
        %1035 = vst [vmem:[#allocation3 + $0x60] sm:$0x1] %v1034
        %s1036 = sadd.s32 %s163, 97
        %s1037 = sld [smem:[#allocation5 + %s1036]]
        %s1038 = sld [smem:[#allocation6 + %s1036]]
        %s1039 = scalar_lea.vmem [#allocation7], %s1037
        %v1040 = vld [vmem:[%s1039] sm:$0x1]
        %1041 = vst [vmem:[#allocation2 + $0x61] sm:$0x1] %v1040
        %s1042 = scalar_lea.vmem [#allocation9], %s1038
        %v1043 = vld [vmem:[%s1042] sm:$0x1]
        %1044 = vst [vmem:[#allocation3 + $0x61] sm:$0x1] %v1043
        %s1045 = sadd.s32 %s163, 98
        %s1046 = sld [smem:[#allocation5 + %s1045]]
        %s1047 = sld [smem:[#allocation6 + %s1045]]
        %s1048 = scalar_lea.vmem [#allocation7], %s1046
        %v1049 = vld [vmem:[%s1048] sm:$0x1]
        %1050 = vst [vmem:[#allocation2 + $0x62] sm:$0x1] %v1049
        %s1051 = scalar_lea.vmem [#allocation9], %s1047
        %v1052 = vld [vmem:[%s1051] sm:$0x1]
        %1053 = vst [vmem:[#allocation3 + $0x62] sm:$0x1] %v1052
        %s1054 = sadd.s32 %s163, 99
        %s1055 = sld [smem:[#allocation5 + %s1054]]
        %s1056 = sld [smem:[#allocation6 + %s1054]]
        %s1057 = scalar_lea.vmem [#allocation7], %s1055
        %v1058 = vld [vmem:[%s1057] sm:$0x1]
        %1059 = vst [vmem:[#allocation2 + $0x63] sm:$0x1] %v1058
        %s1060 = scalar_lea.vmem [#allocation9], %s1056
        %v1061 = vld [vmem:[%s1060] sm:$0x1]
        %1062 = vst [vmem:[#allocation3 + $0x63] sm:$0x1] %v1061
        %s1063 = sadd.s32 %s163, 100
        %s1064 = sld [smem:[#allocation5 + %s1063]]
        %s1065 = sld [smem:[#allocation6 + %s1063]]
        %s1066 = scalar_lea.vmem [#allocation7], %s1064
        %v1067 = vld [vmem:[%s1066] sm:$0x1]
        %1068 = vst [vmem:[#allocation2 + $0x64] sm:$0x1] %v1067
        %s1069 = scalar_lea.vmem [#allocation9], %s1065
        %v1070 = vld [vmem:[%s1069] sm:$0x1]
        %1071 = vst [vmem:[#allocation3 + $0x64] sm:$0x1] %v1070
        %s1072 = sadd.s32 %s163, 101
        %s1073 = sld [smem:[#allocation5 + %s1072]]
        %s1074 = sld [smem:[#allocation6 + %s1072]]
        %s1075 = scalar_lea.vmem [#allocation7], %s1073
        %v1076 = vld [vmem:[%s1075] sm:$0x1]
        %1077 = vst [vmem:[#allocation2 + $0x65] sm:$0x1] %v1076
        %s1078 = scalar_lea.vmem [#allocation9], %s1074
        %v1079 = vld [vmem:[%s1078] sm:$0x1]
        %1080 = vst [vmem:[#allocation3 + $0x65] sm:$0x1] %v1079
        %s1081 = sadd.s32 %s163, 102
        %s1082 = sld [smem:[#allocation5 + %s1081]]
        %s1083 = sld [smem:[#allocation6 + %s1081]]
        %s1084 = scalar_lea.vmem [#allocation7], %s1082
        %v1085 = vld [vmem:[%s1084] sm:$0x1]
        %1086 = vst [vmem:[#allocation2 + $0x66] sm:$0x1] %v1085
        %s1087 = scalar_lea.vmem [#allocation9], %s1083
        %v1088 = vld [vmem:[%s1087] sm:$0x1]
        %1089 = vst [vmem:[#allocation3 + $0x66] sm:$0x1] %v1088
        %s1090 = sadd.s32 %s163, 103
        %s1091 = sld [smem:[#allocation5 + %s1090]]
        %s1092 = sld [smem:[#allocation6 + %s1090]]
        %s1093 = scalar_lea.vmem [#allocation7], %s1091
        %v1094 = vld [vmem:[%s1093] sm:$0x1]
        %1095 = vst [vmem:[#allocation2 + $0x67] sm:$0x1] %v1094
        %s1096 = scalar_lea.vmem [#allocation9], %s1092
        %v1097 = vld [vmem:[%s1096] sm:$0x1]
        %1098 = vst [vmem:[#allocation3 + $0x67] sm:$0x1] %v1097
        %s1099 = sadd.s32 %s163, 104
        %s1100 = sld [smem:[#allocation5 + %s1099]]
        %s1101 = sld [smem:[#allocation6 + %s1099]]
        %s1102 = scalar_lea.vmem [#allocation7], %s1100
        %v1103 = vld [vmem:[%s1102] sm:$0x1]
        %1104 = vst [vmem:[#allocation2 + $0x68] sm:$0x1] %v1103
        %s1105 = scalar_lea.vmem [#allocation9], %s1101
        %v1106 = vld [vmem:[%s1105] sm:$0x1]
        %1107 = vst [vmem:[#allocation3 + $0x68] sm:$0x1] %v1106
        %s1108 = sadd.s32 %s163, 105
        %s1109 = sld [smem:[#allocation5 + %s1108]]
        %s1110 = sld [smem:[#allocation6 + %s1108]]
        %s1111 = scalar_lea.vmem [#allocation7], %s1109
        %v1112 = vld [vmem:[%s1111] sm:$0x1]
        %1113 = vst [vmem:[#allocation2 + $0x69] sm:$0x1] %v1112
        %s1114 = scalar_lea.vmem [#allocation9], %s1110
        %v1115 = vld [vmem:[%s1114] sm:$0x1]
        %1116 = vst [vmem:[#allocation3 + $0x69] sm:$0x1] %v1115
        %s1117 = sadd.s32 %s163, 106
        %s1118 = sld [smem:[#allocation5 + %s1117]]
        %s1119 = sld [smem:[#allocation6 + %s1117]]
        %s1120 = scalar_lea.vmem [#allocation7], %s1118
        %v1121 = vld [vmem:[%s1120] sm:$0x1]
        %1122 = vst [vmem:[#allocation2 + $0x6a] sm:$0x1] %v1121
        %s1123 = scalar_lea.vmem [#allocation9], %s1119
        %v1124 = vld [vmem:[%s1123] sm:$0x1]
        %1125 = vst [vmem:[#allocation3 + $0x6a] sm:$0x1] %v1124
        %s1126 = sadd.s32 %s163, 107
        %s1127 = sld [smem:[#allocation5 + %s1126]]
        %s1128 = sld [smem:[#allocation6 + %s1126]]
        %s1129 = scalar_lea.vmem [#allocation7], %s1127
        %v1130 = vld [vmem:[%s1129] sm:$0x1]
        %1131 = vst [vmem:[#allocation2 + $0x6b] sm:$0x1] %v1130
        %s1132 = scalar_lea.vmem [#allocation9], %s1128
        %v1133 = vld [vmem:[%s1132] sm:$0x1]
        %1134 = vst [vmem:[#allocation3 + $0x6b] sm:$0x1] %v1133
        %s1135 = sadd.s32 %s163, 108
        %s1136 = sld [smem:[#allocation5 + %s1135]]
        %s1137 = sld [smem:[#allocation6 + %s1135]]
        %s1138 = scalar_lea.vmem [#allocation7], %s1136
        %v1139 = vld [vmem:[%s1138] sm:$0x1]
        %1140 = vst [vmem:[#allocation2 + $0x6c] sm:$0x1] %v1139
        %s1141 = scalar_lea.vmem [#allocation9], %s1137
        %v1142 = vld [vmem:[%s1141] sm:$0x1]
        %1143 = vst [vmem:[#allocation3 + $0x6c] sm:$0x1] %v1142
        %s1144 = sadd.s32 %s163, 109
        %s1145 = sld [smem:[#allocation5 + %s1144]]
        %s1146 = sld [smem:[#allocation6 + %s1144]]
        %s1147 = scalar_lea.vmem [#allocation7], %s1145
        %v1148 = vld [vmem:[%s1147] sm:$0x1]
        %1149 = vst [vmem:[#allocation2 + $0x6d] sm:$0x1] %v1148
        %s1150 = scalar_lea.vmem [#allocation9], %s1146
        %v1151 = vld [vmem:[%s1150] sm:$0x1]
        %1152 = vst [vmem:[#allocation3 + $0x6d] sm:$0x1] %v1151
        %s1153 = sadd.s32 %s163, 110
        %s1154 = sld [smem:[#allocation5 + %s1153]]
        %s1155 = sld [smem:[#allocation6 + %s1153]]
        %s1156 = scalar_lea.vmem [#allocation7], %s1154
        %v1157 = vld [vmem:[%s1156] sm:$0x1]
        %1158 = vst [vmem:[#allocation2 + $0x6e] sm:$0x1] %v1157
        %s1159 = scalar_lea.vmem [#allocation9], %s1155
        %v1160 = vld [vmem:[%s1159] sm:$0x1]
        %1161 = vst [vmem:[#allocation3 + $0x6e] sm:$0x1] %v1160
        %s1162 = sadd.s32 %s163, 111
        %s1163 = sld [smem:[#allocation5 + %s1162]]
        %s1164 = sld [smem:[#allocation6 + %s1162]]
        %s1165 = scalar_lea.vmem [#allocation7], %s1163
        %v1166 = vld [vmem:[%s1165] sm:$0x1]
        %1167 = vst [vmem:[#allocation2 + $0x6f] sm:$0x1] %v1166
        %s1168 = scalar_lea.vmem [#allocation9], %s1164
        %v1169 = vld [vmem:[%s1168] sm:$0x1]
        %1170 = vst [vmem:[#allocation3 + $0x6f] sm:$0x1] %v1169
        %s1171 = sadd.s32 %s163, 112
        %s1172 = sld [smem:[#allocation5 + %s1171]]
        %s1173 = sld [smem:[#allocation6 + %s1171]]
        %s1174 = scalar_lea.vmem [#allocation7], %s1172
        %v1175 = vld [vmem:[%s1174] sm:$0x1]
        %1176 = vst [vmem:[#allocation2 + $0x70] sm:$0x1] %v1175
        %s1177 = scalar_lea.vmem [#allocation9], %s1173
        %v1178 = vld [vmem:[%s1177] sm:$0x1]
        %1179 = vst [vmem:[#allocation3 + $0x70] sm:$0x1] %v1178
        %s1180 = sadd.s32 %s163, 113
        %s1181 = sld [smem:[#allocation5 + %s1180]]
        %s1182 = sld [smem:[#allocation6 + %s1180]]
        %s1183 = scalar_lea.vmem [#allocation7], %s1181
        %v1184 = vld [vmem:[%s1183] sm:$0x1]
        %1185 = vst [vmem:[#allocation2 + $0x71] sm:$0x1] %v1184
        %s1186 = scalar_lea.vmem [#allocation9], %s1182
        %v1187 = vld [vmem:[%s1186] sm:$0x1]
        %1188 = vst [vmem:[#allocation3 + $0x71] sm:$0x1] %v1187
        %s1189 = sadd.s32 %s163, 114
        %s1190 = sld [smem:[#allocation5 + %s1189]]
        %s1191 = sld [smem:[#allocation6 + %s1189]]
        %s1192 = scalar_lea.vmem [#allocation7], %s1190
        %v1193 = vld [vmem:[%s1192] sm:$0x1]
        %1194 = vst [vmem:[#allocation2 + $0x72] sm:$0x1] %v1193
        %s1195 = scalar_lea.vmem [#allocation9], %s1191
        %v1196 = vld [vmem:[%s1195] sm:$0x1]
        %1197 = vst [vmem:[#allocation3 + $0x72] sm:$0x1] %v1196
        %s1198 = sadd.s32 %s163, 115
        %s1199 = sld [smem:[#allocation5 + %s1198]]
        %s1200 = sld [smem:[#allocation6 + %s1198]]
        %s1201 = scalar_lea.vmem [#allocation7], %s1199
        %v1202 = vld [vmem:[%s1201] sm:$0x1]
        %1203 = vst [vmem:[#allocation2 + $0x73] sm:$0x1] %v1202
        %s1204 = scalar_lea.vmem [#allocation9], %s1200
        %v1205 = vld [vmem:[%s1204] sm:$0x1]
        %1206 = vst [vmem:[#allocation3 + $0x73] sm:$0x1] %v1205
        %s1207 = sadd.s32 %s163, 116
        %s1208 = sld [smem:[#allocation5 + %s1207]]
        %s1209 = sld [smem:[#allocation6 + %s1207]]
        %s1210 = scalar_lea.vmem [#allocation7], %s1208
        %v1211 = vld [vmem:[%s1210] sm:$0x1]
        %1212 = vst [vmem:[#allocation2 + $0x74] sm:$0x1] %v1211
        %s1213 = scalar_lea.vmem [#allocation9], %s1209
        %v1214 = vld [vmem:[%s1213] sm:$0x1]
        %1215 = vst [vmem:[#allocation3 + $0x74] sm:$0x1] %v1214
        %s1216 = sadd.s32 %s163, 117
        %s1217 = sld [smem:[#allocation5 + %s1216]]
        %s1218 = sld [smem:[#allocation6 + %s1216]]
        %s1219 = scalar_lea.vmem [#allocation7], %s1217
        %v1220 = vld [vmem:[%s1219] sm:$0x1]
        %1221 = vst [vmem:[#allocation2 + $0x75] sm:$0x1] %v1220
        %s1222 = scalar_lea.vmem [#allocation9], %s1218
        %v1223 = vld [vmem:[%s1222] sm:$0x1]
        %1224 = vst [vmem:[#allocation3 + $0x75] sm:$0x1] %v1223
        %s1225 = sadd.s32 %s163, 118
        %s1226 = sld [smem:[#allocation5 + %s1225]]
        %s1227 = sld [smem:[#allocation6 + %s1225]]
        %s1228 = scalar_lea.vmem [#allocation7], %s1226
        %v1229 = vld [vmem:[%s1228] sm:$0x1]
        %1230 = vst [vmem:[#allocation2 + $0x76] sm:$0x1] %v1229
        %s1231 = scalar_lea.vmem [#allocation9], %s1227
        %v1232 = vld [vmem:[%s1231] sm:$0x1]
        %1233 = vst [vmem:[#allocation3 + $0x76] sm:$0x1] %v1232
        %s1234 = sadd.s32 %s163, 119
        %s1235 = sld [smem:[#allocation5 + %s1234]]
        %s1236 = sld [smem:[#allocation6 + %s1234]]
        %s1237 = scalar_lea.vmem [#allocation7], %s1235
        %v1238 = vld [vmem:[%s1237] sm:$0x1]
        %1239 = vst [vmem:[#allocation2 + $0x77] sm:$0x1] %v1238
        %s1240 = scalar_lea.vmem [#allocation9], %s1236
        %v1241 = vld [vmem:[%s1240] sm:$0x1]
        %1242 = vst [vmem:[#allocation3 + $0x77] sm:$0x1] %v1241
        %s1243 = sadd.s32 %s163, 120
        %s1244 = sld [smem:[#allocation5 + %s1243]]
        %s1245 = sld [smem:[#allocation6 + %s1243]]
        %s1246 = scalar_lea.vmem [#allocation7], %s1244
        %v1247 = vld [vmem:[%s1246] sm:$0x1]
        %1248 = vst [vmem:[#allocation2 + $0x78] sm:$0x1] %v1247
        %s1249 = scalar_lea.vmem [#allocation9], %s1245
        %v1250 = vld [vmem:[%s1249] sm:$0x1]
        %1251 = vst [vmem:[#allocation3 + $0x78] sm:$0x1] %v1250
        %s1252 = sadd.s32 %s163, 121
        %s1253 = sld [smem:[#allocation5 + %s1252]]
        %s1254 = sld [smem:[#allocation6 + %s1252]]
        %s1255 = scalar_lea.vmem [#allocation7], %s1253
        %v1256 = vld [vmem:[%s1255] sm:$0x1]
        %1257 = vst [vmem:[#allocation2 + $0x79] sm:$0x1] %v1256
        %s1258 = scalar_lea.vmem [#allocation9], %s1254
        %v1259 = vld [vmem:[%s1258] sm:$0x1]
        %1260 = vst [vmem:[#allocation3 + $0x79] sm:$0x1] %v1259
        %s1261 = sadd.s32 %s163, 122
        %s1262 = sld [smem:[#allocation5 + %s1261]]
        %s1263 = sld [smem:[#allocation6 + %s1261]]
        %s1264 = scalar_lea.vmem [#allocation7], %s1262
        %v1265 = vld [vmem:[%s1264] sm:$0x1]
        %1266 = vst [vmem:[#allocation2 + $0x7a] sm:$0x1] %v1265
        %s1267 = scalar_lea.vmem [#allocation9], %s1263
        %v1268 = vld [vmem:[%s1267] sm:$0x1]
        %1269 = vst [vmem:[#allocation3 + $0x7a] sm:$0x1] %v1268
        %s1270 = sadd.s32 %s163, 123
        %s1271 = sld [smem:[#allocation5 + %s1270]]
        %s1272 = sld [smem:[#allocation6 + %s1270]]
        %s1273 = scalar_lea.vmem [#allocation7], %s1271
        %v1274 = vld [vmem:[%s1273] sm:$0x1]
        %1275 = vst [vmem:[#allocation2 + $0x7b] sm:$0x1] %v1274
        %s1276 = scalar_lea.vmem [#allocation9], %s1272
        %v1277 = vld [vmem:[%s1276] sm:$0x1]
        %1278 = vst [vmem:[#allocation3 + $0x7b] sm:$0x1] %v1277
        %s1279 = sadd.s32 %s163, 124
        %s1280 = sld [smem:[#allocation5 + %s1279]]
        %s1281 = sld [smem:[#allocation6 + %s1279]]
        %s1282 = scalar_lea.vmem [#allocation7], %s1280
        %v1283 = vld [vmem:[%s1282] sm:$0x1]
        %1284 = vst [vmem:[#allocation2 + $0x7c] sm:$0x1] %v1283
        %s1285 = scalar_lea.vmem [#allocation9], %s1281
        %v1286 = vld [vmem:[%s1285] sm:$0x1]
        %1287 = vst [vmem:[#allocation3 + $0x7c] sm:$0x1] %v1286
        %s1288 = sadd.s32 %s163, 125
        %s1289 = sld [smem:[#allocation5 + %s1288]]
        %s1290 = sld [smem:[#allocation6 + %s1288]]
        %s1291 = scalar_lea.vmem [#allocation7], %s1289
        %v1292 = vld [vmem:[%s1291] sm:$0x1]
        %1293 = vst [vmem:[#allocation2 + $0x7d] sm:$0x1] %v1292
        %s1294 = scalar_lea.vmem [#allocation9], %s1290
        %v1295 = vld [vmem:[%s1294] sm:$0x1]
        %1296 = vst [vmem:[#allocation3 + $0x7d] sm:$0x1] %v1295
        %s1297 = sadd.s32 %s163, 126
        %s1298 = sld [smem:[#allocation5 + %s1297]]
        %s1299 = sld [smem:[#allocation6 + %s1297]]
        %s1300 = scalar_lea.vmem [#allocation7], %s1298
        %v1301 = vld [vmem:[%s1300] sm:$0x1]
        %1302 = vst [vmem:[#allocation2 + $0x7e] sm:$0x1] %v1301
        %s1303 = scalar_lea.vmem [#allocation9], %s1299
        %v1304 = vld [vmem:[%s1303] sm:$0x1]
        %1305 = vst [vmem:[#allocation3 + $0x7e] sm:$0x1] %v1304
        %s1306 = sadd.s32 %s163, 127
        %s1307 = sld [smem:[#allocation5 + %s1306]]
        %s1308 = sld [smem:[#allocation6 + %s1306]]
        %s1309 = scalar_lea.vmem [#allocation7], %s1307
        %v1310 = vld [vmem:[%s1309] sm:$0x1]
        %1311 = vst [vmem:[#allocation2 + $0x7f] sm:$0x1] %v1310
        %s1312 = scalar_lea.vmem [#allocation9], %s1308
        %v1313 = vld [vmem:[%s1312] sm:$0x1]
        %1314 = vst [vmem:[#allocation3 + $0x7f] sm:$0x1] %v1313
        %v1315 = vld [vmem:[#allocation2] sm:$0xff]
        %v1316 = vld [vmem:[#allocation2 + $0x8] sm:$0xff]
        %v1317 = vld [vmem:[#allocation2 + $0x10] sm:$0xff]
        %v1318 = vld [vmem:[#allocation2 + $0x18] sm:$0xff]
        %v1319 = vld [vmem:[#allocation2 + $0x20] sm:$0xff]
        %v1320 = vld [vmem:[#allocation2 + $0x28] sm:$0xff]
        %v1321 = vld [vmem:[#allocation2 + $0x30] sm:$0xff]
        %v1322 = vld [vmem:[#allocation2 + $0x38] sm:$0xff]
        %v1323 = vld [vmem:[#allocation2 + $0x40] sm:$0xff]
        %v1324 = vld [vmem:[#allocation2 + $0x48] sm:$0xff]
        %v1325 = vld [vmem:[#allocation2 + $0x50] sm:$0xff]
        %v1326 = vld [vmem:[#allocation2 + $0x58] sm:$0xff]
        %v1327 = vld [vmem:[#allocation2 + $0x60] sm:$0xff]
        %v1328 = vld [vmem:[#allocation2 + $0x68] sm:$0xff]
        %v1329 = vld [vmem:[#allocation2 + $0x70] sm:$0xff]
        %v1330 = vld [vmem:[#allocation2 + $0x78] sm:$0xff]
        %v1331 = vld [vmem:[#allocation3] sm:$0xff]
        %v1332 = vld [vmem:[#allocation3 + $0x8] sm:$0xff]
        %v1333 = vld [vmem:[#allocation3 + $0x10] sm:$0xff]
        %v1334 = vld [vmem:[#allocation3 + $0x18] sm:$0xff]
        %v1335 = vld [vmem:[#allocation3 + $0x20] sm:$0xff]
        %v1336 = vld [vmem:[#allocation3 + $0x28] sm:$0xff]
        %v1337 = vld [vmem:[#allocation3 + $0x30] sm:$0xff]
        %v1338 = vld [vmem:[#allocation3 + $0x38] sm:$0xff]
        %v1339 = vld [vmem:[#allocation3 + $0x40] sm:$0xff]
        %v1340 = vld [vmem:[#allocation3 + $0x48] sm:$0xff]
        %v1341 = vld [vmem:[#allocation3 + $0x50] sm:$0xff]
        %v1342 = vld [vmem:[#allocation3 + $0x58] sm:$0xff]
        %v1343 = vld [vmem:[#allocation3 + $0x60] sm:$0xff]
        %v1344 = vld [vmem:[#allocation3 + $0x68] sm:$0xff]
        %v1345 = vld [vmem:[#allocation3 + $0x70] sm:$0xff]
        %v1346 = vld [vmem:[#allocation3 + $0x78] sm:$0xff]
        %v1347 = vmul.f32 %v1315, %v1331
        %v1348 = vmul.f32 %v1316, %v1332
        %v1349 = vmul.f32 %v1317, %v1333
        %v1350 = vmul.f32 %v1318, %v1334
        %v1351 = vmul.f32 %v1319, %v1335
        %v1352 = vmul.f32 %v1320, %v1336
        %v1353 = vmul.f32 %v1321, %v1337
        %v1354 = vmul.f32 %v1322, %v1338
        %v1355 = vmul.f32 %v1323, %v1339
        %v1356 = vmul.f32 %v1324, %v1340
        %v1357 = vmul.f32 %v1325, %v1341
        %v1358 = vmul.f32 %v1326, %v1342
        %v1359 = vmul.f32 %v1327, %v1343
        %v1360 = vmul.f32 %v1328, %v1344
        %v1361 = vmul.f32 %v1329, %v1345
        %v1362 = vmul.f32 %v1330, %v1346
        %1363 = vadd.xlane.f32.xlu0 %v1347
        %v1364 = vpop.xlane.xlu0 %1363
        %1365 = vadd.xlane.f32.xlu0 %v1348
        %v1366 = vpop.xlane.xlu0 %1365
        %1367 = vadd.xlane.f32.xlu0 %v1349
        %v1368 = vpop.xlane.xlu0 %1367
        %1369 = vadd.xlane.f32.xlu0 %v1350
        %v1370 = vpop.xlane.xlu0 %1369
        %1371 = vadd.xlane.f32.xlu0 %v1351
        %v1372 = vpop.xlane.xlu0 %1371
        %1373 = vadd.xlane.f32.xlu0 %v1352
        %v1374 = vpop.xlane.xlu0 %1373
        %1375 = vadd.xlane.f32.xlu0 %v1353
        %v1376 = vpop.xlane.xlu0 %1375
        %1377 = vadd.xlane.f32.xlu0 %v1354
        %v1378 = vpop.xlane.xlu0 %1377
        %1379 = vadd.xlane.f32.xlu0 %v1355
        %v1380 = vpop.xlane.xlu0 %1379
        %1381 = vadd.xlane.f32.xlu0 %v1356
        %v1382 = vpop.xlane.xlu0 %1381
        %1383 = vadd.xlane.f32.xlu0 %v1357
        %v1384 = vpop.xlane.xlu0 %1383
        %1385 = vadd.xlane.f32.xlu0 %v1358
        %v1386 = vpop.xlane.xlu0 %1385
        %1387 = vadd.xlane.f32.xlu0 %v1359
        %v1388 = vpop.xlane.xlu0 %1387
        %1389 = vadd.xlane.f32.xlu0 %v1360
        %v1390 = vpop.xlane.xlu0 %1389
        %1391 = vadd.xlane.f32.xlu0 %v1361
        %v1392 = vpop.xlane.xlu0 %1391
        %1393 = vadd.xlane.f32.xlu0 %v1362
        %v1394 = vpop.xlane.xlu0 %1393
        %vm1395 = vcmask 7168
        %1396 = vst.msk [vmem:[%s161] sm:$0xff] %vm1395, %v1364
        %1397 = vst.msk [vmem:[%s161 + $0x8] sm:$0xff] %vm1395, %v1366
        %1398 = vst.msk [vmem:[%s161 + $0x10] sm:$0xff] %vm1395, %v1368
        %1399 = vst.msk [vmem:[%s161 + $0x18] sm:$0xff] %vm1395, %v1370
        %1400 = vst.msk [vmem:[%s161 + $0x20] sm:$0xff] %vm1395, %v1372
        %1401 = vst.msk [vmem:[%s161 + $0x28] sm:$0xff] %vm1395, %v1374
        %1402 = vst.msk [vmem:[%s161 + $0x30] sm:$0xff] %vm1395, %v1376
        %1403 = vst.msk [vmem:[%s161 + $0x38] sm:$0xff] %vm1395, %v1378
        %1404 = vst.msk [vmem:[%s161 + $0x40] sm:$0xff] %vm1395, %v1380
        %1405 = vst.msk [vmem:[%s161 + $0x48] sm:$0xff] %vm1395, %v1382
        %1406 = vst.msk [vmem:[%s161 + $0x50] sm:$0xff] %vm1395, %v1384
        %1407 = vst.msk [vmem:[%s161 + $0x58] sm:$0xff] %vm1395, %v1386
        %1408 = vst.msk [vmem:[%s161 + $0x60] sm:$0xff] %vm1395, %v1388
        %1409 = vst.msk [vmem:[%s161 + $0x68] sm:$0xff] %vm1395, %v1390
        %1410 = vst.msk [vmem:[%s161 + $0x70] sm:$0xff] %vm1395, %v1392
        %1411 = vst.msk [vmem:[%s161 + $0x78] sm:$0xff] %vm1395, %v1394
        %s1412 = smul.u32 16, %s23
        %p1413 = scmp.lt.s32.totalorder %s1412, 31
        %s1414 = scalar_select %p1413, %s1412, 31
        %s1415 = smul.addr %s1414, 8
        %s1416 = scalar_lea.vmem %s4, %s1415
        // Predicated region
        $region37: #{tpu_custom_call.1} parent=27 // pred_check
          %p1417 = pneg %p83
        $region38: #{tpu_custom_call.1} parent=27 // pred_check_branch
          %1419 = sbr.rel (%p1417) target = $region40
        $region39: #{tpu_custom_call.1} parent=27 // pred_region
          %s1420 = smul.u32 16, %s23
        $region40: #{tpu_custom_call.1} parent=27 // pred_fallthru
          _
      $region28: #{tpu_custom_call.1} parent=5 // pred_fallthru
        _
      %p1421 = scmp.le.s32.totalorder 2, %s18
      // Predicated region
      $region41: #{tpu_custom_call.1} parent=5 // pred_check
        %p1422 = pneg %p1421
      $region42: #{tpu_custom_call.1} parent=5 // pred_check_branch
        %1424 = sbr.rel (%p1422) target = $region44
      $region43: #{tpu_custom_call.1} parent=5 // pred_region
        %s1425 = ssub.s32 %s18, 2
        // Predicated region
        $region45: #{tpu_custom_call.1} parent=43 // pred_check
          %p1426 = pneg %p89
        $region46: #{tpu_custom_call.1} parent=43 // pred_check_branch
          %1428 = sbr.rel (%p1426) target = $region48
        $region47: #{tpu_custom_call.1} parent=43 // pred_region
          %s1429 = smul.u32 16, %s24
          %p1430 = scmp.lt.s32.totalorder %s1429, 31
          %s1431 = scalar_select %p1430, %s1429, 31
          %s1432 = smul.addr %s1431, 8
          %s1433 = scalar_lea.vmem %s4, %s1432
        $region48: #{tpu_custom_call.1} parent=43 // pred_fallthru
          _
      $region44: #{tpu_custom_call.1} parent=5 // pred_fallthru
        _
    $region6: #{tpu_custom_call.1} parent=1 // loop_footer
      %s22 = sadd.s32 1, %s18
    $region7: #{tpu_custom_call.1} parent=1 // loop_footer_branch
      %17 = sbr.rel target = $region3
    $region8: #{tpu_custom_call.1} parent=1 // loop_exit
      _
    %1434 = vsyncpa [#allocation8], 1
    %s1435 = scalar_lea.sflag [#allocation8], 1
    %1436 = vsyncpa %s1435, 1
    %1437 = vsyncpa [#allocation10], 1

</llo_original>
